<compile_context>
chip_gen: v7x
topology: tpu7x:2x2x1
jax: 0.10.0
libtpu: 0.0.40
codegen_flags: <defaults>
</compile_context>

<pallas_src>
import jax
import jax.numpy as jnp
from jax.experimental import pallas as pl
from jax.experimental.pallas import tpu as pltpu


def _round_up(x, m):
    return ((x + m - 1) // m) * m


# ----------------------------- Pallas kernel ------------------------------ #
def _vae_fwd_kernel(
    s_ref,       # (TB, s_cols)        states tile
    cd_ref,      # (TB, cd_cols)       inv_countdowns tile
    a_ref,       # (TB, action_dim)    actions tile
    noise_ref,   # (TB, latent_dim)    standard-normal noise for reparam
    # encoder layer 1 (split weights: states | inv_countdowns | actions)
    we1_s_ref, we1_cd_ref, we1_a_ref, be1_ref,
    # encoder layer 2
    we2_ref, be2_ref,
    # encoder layer 3 split into mu / log-std heads (lane-aligned outputs)
    we3_mu_ref, be3_mu_ref, we3_std_ref, be3_std_ref,
    # decoder layer 1 (split weights: states | inv_countdowns | z)
    wd1_s_ref, wd1_cd_ref, wd1_z_ref, bd1_ref,
    # decoder layers 2 & 3
    wd2_ref, bd2_ref,
    wd3_ref, bd3_ref,
    # packed output: [act | mu | std] along lanes
    out_ref,     # (TB, action_dim + 2*latent_dim)
):
    s = s_ref[...]
    cd = cd_ref[...]
    a_in = a_ref[...]

    # ---- encoder ----
    h = (jnp.dot(s, we1_s_ref[...], preferred_element_type=jnp.float32)
         + jnp.dot(cd, we1_cd_ref[...], preferred_element_type=jnp.float32)
         + jnp.dot(a_in, we1_a_ref[...], preferred_element_type=jnp.float32)
         + be1_ref[...])
    h = jnp.maximum(h, 0.0)
    h = jnp.dot(h, we2_ref[...], preferred_element_type=jnp.float32) + be2_ref[...]
    h = jnp.maximum(h, 0.0)

    mu = (jnp.dot(h, we3_mu_ref[...], preferred_element_type=jnp.float32)
          + be3_mu_ref[...])
    lg_std = (jnp.dot(h, we3_std_ref[...], preferred_element_type=jnp.float32)
              + be3_std_ref[...])

    # ---- reparameterize ----
    std = jnp.exp(jnp.clip(lg_std, -4.0, 15.0))
    z = mu + std * noise_ref[...]

    # ---- decoder ----
    h = (jnp.dot(s, wd1_s_ref[...], preferred_element_type=jnp.float32)
         + jnp.dot(cd, wd1_cd_ref[...], preferred_element_type=jnp.float32)
         + jnp.dot(z, wd1_z_ref[...], preferred_element_type=jnp.float32)
         + bd1_ref[...])
    h = jnp.maximum(h, 0.0)
    h = jnp.dot(h, wd2_ref[...], preferred_element_type=jnp.float32) + bd2_ref[...]
    h = jnp.maximum(h, 0.0)
    act = jnp.tanh(
        jnp.dot(h, wd3_ref[...], preferred_element_type=jnp.float32) + bd3_ref[...]
    )

    # single lane-contiguous store: [act | mu | std]
    out_ref[...] = jnp.concatenate([act, mu, std], axis=1)


# ------------------------------- wrapper ----------------------------------- #
_PARAM_ORDER = (
    "we1_s", "we1_cd", "we1_a", "be1",
    "we2", "be2",
    "we3_mu", "be3_mu", "we3_std", "be3_std",
    "wd1_s", "wd1_cd", "wd1_z", "bd1",
    "wd2", "bd2",
    "wd3", "bd3",
)


def vae_forward(params, states, inv_countdowns, actions, noise, *, block_b=128):
    """Pallas VAE forward. Returns (decoded_action, mu, std)."""
    B = states.shape[0]
    s_cols = states.shape[1]
    cd_cols = inv_countdowns.shape[1]
    action_dim = actions.shape[1]
    latent_dim = noise.shape[1]
    out_cols = action_dim + 2 * latent_dim

    # Batch tile: sublane-aligned (multiple of 8); pad batch up to a multiple.
    tb = min(block_b, _round_up(B, 8))
    Bp = _round_up(B, tb)
    if Bp != B:
        pad = ((0, Bp - B), (0, 0))
        states = jnp.pad(states, pad)
        inv_countdowns = jnp.pad(inv_countdowns, pad)
        actions = jnp.pad(actions, pad)
        noise = jnp.pad(noise, pad)

    grid = (Bp // tb,)

    def act_spec(cols):
        return pl.BlockSpec((tb, cols), lambda i: (i, 0))

    def weight_spec(shape):
        # Constant block index -> weight stays VMEM-resident across grid steps.
        return pl.BlockSpec(shape, lambda i: (0, 0))

    weight_args = tuple(params[name] for name in _PARAM_ORDER)

    in_specs = [
        act_spec(s_cols),
        act_spec(cd_cols),
        act_spec(action_dim),
        act_spec(latent_dim),
    ] + [weight_spec(w.shape) for w in weight_args]

    out_packed = pl.pallas_call(
        _vae_fwd_kernel,
        out_shape=jax.ShapeDtypeStruct((Bp, out_cols), jnp.float32),
        grid=grid,
        in_specs=in_specs,
        out_specs=act_spec(out_cols),
        compiler_params=pltpu.CompilerParams(
            dimension_semantics=("parallel",),
        ),
    )(states, inv_countdowns, actions, noise, *weight_args)

    out_packed = out_packed[:B]
    act = out_packed[:, :action_dim]
    mu = out_packed[:, action_dim:action_dim + latent_dim]
    std = out_packed[:, action_dim + latent_dim:]
    return act, mu, std


# ----------------------- parameter initialization -------------------------- #
def init_params(key, s_cols, cd_cols, action_dim, hidden_dim_vae, latent_dim):
    h0, h1 = hidden_dim_vae
    shapes = {
        # encoder (first-layer weight split by input block: states | cd | actions)
        "we1_s": (s_cols, h0), "we1_cd": (cd_cols, h0), "we1_a": (action_dim, h0),
        "be1": (1, h0),
        "we2": (h0, h1), "be2": (1, h1),
        # third-layer weight split into mu / log-std heads
        "we3_mu": (h1, latent_dim), "be3_mu": (1, latent_dim),
        "we3_std": (h1, latent_dim), "be3_std": (1, latent_dim),
        # decoder (first-layer weight split: states | cd | z)
        "wd1_s": (s_cols, h1), "wd1_cd": (cd_cols, h1), "wd1_z": (latent_dim, h1),
        "bd1": (1, h1),
        "wd2": (h1, h0), "bd2": (1, h0),
        "wd3": (h0, action_dim), "bd3": (1, action_dim),
    }
    params = {}
    keys = jax.random.split(key, len(shapes))
    for (name, shape), k in zip(sorted(shapes.items()), keys):
        params[name] = 0.1 * jax.random.normal(k, shape, dtype=jnp.float32)
    return params
    # TODO(synk): optional bf16 weight storage for v6e/v7x MXU (keep f32 accum
    # and f32 elementwise epilogue); left in f32 here for a tight correctness check.


# ------------------------ pure-JAX reference check ------------------------- #
def vae_forward_ref(params, states, inv_countdowns, actions, noise):
    """Concat-based reference matching the original torch module semantics."""
    we1 = jnp.concatenate([params["we1_s"], params["we1_cd"], params["we1_a"]], 0)
    we3 = jnp.concatenate([params["we3_mu"], params["we3_std"]], 1)
    be3 = jnp.concatenate([params["be3_mu"], params["be3_std"]], 1)
    wd1 = jnp.concatenate([params["wd1_s"], params["wd1_cd"], params["wd1_z"]], 0)

    x_enc = jnp.concatenate([states, inv_countdowns, actions], axis=1)
    h = jax.nn.relu(x_enc @ we1 + params["be1"])
    h = jax.nn.relu(h @ params["we2"] + params["be2"])
    z2 = h @ we3 + be3
    latent = noise.shape[1]
    mu, lg_std = z2[:, :latent], z2[:, latent:]
    std = jnp.exp(jnp.clip(lg_std, -4.0, 15.0))
    z = mu + std * noise
    x_dec = jnp.concatenate([states, inv_countdowns, z], axis=1)
    h = jax.nn.relu(x_dec @ wd1 + params["bd1"])
    h = jax.nn.relu(h @ params["wd2"] + params["bd2"])
    a = jnp.tanh(h @ params["wd3"] + params["bd3"])
    return a, mu, std


# --------------------------------- main ------------------------------------ #
if __name__ == "__main__":
    # Shapes consistent with the module:
    #   states: (B, 12), inv_countdowns: (B, 4)  -> state_dim = 16
    #   actions: (B, 8) -> action_dim = 8
    #   hidden_dim_VAE = [64, 32], latent_dim = 8
    # Batch >= 128 per the perf review; block_b=128 gives a 2-step parallel grid.
    B = 256
    s_cols, cd_cols = 12, 4
    action_dim = 8
    hidden_dim_vae = (64, 32)
    latent_dim = 8

    key = jax.random.PRNGKey(0)
    k_par, k_s, k_cd, k_a, k_n = jax.random.split(key, 5)

    params = init_params(k_par, s_cols, cd_cols, action_dim, hidden_dim_vae,
                         latent_dim)

    states = jax.random.normal(k_s, (B, s_cols), dtype=jnp.float32)
    inv_countdowns = jax.random.uniform(k_cd, (B, cd_cols), dtype=jnp.float32)
    actions = jax.random.normal(k_a, (B, action_dim), dtype=jnp.float32)
    # torch.randn_like(mu) equivalent: deterministic noise passed into the kernel.
    noise = jax.random.normal(k_n, (B, latent_dim), dtype=jnp.float32)

    act, mu, std = vae_forward(params, states, inv_countdowns, actions, noise,
                               block_b=128)
    jax.block_until_ready((act, mu, std))

    act_r, mu_r, std_r = vae_forward_ref(params, states, inv_countdowns, actions,
                                         noise)
    assert jnp.allclose(act, act_r, atol=1e-5), "action mismatch"
    assert jnp.allclose(mu, mu_r, atol=1e-5), "mu mismatch"
    assert jnp.allclose(std, std_r, atol=1e-5), "std mismatch"

    print("KERNEL_OK")
</pallas_src>

<mosaic_0001>
module attributes {stable_mosaic.version = 11 : i64} {
  func.func @_vae_fwd_kernel(%arg0: i32, %arg1: memref<128x12xf32, #tpu.memory_space<vmem>>, %arg2: memref<128x4xf32, #tpu.memory_space<vmem>>, %arg3: memref<128x8xf32, #tpu.memory_space<vmem>>, %arg4: memref<128x8xf32, #tpu.memory_space<vmem>>, %arg5: memref<12x64xf32, #tpu.memory_space<vmem>>, %arg6: memref<4x64xf32, #tpu.memory_space<vmem>>, %arg7: memref<8x64xf32, #tpu.memory_space<vmem>>, %arg8: memref<1x64xf32, #tpu.memory_space<vmem>>, %arg9: memref<64x32xf32, #tpu.memory_space<vmem>>, %arg10: memref<1x32xf32, #tpu.memory_space<vmem>>, %arg11: memref<32x8xf32, #tpu.memory_space<vmem>>, %arg12: memref<1x8xf32, #tpu.memory_space<vmem>>, %arg13: memref<32x8xf32, #tpu.memory_space<vmem>>, %arg14: memref<1x8xf32, #tpu.memory_space<vmem>>, %arg15: memref<12x32xf32, #tpu.memory_space<vmem>>, %arg16: memref<4x32xf32, #tpu.memory_space<vmem>>, %arg17: memref<8x32xf32, #tpu.memory_space<vmem>>, %arg18: memref<1x32xf32, #tpu.memory_space<vmem>>, %arg19: memref<32x64xf32, #tpu.memory_space<vmem>>, %arg20: memref<1x64xf32, #tpu.memory_space<vmem>>, %arg21: memref<64x8xf32, #tpu.memory_space<vmem>>, %arg22: memref<1x8xf32, #tpu.memory_space<vmem>>, %arg23: memref<128x24xf32, #tpu.memory_space<vmem>>) attributes {dimension_semantics = [#tpu.dimension_semantics<parallel>], iteration_bounds = array<i64: 2>, scalar_prefetch = 0 : i64, scratch_operands = 0 : i64, tpu.core_type = #tpu.core_type<tc>, window_params = [{transform_indices = @transform_0, window_bounds = array<i64: 128, 12>}, {transform_indices = @transform_1, window_bounds = array<i64: 128, 4>}, {transform_indices = @transform_2, window_bounds = array<i64: 128, 8>}, {transform_indices = @transform_3, window_bounds = array<i64: 128, 8>}, {pipeline_mode = #tpu.pipeline_mode<synchronous>, transform_indices = @transform_4, window_bounds = array<i64: 12, 64>}, {pipeline_mode = #tpu.pipeline_mode<synchronous>, transform_indices = @transform_5, window_bounds = array<i64: 4, 64>}, {pipeline_mode = #tpu.pipeline_mode<synchronous>, transform_indices = @transform_6, window_bounds = array<i64: 8, 64>}, {pipeline_mode = #tpu.pipeline_mode<synchronous>, transform_indices = @transform_7, window_bounds = array<i64: 1, 64>}, {pipeline_mode = #tpu.pipeline_mode<synchronous>, transform_indices = @transform_8, window_bounds = array<i64: 64, 32>}, {pipeline_mode = #tpu.pipeline_mode<synchronous>, transform_indices = @transform_9, window_bounds = array<i64: 1, 32>}, {pipeline_mode = #tpu.pipeline_mode<synchronous>, transform_indices = @transform_10, window_bounds = array<i64: 32, 8>}, {pipeline_mode = #tpu.pipeline_mode<synchronous>, transform_indices = @transform_11, window_bounds = array<i64: 1, 8>}, {pipeline_mode = #tpu.pipeline_mode<synchronous>, transform_indices = @transform_12, window_bounds = array<i64: 32, 8>}, {pipeline_mode = #tpu.pipeline_mode<synchronous>, transform_indices = @transform_13, window_bounds = array<i64: 1, 8>}, {pipeline_mode = #tpu.pipeline_mode<synchronous>, transform_indices = @transform_14, window_bounds = array<i64: 12, 32>}, {pipeline_mode = #tpu.pipeline_mode<synchronous>, transform_indices = @transform_15, window_bounds = array<i64: 4, 32>}, {pipeline_mode = #tpu.pipeline_mode<synchronous>, transform_indices = @transform_16, window_bounds = array<i64: 8, 32>}, {pipeline_mode = #tpu.pipeline_mode<synchronous>, transform_indices = @transform_17, window_bounds = array<i64: 1, 32>}, {pipeline_mode = #tpu.pipeline_mode<synchronous>, transform_indices = @transform_18, window_bounds = array<i64: 32, 64>}, {pipeline_mode = #tpu.pipeline_mode<synchronous>, transform_indices = @transform_19, window_bounds = array<i64: 1, 64>}, {pipeline_mode = #tpu.pipeline_mode<synchronous>, transform_indices = @transform_20, window_bounds = array<i64: 64, 8>}, {pipeline_mode = #tpu.pipeline_mode<synchronous>, transform_indices = @transform_21, window_bounds = array<i64: 1, 8>}, {transform_indices = @transform_22, window_bounds = array<i64: 128, 24>}]} {
    %c0 = arith.constant 0 : index
    %c0_0 = arith.constant 0 : index
    %0 = vector.load %arg1[%c0, %c0_0] : memref<128x12xf32, #tpu.memory_space<vmem>>, vector<128x12xf32>
    %c0_1 = arith.constant 0 : index
    %c0_2 = arith.constant 0 : index
    %1 = vector.load %arg2[%c0_1, %c0_2] : memref<128x4xf32, #tpu.memory_space<vmem>>, vector<128x4xf32>
    %c0_3 = arith.constant 0 : index
    %c0_4 = arith.constant 0 : index
    %2 = vector.load %arg3[%c0_3, %c0_4] : memref<128x8xf32, #tpu.memory_space<vmem>>, vector<128x8xf32>
    %c0_5 = arith.constant 0 : index
    %c0_6 = arith.constant 0 : index
    %3 = vector.load %arg5[%c0_5, %c0_6] : memref<12x64xf32, #tpu.memory_space<vmem>>, vector<12x64xf32>
    %cst = arith.constant dense<0.000000e+00> : vector<128x64xf32>
    %4 = tpu.matmul %0, %3, %cst {dimension_numbers = #tpu.dot_dimension_numbers<[1], [0], [0], [1], [0, 0, 1, 1], [], []>} : vector<128x12xf32>, vector<12x64xf32>, vector<128x64xf32> -> vector<128x64xf32>
    %c0_7 = arith.constant 0 : index
    %c0_8 = arith.constant 0 : index
    %5 = vector.load %arg6[%c0_7, %c0_8] : memref<4x64xf32, #tpu.memory_space<vmem>>, vector<4x64xf32>
    %cst_9 = arith.constant dense<0.000000e+00> : vector<128x64xf32>
    %6 = tpu.matmul %1, %5, %cst_9 {dimension_numbers = #tpu.dot_dimension_numbers<[1], [0], [0], [1], [0, 0, 1, 1], [], []>} : vector<128x4xf32>, vector<4x64xf32>, vector<128x64xf32> -> vector<128x64xf32>
    %7 = arith.addf %4, %6 : vector<128x64xf32>
    %c0_10 = arith.constant 0 : index
    %c0_11 = arith.constant 0 : index
    %8 = vector.load %arg7[%c0_10, %c0_11] : memref<8x64xf32, #tpu.memory_space<vmem>>, vector<8x64xf32>
    %cst_12 = arith.constant dense<0.000000e+00> : vector<128x64xf32>
    %9 = tpu.matmul %2, %8, %cst_12 {dimension_numbers = #tpu.dot_dimension_numbers<[1], [0], [0], [1], [0, 0, 1, 1], [], []>} : vector<128x8xf32>, vector<8x64xf32>, vector<128x64xf32> -> vector<128x64xf32>
    %10 = arith.addf %7, %9 : vector<128x64xf32>
    %c0_13 = arith.constant 0 : index
    %c0_14 = arith.constant 0 : index
    %11 = vector.load %arg8[%c0_13, %c0_14] : memref<1x64xf32, #tpu.memory_space<vmem>>, vector<1x64xf32>
    %12 = vector.broadcast %11 : vector<1x64xf32> to vector<128x64xf32>
    %13 = arith.addf %10, %12 : vector<128x64xf32>
    %cst_15 = arith.constant 0.000000e+00 : f32
    %14 = vector.broadcast %cst_15 : f32 to vector<128x64xf32>
    %15 = arith.maximumf %13, %14 : vector<128x64xf32>
    %c0_16 = arith.constant 0 : index
    %c0_17 = arith.constant 0 : index
    %16 = vector.load %arg9[%c0_16, %c0_17] : memref<64x32xf32, #tpu.memory_space<vmem>>, vector<64x32xf32>
    %cst_18 = arith.constant dense<0.000000e+00> : vector<128x32xf32>
    %17 = tpu.matmul %15, %16, %cst_18 {dimension_numbers = #tpu.dot_dimension_numbers<[1], [0], [0], [1], [0, 0, 1, 1], [], []>} : vector<128x64xf32>, vector<64x32xf32>, vector<128x32xf32> -> vector<128x32xf32>
    %c0_19 = arith.constant 0 : index
    %c0_20 = arith.constant 0 : index
    %18 = vector.load %arg10[%c0_19, %c0_20] : memref<1x32xf32, #tpu.memory_space<vmem>>, vector<1x32xf32>
    %19 = vector.broadcast %18 : vector<1x32xf32> to vector<128x32xf32>
    %20 = arith.addf %17, %19 : vector<128x32xf32>
    %cst_21 = arith.constant 0.000000e+00 : f32
    %21 = vector.broadcast %cst_21 : f32 to vector<128x32xf32>
    %22 = arith.maximumf %20, %21 : vector<128x32xf32>
    %c0_22 = arith.constant 0 : index
    %c0_23 = arith.constant 0 : index
    %23 = vector.load %arg11[%c0_22, %c0_23] : memref<32x8xf32, #tpu.memory_space<vmem>>, vector<32x8xf32>
    %cst_24 = arith.constant dense<0.000000e+00> : vector<128x8xf32>
    %24 = tpu.matmul %22, %23, %cst_24 {dimension_numbers = #tpu.dot_dimension_numbers<[1], [0], [0], [1], [0, 0, 1, 1], [], []>} : vector<128x32xf32>, vector<32x8xf32>, vector<128x8xf32> -> vector<128x8xf32>
    %c0_25 = arith.constant 0 : index
    %c0_26 = arith.constant 0 : index
    %25 = vector.load %arg12[%c0_25, %c0_26] : memref<1x8xf32, #tpu.memory_space<vmem>>, vector<1x8xf32>
    %26 = vector.broadcast %25 : vector<1x8xf32> to vector<128x8xf32>
    %27 = arith.addf %24, %26 : vector<128x8xf32>
    %c0_27 = arith.constant 0 : index
    %c0_28 = arith.constant 0 : index
    %28 = vector.load %arg13[%c0_27, %c0_28] : memref<32x8xf32, #tpu.memory_space<vmem>>, vector<32x8xf32>
    %cst_29 = arith.constant dense<0.000000e+00> : vector<128x8xf32>
    %29 = tpu.matmul %22, %28, %cst_29 {dimension_numbers = #tpu.dot_dimension_numbers<[1], [0], [0], [1], [0, 0, 1, 1], [], []>} : vector<128x32xf32>, vector<32x8xf32>, vector<128x8xf32> -> vector<128x8xf32>
    %c0_30 = arith.constant 0 : index
    %c0_31 = arith.constant 0 : index
    %30 = vector.load %arg14[%c0_30, %c0_31] : memref<1x8xf32, #tpu.memory_space<vmem>>, vector<1x8xf32>
    %31 = vector.broadcast %30 : vector<1x8xf32> to vector<128x8xf32>
    %32 = arith.addf %29, %31 : vector<128x8xf32>
    %cst_32 = arith.constant -4.000000e+00 : f32
    %cst_33 = arith.constant 1.500000e+01 : f32
    %33 = vector.broadcast %cst_32 : f32 to vector<128x8xf32>
    %34 = arith.maximumf %33, %32 : vector<128x8xf32>
    %35 = vector.broadcast %cst_33 : f32 to vector<128x8xf32>
    %36 = arith.minimumf %35, %34 : vector<128x8xf32>
    %37 = math.exp %36 : vector<128x8xf32>
    %c0_34 = arith.constant 0 : index
    %c0_35 = arith.constant 0 : index
    %38 = vector.load %arg4[%c0_34, %c0_35] : memref<128x8xf32, #tpu.memory_space<vmem>>, vector<128x8xf32>
    %39 = arith.mulf %37, %38 : vector<128x8xf32>
    %40 = arith.addf %27, %39 : vector<128x8xf32>
    %c0_36 = arith.constant 0 : index
    %c0_37 = arith.constant 0 : index
    %41 = vector.load %arg15[%c0_36, %c0_37] : memref<12x32xf32, #tpu.memory_space<vmem>>, vector<12x32xf32>
    %cst_38 = arith.constant dense<0.000000e+00> : vector<128x32xf32>
    %42 = tpu.matmul %0, %41, %cst_38 {dimension_numbers = #tpu.dot_dimension_numbers<[1], [0], [0], [1], [0, 0, 1, 1], [], []>} : vector<128x12xf32>, vector<12x32xf32>, vector<128x32xf32> -> vector<128x32xf32>
    %c0_39 = arith.constant 0 : index
    %c0_40 = arith.constant 0 : index
    %43 = vector.load %arg16[%c0_39, %c0_40] : memref<4x32xf32, #tpu.memory_space<vmem>>, vector<4x32xf32>
    %cst_41 = arith.constant dense<0.000000e+00> : vector<128x32xf32>
    %44 = tpu.matmul %1, %43, %cst_41 {dimension_numbers = #tpu.dot_dimension_numbers<[1], [0], [0], [1], [0, 0, 1, 1], [], []>} : vector<128x4xf32>, vector<4x32xf32>, vector<128x32xf32> -> vector<128x32xf32>
    %45 = arith.addf %42, %44 : vector<128x32xf32>
    %c0_42 = arith.constant 0 : index
    %c0_43 = arith.constant 0 : index
    %46 = vector.load %arg17[%c0_42, %c0_43] : memref<8x32xf32, #tpu.memory_space<vmem>>, vector<8x32xf32>
    %cst_44 = arith.constant dense<0.000000e+00> : vector<128x32xf32>
    %47 = tpu.matmul %40, %46, %cst_44 {dimension_numbers = #tpu.dot_dimension_numbers<[1], [0], [0], [1], [0, 0, 1, 1], [], []>} : vector<128x8xf32>, vector<8x32xf32>, vector<128x32xf32> -> vector<128x32xf32>
    %48 = arith.addf %45, %47 : vector<128x32xf32>
    %c0_45 = arith.constant 0 : index
    %c0_46 = arith.constant 0 : index
    %49 = vector.load %arg18[%c0_45, %c0_46] : memref<1x32xf32, #tpu.memory_space<vmem>>, vector<1x32xf32>
    %50 = vector.broadcast %49 : vector<1x32xf32> to vector<128x32xf32>
    %51 = arith.addf %48, %50 : vector<128x32xf32>
    %cst_47 = arith.constant 0.000000e+00 : f32
    %52 = vector.broadcast %cst_47 : f32 to vector<128x32xf32>
    %53 = arith.maximumf %51, %52 : vector<128x32xf32>
    %c0_48 = arith.constant 0 : index
    %c0_49 = arith.constant 0 : index
    %54 = vector.load %arg19[%c0_48, %c0_49] : memref<32x64xf32, #tpu.memory_space<vmem>>, vector<32x64xf32>
    %cst_50 = arith.constant dense<0.000000e+00> : vector<128x64xf32>
    %55 = tpu.matmul %53, %54, %cst_50 {dimension_numbers = #tpu.dot_dimension_numbers<[1], [0], [0], [1], [0, 0, 1, 1], [], []>} : vector<128x32xf32>, vector<32x64xf32>, vector<128x64xf32> -> vector<128x64xf32>
    %c0_51 = arith.constant 0 : index
    %c0_52 = arith.constant 0 : index
    %56 = vector.load %arg20[%c0_51, %c0_52] : memref<1x64xf32, #tpu.memory_space<vmem>>, vector<1x64xf32>
    %57 = vector.broadcast %56 : vector<1x64xf32> to vector<128x64xf32>
    %58 = arith.addf %55, %57 : vector<128x64xf32>
    %cst_53 = arith.constant 0.000000e+00 : f32
    %59 = vector.broadcast %cst_53 : f32 to vector<128x64xf32>
    %60 = arith.maximumf %58, %59 : vector<128x64xf32>
    %c0_54 = arith.constant 0 : index
    %c0_55 = arith.constant 0 : index
    %61 = vector.load %arg21[%c0_54, %c0_55] : memref<64x8xf32, #tpu.memory_space<vmem>>, vector<64x8xf32>
    %cst_56 = arith.constant dense<0.000000e+00> : vector<128x8xf32>
    %62 = tpu.matmul %60, %61, %cst_56 {dimension_numbers = #tpu.dot_dimension_numbers<[1], [0], [0], [1], [0, 0, 1, 1], [], []>} : vector<128x64xf32>, vector<64x8xf32>, vector<128x8xf32> -> vector<128x8xf32>
    %c0_57 = arith.constant 0 : index
    %c0_58 = arith.constant 0 : index
    %63 = vector.load %arg22[%c0_57, %c0_58] : memref<1x8xf32, #tpu.memory_space<vmem>>, vector<1x8xf32>
    %64 = vector.broadcast %63 : vector<1x8xf32> to vector<128x8xf32>
    %65 = arith.addf %62, %64 : vector<128x8xf32>
    %66 = math.tanh %65 : vector<128x8xf32>
    %67 = tpu.concatenate %66, %27, %37 in 1 : vector<128x8xf32>, vector<128x8xf32>, vector<128x8xf32> -> vector<128x24xf32>
    %c0_59 = arith.constant 0 : index
    %c0_60 = arith.constant 0 : index
    %68 = vector.load %arg23[%c0_59, %c0_60] : memref<128x24xf32, #tpu.memory_space<vmem>>, vector<128x24xf32>
    tpu.vector_store %arg23[%c0_59, %c0_60], %67 {strides = array<i32>} : memref<128x24xf32, #tpu.memory_space<vmem>>, vector<128x24xf32>,
    return
  }
  func.func @transform_0(%arg0: i32) -> (i32, i32) {
    %c0_i32 = arith.constant 0 : i32
    %c0_i32_0 = arith.constant 0 : i32
    return %arg0, %c0_i32 : i32, i32
  }
  func.func @transform_1(%arg0: i32) -> (i32, i32) {
    %c0_i32 = arith.constant 0 : i32
    %c0_i32_0 = arith.constant 0 : i32
    return %arg0, %c0_i32 : i32, i32
  }
  func.func @transform_2(%arg0: i32) -> (i32, i32) {
    %c0_i32 = arith.constant 0 : i32
    %c0_i32_0 = arith.constant 0 : i32
    return %arg0, %c0_i32 : i32, i32
  }
  func.func @transform_3(%arg0: i32) -> (i32, i32) {
    %c0_i32 = arith.constant 0 : i32
    %c0_i32_0 = arith.constant 0 : i32
    return %arg0, %c0_i32 : i32, i32
  }
  func.func @transform_4(%arg0: i32) -> (i32, i32) {
    %c0_i32 = arith.constant 0 : i32
    %c0_i32_0 = arith.constant 0 : i32
    %c0_i32_1 = arith.constant 0 : i32
    return %c0_i32, %c0_i32_0 : i32, i32
  }
  func.func @transform_5(%arg0: i32) -> (i32, i32) {
    %c0_i32 = arith.constant 0 : i32
    %c0_i32_0 = arith.constant 0 : i32
    %c0_i32_1 = arith.constant 0 : i32
    return %c0_i32, %c0_i32_0 : i32, i32
  }
  func.func @transform_6(%arg0: i32) -> (i32, i32) {
    %c0_i32 = arith.constant 0 : i32
    %c0_i32_0 = arith.constant 0 : i32
    %c0_i32_1 = arith.constant 0 : i32
    return %c0_i32, %c0_i32_0 : i32, i32
  }
  func.func @transform_7(%arg0: i32) -> (i32, i32) {
    %c0_i32 = arith.constant 0 : i32
    %c0_i32_0 = arith.constant 0 : i32
    %c0_i32_1 = arith.constant 0 : i32
    return %c0_i32, %c0_i32_0 : i32, i32
  }
  func.func @transform_8(%arg0: i32) -> (i32, i32) {
    %c0_i32 = arith.constant 0 : i32
    %c0_i32_0 = arith.constant 0 : i32
    %c0_i32_1 = arith.constant 0 : i32
    return %c0_i32, %c0_i32_0 : i32, i32
  }
  func.func @transform_9(%arg0: i32) -> (i32, i32) {
    %c0_i32 = arith.constant 0 : i32
    %c0_i32_0 = arith.constant 0 : i32
    %c0_i32_1 = arith.constant 0 : i32
    return %c0_i32, %c0_i32_0 : i32, i32
  }
  func.func @transform_10(%arg0: i32) -> (i32, i32) {
    %c0_i32 = arith.constant 0 : i32
    %c0_i32_0 = arith.constant 0 : i32
    %c0_i32_1 = arith.constant 0 : i32
    return %c0_i32, %c0_i32_0 : i32, i32
  }
  func.func @transform_11(%arg0: i32) -> (i32, i32) {
    %c0_i32 = arith.constant 0 : i32
    %c0_i32_0 = arith.constant 0 : i32
    %c0_i32_1 = arith.constant 0 : i32
    return %c0_i32, %c0_i32_0 : i32, i32
  }
  func.func @transform_12(%arg0: i32) -> (i32, i32) {
    %c0_i32 = arith.constant 0 : i32
    %c0_i32_0 = arith.constant 0 : i32
    %c0_i32_1 = arith.constant 0 : i32
    return %c0_i32, %c0_i32_0 : i32, i32
  }
  func.func @transform_13(%arg0: i32) -> (i32, i32) {
    %c0_i32 = arith.constant 0 : i32
    %c0_i32_0 = arith.constant 0 : i32
    %c0_i32_1 = arith.constant 0 : i32
    return %c0_i32, %c0_i32_0 : i32, i32
  }
  func.func @transform_14(%arg0: i32) -> (i32, i32) {
    %c0_i32 = arith.constant 0 : i32
    %c0_i32_0 = arith.constant 0 : i32
    %c0_i32_1 = arith.constant 0 : i32
    return %c0_i32, %c0_i32_0 : i32, i32
  }
  func.func @transform_15(%arg0: i32) -> (i32, i32) {
    %c0_i32 = arith.constant 0 : i32
    %c0_i32_0 = arith.constant 0 : i32
    %c0_i32_1 = arith.constant 0 : i32
    return %c0_i32, %c0_i32_0 : i32, i32
  }
  func.func @transform_16(%arg0: i32) -> (i32, i32) {
    %c0_i32 = arith.constant 0 : i32
    %c0_i32_0 = arith.constant 0 : i32
    %c0_i32_1 = arith.constant 0 : i32
    return %c0_i32, %c0_i32_0 : i32, i32
  }
  func.func @transform_17(%arg0: i32) -> (i32, i32) {
    %c0_i32 = arith.constant 0 : i32
    %c0_i32_0 = arith.constant 0 : i32
    %c0_i32_1 = arith.constant 0 : i32
    return %c0_i32, %c0_i32_0 : i32, i32
  }
  func.func @transform_18(%arg0: i32) -> (i32, i32) {
    %c0_i32 = arith.constant 0 : i32
    %c0_i32_0 = arith.constant 0 : i32
    %c0_i32_1 = arith.constant 0 : i32
    return %c0_i32, %c0_i32_0 : i32, i32
  }
  func.func @transform_19(%arg0: i32) -> (i32, i32) {
    %c0_i32 = arith.constant 0 : i32
    %c0_i32_0 = arith.constant 0 : i32
    %c0_i32_1 = arith.constant 0 : i32
    return %c0_i32, %c0_i32_0 : i32, i32
  }
  func.func @transform_20(%arg0: i32) -> (i32, i32) {
    %c0_i32 = arith.constant 0 : i32
    %c0_i32_0 = arith.constant 0 : i32
    %c0_i32_1 = arith.constant 0 : i32
    return %c0_i32, %c0_i32_0 : i32, i32
  }
  func.func @transform_21(%arg0: i32) -> (i32, i32) {
    %c0_i32 = arith.constant 0 : i32
    %c0_i32_0 = arith.constant 0 : i32
    %c0_i32_1 = arith.constant 0 : i32
    return %c0_i32, %c0_i32_0 : i32, i32
  }
  func.func @transform_22(%arg0: i32) -> (i32, i32) {
    %c0_i32 = arith.constant 0 : i32
    %c0_i32_0 = arith.constant 0 : i32
    return %arg0, %c0_i32 : i32, i32
  }
}

</mosaic_0001>

<llo_original>
// kernel: tpu_custom_call.1
$region0: #{tpu_custom_call.1}
  #allocation0 [shape = 'u32[]', space=smem, size = 0x4, offset = 0x4, fixed_abs, tag = 'smem constant byte address 0x4 - core index']
  #allocation1 [shape = 'u32[144,128]{1,0:T(1,128)}', space=vmem, size = 0x12000, scoped, tag = 'internal scratch']
  %s0 = inlined_call_operand.vmem [shape: f32[256,12], index: 0, kind: input, shape index: {}]
  %s1 = inlined_call_operand.vmem [shape: f32[256,4], index: 1, kind: input, shape index: {}]
  %s2 = inlined_call_operand.vmem [shape: f32[256,8], index: 2, kind: input, shape index: {}]
  %s3 = inlined_call_operand.vmem [shape: f32[256,8], index: 3, kind: input, shape index: {}]
  %s4 = inlined_call_operand.vmem [shape: f32[12,64], index: 4, kind: input, shape index: {}]
  %s5 = inlined_call_operand.vmem [shape: f32[4,64], index: 5, kind: input, shape index: {}]
  %s6 = inlined_call_operand.vmem [shape: f32[8,64], index: 6, kind: input, shape index: {}]
  %s7 = inlined_call_operand.vmem [shape: f32[1,64], index: 7, kind: input, shape index: {}]
  %s8 = inlined_call_operand.vmem [shape: f32[64,32], index: 8, kind: input, shape index: {}]
  %s9 = inlined_call_operand.vmem [shape: f32[1,32], index: 9, kind: input, shape index: {}]
  %s10 = inlined_call_operand.vmem [shape: f32[32,8], index: 10, kind: input, shape index: {}]
  %s11 = inlined_call_operand.vmem [shape: f32[1,8], index: 11, kind: input, shape index: {}]
  %s12 = inlined_call_operand.vmem [shape: f32[32,8], index: 12, kind: input, shape index: {}]
  %s13 = inlined_call_operand.vmem [shape: f32[1,8], index: 13, kind: input, shape index: {}]
  %s14 = inlined_call_operand.vmem [shape: f32[12,32], index: 14, kind: input, shape index: {}]
  %s15 = inlined_call_operand.vmem [shape: f32[4,32], index: 15, kind: input, shape index: {}]
  %s16 = inlined_call_operand.vmem [shape: f32[8,32], index: 16, kind: input, shape index: {}]
  %s17 = inlined_call_operand.vmem [shape: f32[1,32], index: 17, kind: input, shape index: {}]
  %s18 = inlined_call_operand.vmem [shape: f32[32,64], index: 18, kind: input, shape index: {}]
  %s19 = inlined_call_operand.vmem [shape: f32[1,64], index: 19, kind: input, shape index: {}]
  %s20 = inlined_call_operand.vmem [shape: f32[64,8], index: 20, kind: input, shape index: {}]
  %s21 = inlined_call_operand.vmem [shape: f32[1,8], index: 21, kind: input, shape index: {}]
  %s22 = inlined_call_operand.vmem [shape: f32[256,24], index: 22, kind: output, shape index: {}]
  %s23 = sld [smem:[#allocation0]]
  $region121: #{tpu_custom_call.1} parent=0
    _
  %s25 = ssub.s32 1, %s23
  %s26 = scalar_select 0, %s25, %s23
  loop: start=0, step=1, limit=4
  $region2: #{tpu_custom_call.1} parent=0 // loop_pre_header
    _
  $region3: #{tpu_custom_call.1} parent=0 // loop_header
    %s28 = sphi 0, %s32
    %p29 = scmp.ge.s32.totalorder %s28, 4
    %s38 = sphi 0, %s40
    %s41 = sphi 0, %s38
    %s42 = sphi 0, %s41
    %s58 = sphi 0, %s42
    %s64 = sphi 0, %s66
    %s67 = sphi 0, %s64
    %s68 = sphi 0, %s67
    %s84 = sphi 0, %s68
    %s90 = sphi 0, %s92
    %s93 = sphi 0, %s90
    %s94 = sphi 0, %s93
    %s110 = sphi 0, %s94
    %s116 = sphi 0, %s118
    %s119 = sphi 0, %s116
    %s120 = sphi 0, %s119
    %s136 = sphi 0, %s120
    %s140 = sphi 0, %s140
    %s142 = sphi 0, %s140
    %s143 = sphi 0, %s142
    %s157 = sphi 0, %s143
    %s161 = sphi 0, %s161
    %s163 = sphi 0, %s161
    %s164 = sphi 0, %s163
    %s178 = sphi 0, %s164
    %s182 = sphi 0, %s182
    %s184 = sphi 0, %s182
    %s185 = sphi 0, %s184
    %s199 = sphi 0, %s185
    %s203 = sphi 0, %s203
    %s205 = sphi 0, %s203
    %s206 = sphi 0, %s205
    %s220 = sphi 0, %s206
    %s224 = sphi 0, %s224
    %s226 = sphi 0, %s224
    %s227 = sphi 0, %s226
    %s241 = sphi 0, %s227
    %s245 = sphi 0, %s245
    %s247 = sphi 0, %s245
    %s248 = sphi 0, %s247
    %s262 = sphi 0, %s248
    %s266 = sphi 0, %s266
    %s268 = sphi 0, %s266
    %s269 = sphi 0, %s268
    %s283 = sphi 0, %s269
    %s287 = sphi 0, %s287
    %s289 = sphi 0, %s287
    %s290 = sphi 0, %s289
    %s304 = sphi 0, %s290
    %s308 = sphi 0, %s308
    %s310 = sphi 0, %s308
    %s311 = sphi 0, %s310
    %s325 = sphi 0, %s311
    %s329 = sphi 0, %s329
    %s331 = sphi 0, %s329
    %s332 = sphi 0, %s331
    %s346 = sphi 0, %s332
    %s350 = sphi 0, %s350
    %s352 = sphi 0, %s350
    %s353 = sphi 0, %s352
    %s367 = sphi 0, %s353
    %s371 = sphi 0, %s371
    %s373 = sphi 0, %s371
    %s374 = sphi 0, %s373
    %s388 = sphi 0, %s374
    %s392 = sphi 0, %s392
    %s394 = sphi 0, %s392
    %s395 = sphi 0, %s394
    %s409 = sphi 0, %s395
    %s413 = sphi 0, %s413
    %s415 = sphi 0, %s413
    %s416 = sphi 0, %s415
    %s430 = sphi 0, %s416
    %s434 = sphi 0, %s434
    %s436 = sphi 0, %s434
    %s437 = sphi 0, %s436
    %s451 = sphi 0, %s437
    %s455 = sphi 0, %s455
    %s457 = sphi 0, %s455
    %s458 = sphi 0, %s457
    %s472 = sphi 0, %s458
    %s476 = sphi 0, %s476
    %s478 = sphi 0, %s476
    %s479 = sphi 0, %s478
    %s493 = sphi 0, %s479
    %s497 = sphi 0, %s497
    %s499 = sphi 0, %s497
    %s500 = sphi 0, %s499
    %s514 = sphi 0, %s500
    %s520 = sphi 0, %s522
    %s523 = sphi 0, %s520
    %s524 = sphi 0, %s523
    %s540 = sphi 0, %s524
  $region4: #{tpu_custom_call.1} parent=0 // loop_header_branch
    %31 = sbr.rel (%p29) target = $region8
  $region5: #{tpu_custom_call.1} parent=0 // loop_body
    %s33 = ssub.s32 %s28, 1
    %s34 = ssub.s32 %s28, 2
    %s35 = sadd.s32 %s28, 1
    %s36 = ssub.s32 %s28, %s35
    %p37 = scmp.eq.s32.totalorder %s36, 0
    %s39 = sadd.s32 %s38, 1
    %s40 = scalar_select %p37, %s38, %s39
    %p43 = pneg %p37
    %p44 = scmp.eq.s32.totalorder %s28, 1
    %p45 = por %p43, %p44
    %p46 = scmp.ne.s32.totalorder %s38, %s41
    %p47 = scmp.eq.s32.totalorder %s28, 0
    %p48 = por %p46, %p47
    %p49 = scmp.ne.s32.totalorder %s38, %s41
    %p50 = scmp.eq.s32.totalorder %s33, 1
    %p51 = por %p49, %p50
    %p52 = scmp.ne.s32.totalorder %s41, %s42
    %p53 = scmp.eq.s32.totalorder %s33, 0
    %p54 = por %p52, %p53
    %p55 = scmp.ne.s32.totalorder %s41, %s42
    %p56 = scmp.eq.s32.totalorder %s34, 1
    %p57 = por %p55, %p56
    %p59 = scmp.ne.s32.totalorder %s42, %s58
    %p60 = scmp.eq.s32.totalorder %s34, 0
    %p61 = por %p59, %p60
    %s62 = ssub.s32 %s28, %s35
    %p63 = scmp.eq.s32.totalorder %s62, 0
    %s65 = sadd.s32 %s64, 1
    %s66 = scalar_select %p63, %s64, %s65
    %p69 = pneg %p63
    %p70 = scmp.eq.s32.totalorder %s28, 1
    %p71 = por %p69, %p70
    %p72 = scmp.ne.s32.totalorder %s64, %s67
    %p73 = scmp.eq.s32.totalorder %s28, 0
    %p74 = por %p72, %p73
    %p75 = scmp.ne.s32.totalorder %s64, %s67
    %p76 = scmp.eq.s32.totalorder %s33, 1
    %p77 = por %p75, %p76
    %p78 = scmp.ne.s32.totalorder %s67, %s68
    %p79 = scmp.eq.s32.totalorder %s33, 0
    %p80 = por %p78, %p79
    %p81 = scmp.ne.s32.totalorder %s67, %s68
    %p82 = scmp.eq.s32.totalorder %s34, 1
    %p83 = por %p81, %p82
    %p85 = scmp.ne.s32.totalorder %s68, %s84
    %p86 = scmp.eq.s32.totalorder %s34, 0
    %p87 = por %p85, %p86
    %s88 = ssub.s32 %s28, %s35
    %p89 = scmp.eq.s32.totalorder %s88, 0
    %s91 = sadd.s32 %s90, 1
    %s92 = scalar_select %p89, %s90, %s91
    %p95 = pneg %p89
    %p96 = scmp.eq.s32.totalorder %s28, 1
    %p97 = por %p95, %p96
    %p98 = scmp.ne.s32.totalorder %s90, %s93
    %p99 = scmp.eq.s32.totalorder %s28, 0
    %p100 = por %p98, %p99
    %p101 = scmp.ne.s32.totalorder %s90, %s93
    %p102 = scmp.eq.s32.totalorder %s33, 1
    %p103 = por %p101, %p102
    %p104 = scmp.ne.s32.totalorder %s93, %s94
    %p105 = scmp.eq.s32.totalorder %s33, 0
    %p106 = por %p104, %p105
    %p107 = scmp.ne.s32.totalorder %s93, %s94
    %p108 = scmp.eq.s32.totalorder %s34, 1
    %p109 = por %p107, %p108
    %p111 = scmp.ne.s32.totalorder %s94, %s110
    %p112 = scmp.eq.s32.totalorder %s34, 0
    %p113 = por %p111, %p112
    %s114 = ssub.s32 %s28, %s35
    %p115 = scmp.eq.s32.totalorder %s114, 0
    %s117 = sadd.s32 %s116, 1
    %s118 = scalar_select %p115, %s116, %s117
    %p121 = pneg %p115
    %p122 = scmp.eq.s32.totalorder %s28, 1
    %p123 = por %p121, %p122
    %p124 = scmp.ne.s32.totalorder %s116, %s119
    %p125 = scmp.eq.s32.totalorder %s28, 0
    %p126 = por %p124, %p125
    %p127 = scmp.ne.s32.totalorder %s116, %s119
    %p128 = scmp.eq.s32.totalorder %s33, 1
    %p129 = por %p127, %p128
    %p130 = scmp.ne.s32.totalorder %s119, %s120
    %p131 = scmp.eq.s32.totalorder %s33, 0
    %p132 = por %p130, %p131
    %p133 = scmp.ne.s32.totalorder %s119, %s120
    %p134 = scmp.eq.s32.totalorder %s34, 1
    %p135 = por %p133, %p134
    %p137 = scmp.ne.s32.totalorder %s120, %s136
    %p138 = scmp.eq.s32.totalorder %s34, 0
    %p139 = por %p137, %p138
    %s141 = sadd.s32 %s140, 1
    %p144 = scmp.eq.s32.totalorder %s28, 1
    %p145 = scmp.ne.s32.totalorder %s140, %s142
    %p146 = scmp.eq.s32.totalorder %s28, 0
    %p147 = por %p145, %p146
    %p148 = scmp.ne.s32.totalorder %s140, %s142
    %p149 = scmp.eq.s32.totalorder %s33, 1
    %p150 = por %p148, %p149
    %p151 = scmp.ne.s32.totalorder %s142, %s143
    %p152 = scmp.eq.s32.totalorder %s33, 0
    %p153 = por %p151, %p152
    %p154 = scmp.ne.s32.totalorder %s142, %s143
    %p155 = scmp.eq.s32.totalorder %s34, 1
    %p156 = por %p154, %p155
    %p158 = scmp.ne.s32.totalorder %s143, %s157
    %p159 = scmp.eq.s32.totalorder %s34, 0
    %p160 = por %p158, %p159
    %s162 = sadd.s32 %s161, 1
    %p165 = scmp.eq.s32.totalorder %s28, 1
    %p166 = scmp.ne.s32.totalorder %s161, %s163
    %p167 = scmp.eq.s32.totalorder %s28, 0
    %p168 = por %p166, %p167
    %p169 = scmp.ne.s32.totalorder %s161, %s163
    %p170 = scmp.eq.s32.totalorder %s33, 1
    %p171 = por %p169, %p170
    %p172 = scmp.ne.s32.totalorder %s163, %s164
    %p173 = scmp.eq.s32.totalorder %s33, 0
    %p174 = por %p172, %p173
    %p175 = scmp.ne.s32.totalorder %s163, %s164
    %p176 = scmp.eq.s32.totalorder %s34, 1
    %p177 = por %p175, %p176
    %p179 = scmp.ne.s32.totalorder %s164, %s178
    %p180 = scmp.eq.s32.totalorder %s34, 0
    %p181 = por %p179, %p180
    %s183 = sadd.s32 %s182, 1
    %p186 = scmp.eq.s32.totalorder %s28, 1
    %p187 = scmp.ne.s32.totalorder %s182, %s184
    %p188 = scmp.eq.s32.totalorder %s28, 0
    %p189 = por %p187, %p188
    %p190 = scmp.ne.s32.totalorder %s182, %s184
    %p191 = scmp.eq.s32.totalorder %s33, 1
    %p192 = por %p190, %p191
    %p193 = scmp.ne.s32.totalorder %s184, %s185
    %p194 = scmp.eq.s32.totalorder %s33, 0
    %p195 = por %p193, %p194
    %p196 = scmp.ne.s32.totalorder %s184, %s185
    %p197 = scmp.eq.s32.totalorder %s34, 1
    %p198 = por %p196, %p197
    %p200 = scmp.ne.s32.totalorder %s185, %s199
    %p201 = scmp.eq.s32.totalorder %s34, 0
    %p202 = por %p200, %p201
    %s204 = sadd.s32 %s203, 1
    %p207 = scmp.eq.s32.totalorder %s28, 1
    %p208 = scmp.ne.s32.totalorder %s203, %s205
    %p209 = scmp.eq.s32.totalorder %s28, 0
    %p210 = por %p208, %p209
    %p211 = scmp.ne.s32.totalorder %s203, %s205
    %p212 = scmp.eq.s32.totalorder %s33, 1
    %p213 = por %p211, %p212
    %p214 = scmp.ne.s32.totalorder %s205, %s206
    %p215 = scmp.eq.s32.totalorder %s33, 0
    %p216 = por %p214, %p215
    %p217 = scmp.ne.s32.totalorder %s205, %s206
    %p218 = scmp.eq.s32.totalorder %s34, 1
    %p219 = por %p217, %p218
    %p221 = scmp.ne.s32.totalorder %s206, %s220
    %p222 = scmp.eq.s32.totalorder %s34, 0
    %p223 = por %p221, %p222
    %s225 = sadd.s32 %s224, 1
    %p228 = scmp.eq.s32.totalorder %s28, 1
    %p229 = scmp.ne.s32.totalorder %s224, %s226
    %p230 = scmp.eq.s32.totalorder %s28, 0
    %p231 = por %p229, %p230
    %p232 = scmp.ne.s32.totalorder %s224, %s226
    %p233 = scmp.eq.s32.totalorder %s33, 1
    %p234 = por %p232, %p233
    %p235 = scmp.ne.s32.totalorder %s226, %s227
    %p236 = scmp.eq.s32.totalorder %s33, 0
    %p237 = por %p235, %p236
    %p238 = scmp.ne.s32.totalorder %s226, %s227
    %p239 = scmp.eq.s32.totalorder %s34, 1
    %p240 = por %p238, %p239
    %p242 = scmp.ne.s32.totalorder %s227, %s241
    %p243 = scmp.eq.s32.totalorder %s34, 0
    %p244 = por %p242, %p243
    %s246 = sadd.s32 %s245, 1
    %p249 = scmp.eq.s32.totalorder %s28, 1
    %p250 = scmp.ne.s32.totalorder %s245, %s247
    %p251 = scmp.eq.s32.totalorder %s28, 0
    %p252 = por %p250, %p251
    %p253 = scmp.ne.s32.totalorder %s245, %s247
    %p254 = scmp.eq.s32.totalorder %s33, 1
    %p255 = por %p253, %p254
    %p256 = scmp.ne.s32.totalorder %s247, %s248
    %p257 = scmp.eq.s32.totalorder %s33, 0
    %p258 = por %p256, %p257
    %p259 = scmp.ne.s32.totalorder %s247, %s248
    %p260 = scmp.eq.s32.totalorder %s34, 1
    %p261 = por %p259, %p260
    %p263 = scmp.ne.s32.totalorder %s248, %s262
    %p264 = scmp.eq.s32.totalorder %s34, 0
    %p265 = por %p263, %p264
    %s267 = sadd.s32 %s266, 1
    %p270 = scmp.eq.s32.totalorder %s28, 1
    %p271 = scmp.ne.s32.totalorder %s266, %s268
    %p272 = scmp.eq.s32.totalorder %s28, 0
    %p273 = por %p271, %p272
    %p274 = scmp.ne.s32.totalorder %s266, %s268
    %p275 = scmp.eq.s32.totalorder %s33, 1
    %p276 = por %p274, %p275
    %p277 = scmp.ne.s32.totalorder %s268, %s269
    %p278 = scmp.eq.s32.totalorder %s33, 0
    %p279 = por %p277, %p278
    %p280 = scmp.ne.s32.totalorder %s268, %s269
    %p281 = scmp.eq.s32.totalorder %s34, 1
    %p282 = por %p280, %p281
    %p284 = scmp.ne.s32.totalorder %s269, %s283
    %p285 = scmp.eq.s32.totalorder %s34, 0
    %p286 = por %p284, %p285
    %s288 = sadd.s32 %s287, 1
    %p291 = scmp.eq.s32.totalorder %s28, 1
    %p292 = scmp.ne.s32.totalorder %s287, %s289
    %p293 = scmp.eq.s32.totalorder %s28, 0
    %p294 = por %p292, %p293
    %p295 = scmp.ne.s32.totalorder %s287, %s289
    %p296 = scmp.eq.s32.totalorder %s33, 1
    %p297 = por %p295, %p296
    %p298 = scmp.ne.s32.totalorder %s289, %s290
    %p299 = scmp.eq.s32.totalorder %s33, 0
    %p300 = por %p298, %p299
    %p301 = scmp.ne.s32.totalorder %s289, %s290
    %p302 = scmp.eq.s32.totalorder %s34, 1
    %p303 = por %p301, %p302
    %p305 = scmp.ne.s32.totalorder %s290, %s304
    %p306 = scmp.eq.s32.totalorder %s34, 0
    %p307 = por %p305, %p306
    %s309 = sadd.s32 %s308, 1
    %p312 = scmp.eq.s32.totalorder %s28, 1
    %p313 = scmp.ne.s32.totalorder %s308, %s310
    %p314 = scmp.eq.s32.totalorder %s28, 0
    %p315 = por %p313, %p314
    %p316 = scmp.ne.s32.totalorder %s308, %s310
    %p317 = scmp.eq.s32.totalorder %s33, 1
    %p318 = por %p316, %p317
    %p319 = scmp.ne.s32.totalorder %s310, %s311
    %p320 = scmp.eq.s32.totalorder %s33, 0
    %p321 = por %p319, %p320
    %p322 = scmp.ne.s32.totalorder %s310, %s311
    %p323 = scmp.eq.s32.totalorder %s34, 1
    %p324 = por %p322, %p323
    %p326 = scmp.ne.s32.totalorder %s311, %s325
    %p327 = scmp.eq.s32.totalorder %s34, 0
    %p328 = por %p326, %p327
    %s330 = sadd.s32 %s329, 1
    %p333 = scmp.eq.s32.totalorder %s28, 1
    %p334 = scmp.ne.s32.totalorder %s329, %s331
    %p335 = scmp.eq.s32.totalorder %s28, 0
    %p336 = por %p334, %p335
    %p337 = scmp.ne.s32.totalorder %s329, %s331
    %p338 = scmp.eq.s32.totalorder %s33, 1
    %p339 = por %p337, %p338
    %p340 = scmp.ne.s32.totalorder %s331, %s332
    %p341 = scmp.eq.s32.totalorder %s33, 0
    %p342 = por %p340, %p341
    %p343 = scmp.ne.s32.totalorder %s331, %s332
    %p344 = scmp.eq.s32.totalorder %s34, 1
    %p345 = por %p343, %p344
    %p347 = scmp.ne.s32.totalorder %s332, %s346
    %p348 = scmp.eq.s32.totalorder %s34, 0
    %p349 = por %p347, %p348
    %s351 = sadd.s32 %s350, 1
    %p354 = scmp.eq.s32.totalorder %s28, 1
    %p355 = scmp.ne.s32.totalorder %s350, %s352
    %p356 = scmp.eq.s32.totalorder %s28, 0
    %p357 = por %p355, %p356
    %p358 = scmp.ne.s32.totalorder %s350, %s352
    %p359 = scmp.eq.s32.totalorder %s33, 1
    %p360 = por %p358, %p359
    %p361 = scmp.ne.s32.totalorder %s352, %s353
    %p362 = scmp.eq.s32.totalorder %s33, 0
    %p363 = por %p361, %p362
    %p364 = scmp.ne.s32.totalorder %s352, %s353
    %p365 = scmp.eq.s32.totalorder %s34, 1
    %p366 = por %p364, %p365
    %p368 = scmp.ne.s32.totalorder %s353, %s367
    %p369 = scmp.eq.s32.totalorder %s34, 0
    %p370 = por %p368, %p369
    %s372 = sadd.s32 %s371, 1
    %p375 = scmp.eq.s32.totalorder %s28, 1
    %p376 = scmp.ne.s32.totalorder %s371, %s373
    %p377 = scmp.eq.s32.totalorder %s28, 0
    %p378 = por %p376, %p377
    %p379 = scmp.ne.s32.totalorder %s371, %s373
    %p380 = scmp.eq.s32.totalorder %s33, 1
    %p381 = por %p379, %p380
    %p382 = scmp.ne.s32.totalorder %s373, %s374
    %p383 = scmp.eq.s32.totalorder %s33, 0
    %p384 = por %p382, %p383
    %p385 = scmp.ne.s32.totalorder %s373, %s374
    %p386 = scmp.eq.s32.totalorder %s34, 1
    %p387 = por %p385, %p386
    %p389 = scmp.ne.s32.totalorder %s374, %s388
    %p390 = scmp.eq.s32.totalorder %s34, 0
    %p391 = por %p389, %p390
    %s393 = sadd.s32 %s392, 1
    %p396 = scmp.eq.s32.totalorder %s28, 1
    %p397 = scmp.ne.s32.totalorder %s392, %s394
    %p398 = scmp.eq.s32.totalorder %s28, 0
    %p399 = por %p397, %p398
    %p400 = scmp.ne.s32.totalorder %s392, %s394
    %p401 = scmp.eq.s32.totalorder %s33, 1
    %p402 = por %p400, %p401
    %p403 = scmp.ne.s32.totalorder %s394, %s395
    %p404 = scmp.eq.s32.totalorder %s33, 0
    %p405 = por %p403, %p404
    %p406 = scmp.ne.s32.totalorder %s394, %s395
    %p407 = scmp.eq.s32.totalorder %s34, 1
    %p408 = por %p406, %p407
    %p410 = scmp.ne.s32.totalorder %s395, %s409
    %p411 = scmp.eq.s32.totalorder %s34, 0
    %p412 = por %p410, %p411
    %s414 = sadd.s32 %s413, 1
    %p417 = scmp.eq.s32.totalorder %s28, 1
    %p418 = scmp.ne.s32.totalorder %s413, %s415
    %p419 = scmp.eq.s32.totalorder %s28, 0
    %p420 = por %p418, %p419
    %p421 = scmp.ne.s32.totalorder %s413, %s415
    %p422 = scmp.eq.s32.totalorder %s33, 1
    %p423 = por %p421, %p422
    %p424 = scmp.ne.s32.totalorder %s415, %s416
    %p425 = scmp.eq.s32.totalorder %s33, 0
    %p426 = por %p424, %p425
    %p427 = scmp.ne.s32.totalorder %s415, %s416
    %p428 = scmp.eq.s32.totalorder %s34, 1
    %p429 = por %p427, %p428
    %p431 = scmp.ne.s32.totalorder %s416, %s430
    %p432 = scmp.eq.s32.totalorder %s34, 0
    %p433 = por %p431, %p432
    %s435 = sadd.s32 %s434, 1
    %p438 = scmp.eq.s32.totalorder %s28, 1
    %p439 = scmp.ne.s32.totalorder %s434, %s436
    %p440 = scmp.eq.s32.totalorder %s28, 0
    %p441 = por %p439, %p440
    %p442 = scmp.ne.s32.totalorder %s434, %s436
    %p443 = scmp.eq.s32.totalorder %s33, 1
    %p444 = por %p442, %p443
    %p445 = scmp.ne.s32.totalorder %s436, %s437
    %p446 = scmp.eq.s32.totalorder %s33, 0
    %p447 = por %p445, %p446
    %p448 = scmp.ne.s32.totalorder %s436, %s437
    %p449 = scmp.eq.s32.totalorder %s34, 1
    %p450 = por %p448, %p449
    %p452 = scmp.ne.s32.totalorder %s437, %s451
    %p453 = scmp.eq.s32.totalorder %s34, 0
    %p454 = por %p452, %p453
    %s456 = sadd.s32 %s455, 1
    %p459 = scmp.eq.s32.totalorder %s28, 1
    %p460 = scmp.ne.s32.totalorder %s455, %s457
    %p461 = scmp.eq.s32.totalorder %s28, 0
    %p462 = por %p460, %p461
    %p463 = scmp.ne.s32.totalorder %s455, %s457
    %p464 = scmp.eq.s32.totalorder %s33, 1
    %p465 = por %p463, %p464
    %p466 = scmp.ne.s32.totalorder %s457, %s458
    %p467 = scmp.eq.s32.totalorder %s33, 0
    %p468 = por %p466, %p467
    %p469 = scmp.ne.s32.totalorder %s457, %s458
    %p470 = scmp.eq.s32.totalorder %s34, 1
    %p471 = por %p469, %p470
    %p473 = scmp.ne.s32.totalorder %s458, %s472
    %p474 = scmp.eq.s32.totalorder %s34, 0
    %p475 = por %p473, %p474
    %s477 = sadd.s32 %s476, 1
    %p480 = scmp.eq.s32.totalorder %s28, 1
    %p481 = scmp.ne.s32.totalorder %s476, %s478
    %p482 = scmp.eq.s32.totalorder %s28, 0
    %p483 = por %p481, %p482
    %p484 = scmp.ne.s32.totalorder %s476, %s478
    %p485 = scmp.eq.s32.totalorder %s33, 1
    %p486 = por %p484, %p485
    %p487 = scmp.ne.s32.totalorder %s478, %s479
    %p488 = scmp.eq.s32.totalorder %s33, 0
    %p489 = por %p487, %p488
    %p490 = scmp.ne.s32.totalorder %s478, %s479
    %p491 = scmp.eq.s32.totalorder %s34, 1
    %p492 = por %p490, %p491
    %p494 = scmp.ne.s32.totalorder %s479, %s493
    %p495 = scmp.eq.s32.totalorder %s34, 0
    %p496 = por %p494, %p495
    %s498 = sadd.s32 %s497, 1
    %p501 = scmp.eq.s32.totalorder %s28, 1
    %p502 = scmp.ne.s32.totalorder %s497, %s499
    %p503 = scmp.eq.s32.totalorder %s28, 0
    %p504 = por %p502, %p503
    %p505 = scmp.ne.s32.totalorder %s497, %s499
    %p506 = scmp.eq.s32.totalorder %s33, 1
    %p507 = por %p505, %p506
    %p508 = scmp.ne.s32.totalorder %s499, %s500
    %p509 = scmp.eq.s32.totalorder %s33, 0
    %p510 = por %p508, %p509
    %p511 = scmp.ne.s32.totalorder %s499, %s500
    %p512 = scmp.eq.s32.totalorder %s34, 1
    %p513 = por %p511, %p512
    %p515 = scmp.ne.s32.totalorder %s500, %s514
    %p516 = scmp.eq.s32.totalorder %s34, 0
    %p517 = por %p515, %p516
    %s518 = ssub.s32 %s28, %s35
    %p519 = scmp.eq.s32.totalorder %s518, 0
    %s521 = sadd.s32 %s520, 1
    %s522 = scalar_select %p519, %s520, %s521
    %p525 = pneg %p519
    %p526 = scmp.eq.s32.totalorder %s28, 1
    %p527 = por %p525, %p526
    %p528 = scmp.ne.s32.totalorder %s520, %s523
    %p529 = scmp.eq.s32.totalorder %s28, 0
    %p530 = por %p528, %p529
    %p531 = scmp.ne.s32.totalorder %s520, %s523
    %p532 = scmp.eq.s32.totalorder %s33, 1
    %p533 = por %p531, %p532
    %p534 = scmp.ne.s32.totalorder %s523, %s524
    %p535 = scmp.eq.s32.totalorder %s33, 0
    %p536 = por %p534, %p535
    %p537 = scmp.ne.s32.totalorder %s523, %s524
    %p538 = scmp.eq.s32.totalorder %s34, 1
    %p539 = por %p537, %p538
    %p541 = scmp.ne.s32.totalorder %s524, %s540
    %p542 = scmp.eq.s32.totalorder %s34, 0
    %p543 = por %p541, %p542
    %p544 = scmp.le.s32.totalorder 1, %s28
    %p545 = scmp.lt.s32.totalorder %s28, 3
    %p546 = pnand %p544, %p545
    %p547 = pneg %p546
    // Predicated region
    $region9: #{tpu_custom_call.1} parent=5 // pred_check
      _
    $region10: #{tpu_custom_call.1} parent=5 // pred_check_branch
      %549 = sbr.rel (%p546) target = $region12
    $region11: #{tpu_custom_call.1} parent=5 // pred_region
      %s550 = ssub.s32 %s28, 1
      // Predicated region
      $region13: #{tpu_custom_call.1} parent=11 // pred_check
        %p551 = pneg %p153
      $region14: #{tpu_custom_call.1} parent=11 // pred_check_branch
        %553 = sbr.rel (%p551) target = $region16
      $region15: #{tpu_custom_call.1} parent=11 // pred_region
        _
      $region16: #{tpu_custom_call.1} parent=11 // pred_fallthru
        _
      // Predicated region
      $region17: #{tpu_custom_call.1} parent=11 // pred_check
        %p554 = pneg %p174
      $region18: #{tpu_custom_call.1} parent=11 // pred_check_branch
        %556 = sbr.rel (%p554) target = $region20
      $region19: #{tpu_custom_call.1} parent=11 // pred_region
        _
      $region20: #{tpu_custom_call.1} parent=11 // pred_fallthru
        _
      // Predicated region
      $region21: #{tpu_custom_call.1} parent=11 // pred_check
        %p557 = pneg %p195
      $region22: #{tpu_custom_call.1} parent=11 // pred_check_branch
        %559 = sbr.rel (%p557) target = $region24
      $region23: #{tpu_custom_call.1} parent=11 // pred_region
        _
      $region24: #{tpu_custom_call.1} parent=11 // pred_fallthru
        _
      // Predicated region
      $region25: #{tpu_custom_call.1} parent=11 // pred_check
        %p560 = pneg %p216
      $region26: #{tpu_custom_call.1} parent=11 // pred_check_branch
        %562 = sbr.rel (%p560) target = $region28
      $region27: #{tpu_custom_call.1} parent=11 // pred_region
        _
      $region28: #{tpu_custom_call.1} parent=11 // pred_fallthru
        _
      // Predicated region
      $region29: #{tpu_custom_call.1} parent=11 // pred_check
        %p563 = pneg %p237
      $region30: #{tpu_custom_call.1} parent=11 // pred_check_branch
        %565 = sbr.rel (%p563) target = $region32
      $region31: #{tpu_custom_call.1} parent=11 // pred_region
        _
      $region32: #{tpu_custom_call.1} parent=11 // pred_fallthru
        _
      // Predicated region
      $region33: #{tpu_custom_call.1} parent=11 // pred_check
        %p566 = pneg %p258
      $region34: #{tpu_custom_call.1} parent=11 // pred_check_branch
        %568 = sbr.rel (%p566) target = $region36
      $region35: #{tpu_custom_call.1} parent=11 // pred_region
        _
      $region36: #{tpu_custom_call.1} parent=11 // pred_fallthru
        _
      // Predicated region
      $region37: #{tpu_custom_call.1} parent=11 // pred_check
        %p569 = pneg %p279
      $region38: #{tpu_custom_call.1} parent=11 // pred_check_branch
        %571 = sbr.rel (%p569) target = $region40
      $region39: #{tpu_custom_call.1} parent=11 // pred_region
        _
      $region40: #{tpu_custom_call.1} parent=11 // pred_fallthru
        _
      // Predicated region
      $region41: #{tpu_custom_call.1} parent=11 // pred_check
        %p572 = pneg %p300
      $region42: #{tpu_custom_call.1} parent=11 // pred_check_branch
        %574 = sbr.rel (%p572) target = $region44
      $region43: #{tpu_custom_call.1} parent=11 // pred_region
        _
      $region44: #{tpu_custom_call.1} parent=11 // pred_fallthru
        _
      // Predicated region
      $region45: #{tpu_custom_call.1} parent=11 // pred_check
        %p575 = pneg %p321
      $region46: #{tpu_custom_call.1} parent=11 // pred_check_branch
        %577 = sbr.rel (%p575) target = $region48
      $region47: #{tpu_custom_call.1} parent=11 // pred_region
        _
      $region48: #{tpu_custom_call.1} parent=11 // pred_fallthru
        _
      // Predicated region
      $region49: #{tpu_custom_call.1} parent=11 // pred_check
        %p578 = pneg %p342
      $region50: #{tpu_custom_call.1} parent=11 // pred_check_branch
        %580 = sbr.rel (%p578) target = $region52
      $region51: #{tpu_custom_call.1} parent=11 // pred_region
        _
      $region52: #{tpu_custom_call.1} parent=11 // pred_fallthru
        _
      // Predicated region
      $region53: #{tpu_custom_call.1} parent=11 // pred_check
        %p581 = pneg %p363
      $region54: #{tpu_custom_call.1} parent=11 // pred_check_branch
        %583 = sbr.rel (%p581) target = $region56
      $region55: #{tpu_custom_call.1} parent=11 // pred_region
        _
      $region56: #{tpu_custom_call.1} parent=11 // pred_fallthru
        _
      // Predicated region
      $region57: #{tpu_custom_call.1} parent=11 // pred_check
        %p584 = pneg %p384
      $region58: #{tpu_custom_call.1} parent=11 // pred_check_branch
        %586 = sbr.rel (%p584) target = $region60
      $region59: #{tpu_custom_call.1} parent=11 // pred_region
        _
      $region60: #{tpu_custom_call.1} parent=11 // pred_fallthru
        _
      // Predicated region
      $region61: #{tpu_custom_call.1} parent=11 // pred_check
        %p587 = pneg %p405
      $region62: #{tpu_custom_call.1} parent=11 // pred_check_branch
        %589 = sbr.rel (%p587) target = $region64
      $region63: #{tpu_custom_call.1} parent=11 // pred_region
        _
      $region64: #{tpu_custom_call.1} parent=11 // pred_fallthru
        _
      // Predicated region
      $region65: #{tpu_custom_call.1} parent=11 // pred_check
        %p590 = pneg %p426
      $region66: #{tpu_custom_call.1} parent=11 // pred_check_branch
        %592 = sbr.rel (%p590) target = $region68
      $region67: #{tpu_custom_call.1} parent=11 // pred_region
        _
      $region68: #{tpu_custom_call.1} parent=11 // pred_fallthru
        _
      // Predicated region
      $region69: #{tpu_custom_call.1} parent=11 // pred_check
        %p593 = pneg %p447
      $region70: #{tpu_custom_call.1} parent=11 // pred_check_branch
        %595 = sbr.rel (%p593) target = $region72
      $region71: #{tpu_custom_call.1} parent=11 // pred_region
        _
      $region72: #{tpu_custom_call.1} parent=11 // pred_fallthru
        _
      // Predicated region
      $region73: #{tpu_custom_call.1} parent=11 // pred_check
        %p596 = pneg %p468
      $region74: #{tpu_custom_call.1} parent=11 // pred_check_branch
        %598 = sbr.rel (%p596) target = $region76
      $region75: #{tpu_custom_call.1} parent=11 // pred_region
        _
      $region76: #{tpu_custom_call.1} parent=11 // pred_fallthru
        _
      // Predicated region
      $region77: #{tpu_custom_call.1} parent=11 // pred_check
        %p599 = pneg %p489
      $region78: #{tpu_custom_call.1} parent=11 // pred_check_branch
        %601 = sbr.rel (%p599) target = $region80
      $region79: #{tpu_custom_call.1} parent=11 // pred_region
        _
      $region80: #{tpu_custom_call.1} parent=11 // pred_fallthru
        _
      // Predicated region
      $region81: #{tpu_custom_call.1} parent=11 // pred_check
        %p602 = pneg %p510
      $region82: #{tpu_custom_call.1} parent=11 // pred_check_branch
        %604 = sbr.rel (%p602) target = $region84
      $region83: #{tpu_custom_call.1} parent=11 // pred_region
        _
      $region84: #{tpu_custom_call.1} parent=11 // pred_fallthru
        _
    $region12: #{tpu_custom_call.1} parent=5 // pred_fallthru
      _
    %p605 = scmp.lt.s32.totalorder %s28, 2
    // Predicated region
    $region85: #{tpu_custom_call.1} parent=5 // pred_check
      %p606 = pneg %p605
    $region86: #{tpu_custom_call.1} parent=5 // pred_check_branch
      %608 = sbr.rel (%p606) target = $region88
    $region87: #{tpu_custom_call.1} parent=5 // pred_region
      // Predicated region
      $region89: #{tpu_custom_call.1} parent=87 // pred_check
        %p609 = pneg %p48
      $region90: #{tpu_custom_call.1} parent=87 // pred_check_branch
        %611 = sbr.rel (%p609) target = $region92
      $region91: #{tpu_custom_call.1} parent=87 // pred_region
        %s612 = smul.u32 16, %s28
        %p613 = scmp.lt.s32.totalorder %s612, 31
        %s614 = scalar_select %p613, %s612, 31
        %s615 = smul.addr %s614, 8
        %s616 = scalar_lea.vmem %s0, %s615
        %s617 = smul.u32 16, %s28
      $region92: #{tpu_custom_call.1} parent=87 // pred_fallthru
        _
      // Predicated region
      $region93: #{tpu_custom_call.1} parent=87 // pred_check
        %p618 = pneg %p74
      $region94: #{tpu_custom_call.1} parent=87 // pred_check_branch
        %620 = sbr.rel (%p618) target = $region96
      $region95: #{tpu_custom_call.1} parent=87 // pred_region
        %s621 = smul.u32 16, %s28
        %p622 = scmp.lt.s32.totalorder %s621, 31
        %s623 = scalar_select %p622, %s621, 31
        %s624 = smul.addr %s623, 8
        %s625 = scalar_lea.vmem %s1, %s624
        %s626 = smul.u32 16, %s28
      $region96: #{tpu_custom_call.1} parent=87 // pred_fallthru
        _
      // Predicated region
      $region97: #{tpu_custom_call.1} parent=87 // pred_check
        %p627 = pneg %p100
      $region98: #{tpu_custom_call.1} parent=87 // pred_check_branch
        %629 = sbr.rel (%p627) target = $region100
      $region99: #{tpu_custom_call.1} parent=87 // pred_region
        %s630 = smul.u32 16, %s28
        %p631 = scmp.lt.s32.totalorder %s630, 31
        %s632 = scalar_select %p631, %s630, 31
        %s633 = smul.addr %s632, 8
        %s634 = scalar_lea.vmem %s2, %s633
        %s635 = smul.u32 16, %s28
      $region100: #{tpu_custom_call.1} parent=87 // pred_fallthru
        _
      // Predicated region
      $region101: #{tpu_custom_call.1} parent=87 // pred_check
        %p636 = pneg %p126
      $region102: #{tpu_custom_call.1} parent=87 // pred_check_branch
        %638 = sbr.rel (%p636) target = $region104
      $region103: #{tpu_custom_call.1} parent=87 // pred_region
        %s639 = smul.u32 16, %s28
        %p640 = scmp.lt.s32.totalorder %s639, 31
        %s641 = scalar_select %p640, %s639, 31
        %s642 = smul.addr %s641, 8
        %s643 = scalar_lea.vmem %s3, %s642
        %s644 = smul.u32 16, %s28
      $region104: #{tpu_custom_call.1} parent=87 // pred_fallthru
        _
    $region88: #{tpu_custom_call.1} parent=5 // pred_fallthru
      _
    %p645 = scmp.le.s32.totalorder 1, %s28
    %p646 = scmp.lt.s32.totalorder %s28, 3
    %p647 = pnand %p645, %p646
    %p648 = pneg %p647
    // Predicated region
    $region105: #{tpu_custom_call.1} parent=5 // pred_check
      _
    $region106: #{tpu_custom_call.1} parent=5 // pred_check_branch
      %650 = sbr.rel (%p647) target = $region108
    $region107: #{tpu_custom_call.1} parent=5 // pred_region
      %s651 = ssub.s32 %s28, 1
      %s652 = smul.u32 16, %s33
      %p653 = scmp.lt.s32.totalorder %s652, 31
      %s654 = scalar_select %p653, %s652, 31
      %s655 = smul.addr %s654, 8
      %s656 = scalar_lea.vmem %s0, %s655
      %p657 = pneg %p54
      %p658 = pneg %p51
      %s659 = smul.u32 16, %s33
      %p660 = scmp.lt.s32.totalorder %s659, 31
      %s661 = scalar_select %p660, %s659, 31
      %s662 = smul.addr %s661, 8
      %s663 = scalar_lea.vmem %s1, %s662
      %p664 = pneg %p80
      %p665 = pneg %p77
      %s666 = smul.u32 16, %s33
      %p667 = scmp.lt.s32.totalorder %s666, 31
      %s668 = scalar_select %p667, %s666, 31
      %s669 = smul.addr %s668, 8
      %s670 = scalar_lea.vmem %s2, %s669
      %p671 = pneg %p106
      %p672 = pneg %p103
      %s673 = smul.u32 16, %s33
      %p674 = scmp.lt.s32.totalorder %s673, 31
      %s675 = scalar_select %p674, %s673, 31
      %s676 = smul.addr %s675, 8
      %s677 = scalar_lea.vmem %s3, %s676
      %p678 = pneg %p132
      %p679 = pneg %p129
      %p680 = pneg %p153
      %p681 = pneg %p150
      %p682 = pneg %p174
      %p683 = pneg %p171
      %p684 = pneg %p195
      %p685 = pneg %p192
      %p686 = pneg %p216
      %p687 = pneg %p213
      %p688 = pneg %p237
      %p689 = pneg %p234
      %p690 = pneg %p258
      %p691 = pneg %p255
      %p692 = pneg %p279
      %p693 = pneg %p276
      %p694 = pneg %p300
      %p695 = pneg %p297
      %p696 = pneg %p321
      %p697 = pneg %p318
      %p698 = pneg %p342
      %p699 = pneg %p339
      %p700 = pneg %p363
      %p701 = pneg %p360
      %p702 = pneg %p384
      %p703 = pneg %p381
      %p704 = pneg %p405
      %p705 = pneg %p402
      %p706 = pneg %p426
      %p707 = pneg %p423
      %p708 = pneg %p447
      %p709 = pneg %p444
      %p710 = pneg %p468
      %p711 = pneg %p465
      %p712 = pneg %p489
      %p713 = pneg %p486
      %p714 = pneg %p510
      %p715 = pneg %p507
      %p716 = pneg %p536
      %p717 = pneg %p533
      %s718 = smul.u32 16, %s33
      %p719 = scmp.lt.s32.totalorder %s718, 31
      %s720 = scalar_select %p719, %s718, 31
      %s721 = smul.addr %s720, 8
      %s722 = scalar_lea.vmem %s22, %s721
      %s723 = smul.u32 16, %s33
      %p724 = scmp.lt.s32.totalorder %s723, 31
      %s725 = scalar_select %p724, %s723, 31
      %s726 = smul.addr %s725, 8
      %s727 = scalar_lea.vmem %s0, %s726
      %s728 = smul.u32 16, %s33
      %s729 = smul.u32 16, %s33
      %p730 = scmp.lt.s32.totalorder %s729, 31
      %s731 = scalar_select %p730, %s729, 31
      %s732 = smul.addr %s731, 8
      %s733 = scalar_lea.vmem %s1, %s732
      %s734 = smul.u32 16, %s33
      %s735 = smul.u32 16, %s33
      %p736 = scmp.lt.s32.totalorder %s735, 31
      %s737 = scalar_select %p736, %s735, 31
      %s738 = smul.addr %s737, 8
      %s739 = scalar_lea.vmem %s2, %s738
      %s740 = smul.u32 16, %s33
      %s741 = smul.u32 16, %s33
      %p742 = scmp.lt.s32.totalorder %s741, 31
      %s743 = scalar_select %p742, %s741, 31
      %s744 = smul.addr %s743, 8
      %s745 = scalar_lea.vmem %s3, %s744
      %s746 = smul.u32 16, %s33
      %s747 = smul.u32 16, %s33
      %p748 = scmp.lt.s32.totalorder %s747, 31
      %s749 = scalar_select %p748, %s747, 31
      %s750 = smul.addr %s749, 8
      %s751 = scalar_lea.vmem %s22, %s750
      %s752 = smul.u32 16, %s33
      %v753 = vld [vmem:[%s727] sm:$0xff]
      %v754 = vld [vmem:[%s727 + $0x8] sm:$0xff]
      %v755 = vld [vmem:[%s727 + $0x10] sm:$0xff]
      %v756 = vld [vmem:[%s727 + $0x18] sm:$0xff]
      %v757 = vld [vmem:[%s727 + $0x20] sm:$0xff]
      %v758 = vld [vmem:[%s727 + $0x28] sm:$0xff]
      %v759 = vld [vmem:[%s727 + $0x30] sm:$0xff]
      %v760 = vld [vmem:[%s727 + $0x38] sm:$0xff]
      %v761 = vld [vmem:[%s727 + $0x40] sm:$0xff]
      %v762 = vld [vmem:[%s727 + $0x48] sm:$0xff]
      %v763 = vld [vmem:[%s727 + $0x50] sm:$0xff]
      %v764 = vld [vmem:[%s727 + $0x58] sm:$0xff]
      %v765 = vld [vmem:[%s727 + $0x60] sm:$0xff]
      %v766 = vld [vmem:[%s727 + $0x68] sm:$0xff]
      %v767 = vld [vmem:[%s727 + $0x70] sm:$0xff]
      %v768 = vld [vmem:[%s727 + $0x78] sm:$0xff]
      %v769 = vld [vmem:[%s733] sm:$0xff]
      %v770 = vld [vmem:[%s733 + $0x8] sm:$0xff]
      %v771 = vld [vmem:[%s733 + $0x10] sm:$0xff]
      %v772 = vld [vmem:[%s733 + $0x18] sm:$0xff]
      %v773 = vld [vmem:[%s733 + $0x20] sm:$0xff]
      %v774 = vld [vmem:[%s733 + $0x28] sm:$0xff]
      %v775 = vld [vmem:[%s733 + $0x30] sm:$0xff]
      %v776 = vld [vmem:[%s733 + $0x38] sm:$0xff]
      %v777 = vld [vmem:[%s733 + $0x40] sm:$0xff]
      %v778 = vld [vmem:[%s733 + $0x48] sm:$0xff]
      %v779 = vld [vmem:[%s733 + $0x50] sm:$0xff]
      %v780 = vld [vmem:[%s733 + $0x58] sm:$0xff]
      %v781 = vld [vmem:[%s733 + $0x60] sm:$0xff]
      %v782 = vld [vmem:[%s733 + $0x68] sm:$0xff]
      %v783 = vld [vmem:[%s733 + $0x70] sm:$0xff]
      %v784 = vld [vmem:[%s733 + $0x78] sm:$0xff]
      %v785 = vld [vmem:[%s739] sm:$0xff]
      %v786 = vld [vmem:[%s739 + $0x8] sm:$0xff]
      %v787 = vld [vmem:[%s739 + $0x10] sm:$0xff]
      %v788 = vld [vmem:[%s739 + $0x18] sm:$0xff]
      %v789 = vld [vmem:[%s739 + $0x20] sm:$0xff]
      %v790 = vld [vmem:[%s739 + $0x28] sm:$0xff]
      %v791 = vld [vmem:[%s739 + $0x30] sm:$0xff]
      %v792 = vld [vmem:[%s739 + $0x38] sm:$0xff]
      %v793 = vld [vmem:[%s739 + $0x40] sm:$0xff]
      %v794 = vld [vmem:[%s739 + $0x48] sm:$0xff]
      %v795 = vld [vmem:[%s739 + $0x50] sm:$0xff]
      %v796 = vld [vmem:[%s739 + $0x58] sm:$0xff]
      %v797 = vld [vmem:[%s739 + $0x60] sm:$0xff]
      %v798 = vld [vmem:[%s739 + $0x68] sm:$0xff]
      %v799 = vld [vmem:[%s739 + $0x70] sm:$0xff]
      %v800 = vld [vmem:[%s739 + $0x78] sm:$0xff]
      %v801 = vld [vmem:[%s4] sm:$0xff]
      %v802 = vld [vmem:[%s4 + $0x8] sm:$0xf]
      %v803 = vld [vmem:[%s5] sm:$0xf]
      %vm804 = vcmask 31744
      %v806 = vsel %vm804, %v769, 0
      %v809 = vsel %vm804, %v770, 0
      %v812 = vsel %vm804, %v771, 0
      %v815 = vsel %vm804, %v772, 0
      %v818 = vsel %vm804, %v773, 0
      %v821 = vsel %vm804, %v774, 0
      %v824 = vsel %vm804, %v775, 0
      %v827 = vsel %vm804, %v776, 0
      %v830 = vsel %vm804, %v777, 0
      %v833 = vsel %vm804, %v778, 0
      %v836 = vsel %vm804, %v779, 0
      %v839 = vsel %vm804, %v780, 0
      %v842 = vsel %vm804, %v781, 0
      %v845 = vsel %vm804, %v782, 0
      %v848 = vsel %vm804, %v783, 0
      %v851 = vsel %vm804, %v784, 0
      %vm853 = vcmask 1043456
      %v855 = vsel %vm853, %v803, 0
      %857 = vmatprep.subr.mxu0 0.0
      %858 = vmatpush1.msra.mxu0 %v855
      %859 = vmatprep.subr.mxu0 0.0
      %860 = vmatpush1.msra.mxu0 0.0
      %861 = vmatprep.subr.mxu0 0.0
      %862 = vmatpush1.msra.mxu0 0.0
      %863 = vmatprep.subr.mxu0 0.0
      %864 = vmatpush1.msra.mxu0 0.0
      %865 = vmatprep.subr.mxu0 0.0
      %866 = vmatpush1.msra.mxu0 0.0
      %867 = vmatprep.subr.mxu0 0.0
      %868 = vmatpush1.msra.mxu0 0.0
      %869 = vmatprep.subr.mxu0 0.0
      %870 = vmatpush1.msra.mxu0 0.0
      %871 = vmatprep.subr.mxu0 0.0
      %872 = vmatpush1.msra.mxu0 0.0
      %873 = vmatprep.subr.mxu0 0.0
      %874 = vmatpush1.msra.mxu0 0.0
      %875 = vmatprep.subr.mxu0 0.0
      %876 = vmatpush1.msra.mxu0 0.0
      %877 = vmatprep.subr.mxu0 0.0
      %878 = vmatpush1.msra.mxu0 0.0
      %879 = vmatprep.subr.mxu0 0.0
      %880 = vmatpush1.msra.mxu0 0.0
      %881 = vmatprep.subr.mxu0 0.0
      %882 = vmatpush1.msra.mxu0 0.0
      %883 = vmatprep.subr.mxu0 0.0
      %884 = vmatpush1.msra.mxu0 0.0
      %885 = vmatprep.subr.mxu0 0.0
      %886 = vmatpush1.msra.mxu0 0.0
      %887 = vmatprep.subr.mxu0 0.0
      %888 = vmatpush1.msra.mxu0 0.0
      %889 = vmatprep.subr.mxu0 0.0
      %890 = vmatpush1.msra.mxu0 0.0
      %891 = vmatprep.subr.mxu0 0.0
      %892 = vmatpush1.msra.mxu0 0.0
      %893 = vmatprep.subr.mxu0 0.0
      %894 = vmatpush1.msra.mxu0 0.0
      %895 = vmatprep.subr.mxu0 0.0
      %896 = vmatpush1.msra.mxu0 0.0
      %897 = vmatprep.subr.mxu0 0.0
      %898 = vmatpush1.msra.mxu0 0.0
      %899 = vmatprep.subr.mxu0 0.0
      %900 = vmatpush1.msra.mxu0 0.0
      %901 = vmatprep.subr.mxu0 0.0
      %902 = vmatpush1.msra.mxu0 0.0
      %903 = vmatprep.subr.mxu0 0.0
      %904 = vmatpush1.msra.mxu0 0.0
      %905 = vmatprep.subr.mxu0 0.0
      %906 = vmatpush1.msra.mxu0 0.0
      %907 = vmatprep.subr.mxu0 0.0
      %908 = vmatpush1.msra.mxu0 0.0
      %909 = vmatprep.subr.mxu0 0.0
      %910 = vmatpush1.msra.mxu0 0.0
      %911 = vmatprep.subr.mxu0 0.0
      %912 = vmatpush1.msra.mxu0 0.0
      %913 = vmatprep.subr.mxu0 0.0
      %914 = vmatpush1.msra.mxu0 0.0
      %915 = vmatprep.subr.mxu0 0.0
      %916 = vmatpush1.msra.mxu0 0.0
      %917 = vmatprep.subr.mxu0 0.0
      %918 = vmatpush1.msra.mxu0 0.0
      %919 = vmatprep.subr.mxu0 0.0
      %920 = vmatpush1.msra.mxu0 0.0
      %921 = vmatprep.mubr.f32.mxu0 0.0
      %922 = vmatmul.mubr.f32.gmra.mrb[0].mxu0 %v806
      %v923 = vpop.f32.mrb[0].mxu0
      %v924 = vadd.f32 0.0, %v923
      %v925 = vpop.f32.mrb[0].mxu0
      %926 = vmatprep.mubr.f32.mxu0 0.0
      %927 = vmatmul.mubr.f32.gmra.mrb[0].mxu0 %v809
      %v928 = vpop.f32.mrb[0].mxu0
      %v929 = vadd.f32 0.0, %v928
      %v930 = vpop.f32.mrb[0].mxu0
      %931 = vmatprep.mubr.f32.mxu0 0.0
      %932 = vmatmul.mubr.f32.gmra.mrb[0].mxu0 %v812
      %v933 = vpop.f32.mrb[0].mxu0
      %v934 = vadd.f32 0.0, %v933
      %v935 = vpop.f32.mrb[0].mxu0
      %936 = vmatprep.mubr.f32.mxu0 0.0
      %937 = vmatmul.mubr.f32.gmra.mrb[0].mxu0 %v815
      %v938 = vpop.f32.mrb[0].mxu0
      %v939 = vadd.f32 0.0, %v938
      %v940 = vpop.f32.mrb[0].mxu0
      %941 = vmatprep.mubr.f32.mxu0 0.0
      %942 = vmatmul.mubr.f32.gmra.mrb[0].mxu0 %v818
      %v943 = vpop.f32.mrb[0].mxu0
      %v944 = vadd.f32 0.0, %v943
      %v945 = vpop.f32.mrb[0].mxu0
      %946 = vmatprep.mubr.f32.mxu0 0.0
      %947 = vmatmul.mubr.f32.gmra.mrb[0].mxu0 %v821
      %v948 = vpop.f32.mrb[0].mxu0
      %v949 = vadd.f32 0.0, %v948
      %v950 = vpop.f32.mrb[0].mxu0
      %951 = vmatprep.mubr.f32.mxu0 0.0
      %952 = vmatmul.mubr.f32.gmra.mrb[0].mxu0 %v824
      %v953 = vpop.f32.mrb[0].mxu0
      %v954 = vadd.f32 0.0, %v953
      %v955 = vpop.f32.mrb[0].mxu0
      %956 = vmatprep.mubr.f32.mxu0 0.0
      %957 = vmatmul.mubr.f32.gmra.mrb[0].mxu0 %v827
      %v958 = vpop.f32.mrb[0].mxu0
      %v959 = vadd.f32 0.0, %v958
      %v960 = vpop.f32.mrb[0].mxu0
      %961 = vmatprep.mubr.f32.mxu0 0.0
      %962 = vmatmul.mubr.f32.gmra.mrb[0].mxu0 %v830
      %v963 = vpop.f32.mrb[0].mxu0
      %v964 = vadd.f32 0.0, %v963
      %v965 = vpop.f32.mrb[0].mxu0
      %966 = vmatprep.mubr.f32.mxu0 0.0
      %967 = vmatmul.mubr.f32.gmra.mrb[0].mxu0 %v833
      %v968 = vpop.f32.mrb[0].mxu0
      %v969 = vadd.f32 0.0, %v968
      %v970 = vpop.f32.mrb[0].mxu0
      %971 = vmatprep.mubr.f32.mxu0 0.0
      %972 = vmatmul.mubr.f32.gmra.mrb[0].mxu0 %v836
      %v973 = vpop.f32.mrb[0].mxu0
      %v974 = vadd.f32 0.0, %v973
      %v975 = vpop.f32.mrb[0].mxu0
      %976 = vmatprep.mubr.f32.mxu0 0.0
      %977 = vmatmul.mubr.f32.gmra.mrb[0].mxu0 %v839
      %v978 = vpop.f32.mrb[0].mxu0
      %v979 = vadd.f32 0.0, %v978
      %v980 = vpop.f32.mrb[0].mxu0
      %981 = vmatprep.mubr.f32.mxu0 0.0
      %982 = vmatmul.mubr.f32.gmra.mrb[0].mxu0 %v842
      %v983 = vpop.f32.mrb[0].mxu0
      %v984 = vadd.f32 0.0, %v983
      %v985 = vpop.f32.mrb[0].mxu0
      %986 = vmatprep.mubr.f32.mxu0 0.0
      %987 = vmatmul.mubr.f32.gmra.mrb[0].mxu0 %v845
      %v988 = vpop.f32.mrb[0].mxu0
      %v989 = vadd.f32 0.0, %v988
      %v990 = vpop.f32.mrb[0].mxu0
      %991 = vmatprep.mubr.f32.mxu0 0.0
      %992 = vmatmul.mubr.f32.gmra.mrb[0].mxu0 %v848
      %v993 = vpop.f32.mrb[0].mxu0
      %v994 = vadd.f32 0.0, %v993
      %v995 = vpop.f32.mrb[0].mxu0
      %996 = vmatprep.mubr.f32.mxu0 0.0
      %997 = vmatmul.mubr.f32.gmra.mrb[0].mxu0 %v851
      %v998 = vpop.f32.mrb[0].mxu0
      %v999 = vadd.f32 0.0, %v998
      %v1000 = vpop.f32.mrb[0].mxu0
      %1001 = vdwg.mxu0
      %vm1002 = vcmask 97280
      %v1004 = vsel %vm1002, %v753, 0
      %v1007 = vsel %vm1002, %v754, 0
      %v1010 = vsel %vm1002, %v755, 0
      %v1013 = vsel %vm1002, %v756, 0
      %v1016 = vsel %vm1002, %v757, 0
      %v1019 = vsel %vm1002, %v758, 0
      %v1022 = vsel %vm1002, %v759, 0
      %v1025 = vsel %vm1002, %v760, 0
      %v1028 = vsel %vm1002, %v761, 0
      %v1031 = vsel %vm1002, %v762, 0
      %v1034 = vsel %vm1002, %v763, 0
      %v1037 = vsel %vm1002, %v764, 0
      %v1040 = vsel %vm1002, %v765, 0
      %v1043 = vsel %vm1002, %v766, 0
      %v1046 = vsel %vm1002, %v767, 0
      %v1049 = vsel %vm1002, %v768, 0
      %v1052 = vsel %vm853, %v802, 0
      %1054 = vmatprep.subr.mxu0 0.0
      %1055 = vmatpush1.msra.mxu0 %v801
      %1056 = vmatprep.subr.mxu0 0.0
      %1057 = vmatpush1.msra.mxu0 %v1052
      %1058 = vmatprep.subr.mxu0 0.0
      %1059 = vmatpush1.msra.mxu0 0.0
      %1060 = vmatprep.subr.mxu0 0.0
      %1061 = vmatpush1.msra.mxu0 0.0
      %1062 = vmatprep.subr.mxu0 0.0
      %1063 = vmatpush1.msra.mxu0 0.0
      %1064 = vmatprep.subr.mxu0 0.0
      %1065 = vmatpush1.msra.mxu0 0.0
      %1066 = vmatprep.subr.mxu0 0.0
      %1067 = vmatpush1.msra.mxu0 0.0
      %1068 = vmatprep.subr.mxu0 0.0
      %1069 = vmatpush1.msra.mxu0 0.0
      %1070 = vmatprep.subr.mxu0 0.0
      %1071 = vmatpush1.msra.mxu0 0.0
      %1072 = vmatprep.subr.mxu0 0.0
      %1073 = vmatpush1.msra.mxu0 0.0
      %1074 = vmatprep.subr.mxu0 0.0
      %1075 = vmatpush1.msra.mxu0 0.0
      %1076 = vmatprep.subr.mxu0 0.0
      %1077 = vmatpush1.msra.mxu0 0.0
      %1078 = vmatprep.subr.mxu0 0.0
      %1079 = vmatpush1.msra.mxu0 0.0
      %1080 = vmatprep.subr.mxu0 0.0
      %1081 = vmatpush1.msra.mxu0 0.0
      %1082 = vmatprep.subr.mxu0 0.0
      %1083 = vmatpush1.msra.mxu0 0.0
      %1084 = vmatprep.subr.mxu0 0.0
      %1085 = vmatpush1.msra.mxu0 0.0
      %1086 = vmatprep.subr.mxu0 0.0
      %1087 = vmatpush1.msra.mxu0 0.0
      %1088 = vmatprep.subr.mxu0 0.0
      %1089 = vmatpush1.msra.mxu0 0.0
      %1090 = vmatprep.subr.mxu0 0.0
      %1091 = vmatpush1.msra.mxu0 0.0
      %1092 = vmatprep.subr.mxu0 0.0
      %1093 = vmatpush1.msra.mxu0 0.0
      %1094 = vmatprep.subr.mxu0 0.0
      %1095 = vmatpush1.msra.mxu0 0.0
      %1096 = vmatprep.subr.mxu0 0.0
      %1097 = vmatpush1.msra.mxu0 0.0
      %1098 = vmatprep.subr.mxu0 0.0
      %1099 = vmatpush1.msra.mxu0 0.0
      %1100 = vmatprep.subr.mxu0 0.0
      %1101 = vmatpush1.msra.mxu0 0.0
      %1102 = vmatprep.subr.mxu0 0.0
      %1103 = vmatpush1.msra.mxu0 0.0
      %1104 = vmatprep.subr.mxu0 0.0
      %1105 = vmatpush1.msra.mxu0 0.0
      %1106 = vmatprep.subr.mxu0 0.0
      %1107 = vmatpush1.msra.mxu0 0.0
      %1108 = vmatprep.subr.mxu0 0.0
      %1109 = vmatpush1.msra.mxu0 0.0
      %1110 = vmatprep.subr.mxu0 0.0
      %1111 = vmatpush1.msra.mxu0 0.0
      %1112 = vmatprep.subr.mxu0 0.0
      %1113 = vmatpush1.msra.mxu0 0.0
      %1114 = vmatprep.subr.mxu0 0.0
      %1115 = vmatpush1.msra.mxu0 0.0
      %1116 = vmatprep.subr.mxu0 0.0
      %1117 = vmatpush1.msra.mxu0 0.0
      %1118 = vmatprep.mubr.f32.mxu0 0.0
      %1119 = vmatmul.mubr.f32.gmra.mrb[0].mxu0 %v1004
      %v1120 = vpop.f32.mrb[0].mxu0
      %v1121 = vadd.f32 %v924, %v1120
      %v1122 = vpop.f32.mrb[0].mxu0
      %1123 = vmatprep.mubr.f32.mxu0 0.0
      %1124 = vmatmul.mubr.f32.gmra.mrb[0].mxu0 %v1007
      %v1125 = vpop.f32.mrb[0].mxu0
      %v1126 = vadd.f32 %v929, %v1125
      %v1127 = vpop.f32.mrb[0].mxu0
      %1128 = vmatprep.mubr.f32.mxu0 0.0
      %1129 = vmatmul.mubr.f32.gmra.mrb[0].mxu0 %v1010
      %v1130 = vpop.f32.mrb[0].mxu0
      %v1131 = vadd.f32 %v934, %v1130
      %v1132 = vpop.f32.mrb[0].mxu0
      %1133 = vmatprep.mubr.f32.mxu0 0.0
      %1134 = vmatmul.mubr.f32.gmra.mrb[0].mxu0 %v1013
      %v1135 = vpop.f32.mrb[0].mxu0
      %v1136 = vadd.f32 %v939, %v1135
      %v1137 = vpop.f32.mrb[0].mxu0
      %1138 = vmatprep.mubr.f32.mxu0 0.0
      %1139 = vmatmul.mubr.f32.gmra.mrb[0].mxu0 %v1016
      %v1140 = vpop.f32.mrb[0].mxu0
      %v1141 = vadd.f32 %v944, %v1140
      %v1142 = vpop.f32.mrb[0].mxu0
      %1143 = vmatprep.mubr.f32.mxu0 0.0
      %1144 = vmatmul.mubr.f32.gmra.mrb[0].mxu0 %v1019
      %v1145 = vpop.f32.mrb[0].mxu0
      %v1146 = vadd.f32 %v949, %v1145
      %v1147 = vpop.f32.mrb[0].mxu0
      %1148 = vmatprep.mubr.f32.mxu0 0.0
      %1149 = vmatmul.mubr.f32.gmra.mrb[0].mxu0 %v1022
      %v1150 = vpop.f32.mrb[0].mxu0
      %v1151 = vadd.f32 %v954, %v1150
      %v1152 = vpop.f32.mrb[0].mxu0
      %1153 = vmatprep.mubr.f32.mxu0 0.0
      %1154 = vmatmul.mubr.f32.gmra.mrb[0].mxu0 %v1025
      %v1155 = vpop.f32.mrb[0].mxu0
      %v1156 = vadd.f32 %v959, %v1155
      %v1157 = vpop.f32.mrb[0].mxu0
      %1158 = vmatprep.mubr.f32.mxu0 0.0
      %1159 = vmatmul.mubr.f32.gmra.mrb[0].mxu0 %v1028
      %v1160 = vpop.f32.mrb[0].mxu0
      %v1161 = vadd.f32 %v964, %v1160
      %v1162 = vpop.f32.mrb[0].mxu0
      %1163 = vmatprep.mubr.f32.mxu0 0.0
      %1164 = vmatmul.mubr.f32.gmra.mrb[0].mxu0 %v1031
      %v1165 = vpop.f32.mrb[0].mxu0
      %v1166 = vadd.f32 %v969, %v1165
      %v1167 = vpop.f32.mrb[0].mxu0
      %1168 = vmatprep.mubr.f32.mxu0 0.0
      %1169 = vmatmul.mubr.f32.gmra.mrb[0].mxu0 %v1034
      %v1170 = vpop.f32.mrb[0].mxu0
      %v1171 = vadd.f32 %v974, %v1170
      %v1172 = vpop.f32.mrb[0].mxu0
      %1173 = vmatprep.mubr.f32.mxu0 0.0
      %1174 = vmatmul.mubr.f32.gmra.mrb[0].mxu0 %v1037
      %v1175 = vpop.f32.mrb[0].mxu0
      %v1176 = vadd.f32 %v979, %v1175
      %v1177 = vpop.f32.mrb[0].mxu0
      %1178 = vmatprep.mubr.f32.mxu0 0.0
      %1179 = vmatmul.mubr.f32.gmra.mrb[0].mxu0 %v1040
      %v1180 = vpop.f32.mrb[0].mxu0
      %v1181 = vadd.f32 %v984, %v1180
      %v1182 = vpop.f32.mrb[0].mxu0
      %1183 = vmatprep.mubr.f32.mxu0 0.0
      %1184 = vmatmul.mubr.f32.gmra.mrb[0].mxu0 %v1043
      %v1185 = vpop.f32.mrb[0].mxu0
      %v1186 = vadd.f32 %v989, %v1185
      %v1187 = vpop.f32.mrb[0].mxu0
      %1188 = vmatprep.mubr.f32.mxu0 0.0
      %1189 = vmatmul.mubr.f32.gmra.mrb[0].mxu0 %v1046
      %v1190 = vpop.f32.mrb[0].mxu0
      %v1191 = vadd.f32 %v994, %v1190
      %v1192 = vpop.f32.mrb[0].mxu0
      %1193 = vmatprep.mubr.f32.mxu0 0.0
      %1194 = vmatmul.mubr.f32.gmra.mrb[0].mxu0 %v1049
      %v1195 = vpop.f32.mrb[0].mxu0
      %v1196 = vadd.f32 %v999, %v1195
      %v1197 = vpop.f32.mrb[0].mxu0
      %1198 = vdwg.mxu0
      %v1199 = vld [vmem:[%s6] sm:$0xff]
      %vm1200 = vcmask 64512
      %v1202 = vsel %vm1200, %v785, 0
      %v1205 = vsel %vm1200, %v786, 0
      %v1208 = vsel %vm1200, %v787, 0
      %v1211 = vsel %vm1200, %v788, 0
      %v1214 = vsel %vm1200, %v789, 0
      %v1217 = vsel %vm1200, %v790, 0
      %v1220 = vsel %vm1200, %v791, 0
      %v1223 = vsel %vm1200, %v792, 0
      %v1226 = vsel %vm1200, %v793, 0
      %v1229 = vsel %vm1200, %v794, 0
      %v1232 = vsel %vm1200, %v795, 0
      %v1235 = vsel %vm1200, %v796, 0
      %v1238 = vsel %vm1200, %v797, 0
      %v1241 = vsel %vm1200, %v798, 0
      %v1244 = vsel %vm1200, %v799, 0
      %v1247 = vsel %vm1200, %v800, 0
      %1249 = vmatprep.subr.mxu0 0.0
      %1250 = vmatpush1.msra.mxu0 %v1199
      %1251 = vmatprep.subr.mxu0 0.0
      %1252 = vmatpush1.msra.mxu0 0.0
      %1253 = vmatprep.subr.mxu0 0.0
      %1254 = vmatpush1.msra.mxu0 0.0
      %1255 = vmatprep.subr.mxu0 0.0
      %1256 = vmatpush1.msra.mxu0 0.0
      %1257 = vmatprep.subr.mxu0 0.0
      %1258 = vmatpush1.msra.mxu0 0.0
      %1259 = vmatprep.subr.mxu0 0.0
      %1260 = vmatpush1.msra.mxu0 0.0
      %1261 = vmatprep.subr.mxu0 0.0
      %1262 = vmatpush1.msra.mxu0 0.0
      %1263 = vmatprep.subr.mxu0 0.0
      %1264 = vmatpush1.msra.mxu0 0.0
      %1265 = vmatprep.subr.mxu0 0.0
      %1266 = vmatpush1.msra.mxu0 0.0
      %1267 = vmatprep.subr.mxu0 0.0
      %1268 = vmatpush1.msra.mxu0 0.0
      %1269 = vmatprep.subr.mxu0 0.0
      %1270 = vmatpush1.msra.mxu0 0.0
      %1271 = vmatprep.subr.mxu0 0.0
      %1272 = vmatpush1.msra.mxu0 0.0
      %1273 = vmatprep.subr.mxu0 0.0
      %1274 = vmatpush1.msra.mxu0 0.0
      %1275 = vmatprep.subr.mxu0 0.0
      %1276 = vmatpush1.msra.mxu0 0.0
      %1277 = vmatprep.subr.mxu0 0.0
      %1278 = vmatpush1.msra.mxu0 0.0
      %1279 = vmatprep.subr.mxu0 0.0
      %1280 = vmatpush1.msra.mxu0 0.0
      %1281 = vmatprep.subr.mxu0 0.0
      %1282 = vmatpush1.msra.mxu0 0.0
      %1283 = vmatprep.subr.mxu0 0.0
      %1284 = vmatpush1.msra.mxu0 0.0
      %1285 = vmatprep.subr.mxu0 0.0
      %1286 = vmatpush1.msra.mxu0 0.0
      %1287 = vmatprep.subr.mxu0 0.0
      %1288 = vmatpush1.msra.mxu0 0.0
      %1289 = vmatprep.subr.mxu0 0.0
      %1290 = vmatpush1.msra.mxu0 0.0
      %1291 = vmatprep.subr.mxu0 0.0
      %1292 = vmatpush1.msra.mxu0 0.0
      %1293 = vmatprep.subr.mxu0 0.0
      %1294 = vmatpush1.msra.mxu0 0.0
      %1295 = vmatprep.subr.mxu0 0.0
      %1296 = vmatpush1.msra.mxu0 0.0
      %1297 = vmatprep.subr.mxu0 0.0
      %1298 = vmatpush1.msra.mxu0 0.0
      %1299 = vmatprep.subr.mxu0 0.0
      %1300 = vmatpush1.msra.mxu0 0.0
      %1301 = vmatprep.subr.mxu0 0.0
      %1302 = vmatpush1.msra.mxu0 0.0
      %1303 = vmatprep.subr.mxu0 0.0
      %1304 = vmatpush1.msra.mxu0 0.0
      %1305 = vmatprep.subr.mxu0 0.0
      %1306 = vmatpush1.msra.mxu0 0.0
      %1307 = vmatprep.subr.mxu0 0.0
      %1308 = vmatpush1.msra.mxu0 0.0
      %1309 = vmatprep.subr.mxu0 0.0
      %1310 = vmatpush1.msra.mxu0 0.0
      %1311 = vmatprep.subr.mxu0 0.0
      %1312 = vmatpush1.msra.mxu0 0.0
      %1313 = vmatprep.mubr.f32.mxu0 0.0
      %1314 = vmatmul.mubr.f32.gmra.mrb[0].mxu0 %v1202
      %v1315 = vpop.f32.mrb[0].mxu0
      %v1316 = vadd.f32 0.0, %v1315
      %v1317 = vpop.f32.mrb[0].mxu0
      %1318 = vmatprep.mubr.f32.mxu0 0.0
      %1319 = vmatmul.mubr.f32.gmra.mrb[0].mxu0 %v1205
      %v1320 = vpop.f32.mrb[0].mxu0
      %v1321 = vadd.f32 0.0, %v1320
      %v1322 = vpop.f32.mrb[0].mxu0
      %1323 = vmatprep.mubr.f32.mxu0 0.0
      %1324 = vmatmul.mubr.f32.gmra.mrb[0].mxu0 %v1208
      %v1325 = vpop.f32.mrb[0].mxu0
      %v1326 = vadd.f32 0.0, %v1325
      %v1327 = vpop.f32.mrb[0].mxu0
      %1328 = vmatprep.mubr.f32.mxu0 0.0
      %1329 = vmatmul.mubr.f32.gmra.mrb[0].mxu0 %v1211
      %v1330 = vpop.f32.mrb[0].mxu0
      %v1331 = vadd.f32 0.0, %v1330
      %v1332 = vpop.f32.mrb[0].mxu0
      %1333 = vmatprep.mubr.f32.mxu0 0.0
      %1334 = vmatmul.mubr.f32.gmra.mrb[0].mxu0 %v1214
      %v1335 = vpop.f32.mrb[0].mxu0
      %v1336 = vadd.f32 0.0, %v1335
      %v1337 = vpop.f32.mrb[0].mxu0
      %1338 = vmatprep.mubr.f32.mxu0 0.0
      %1339 = vmatmul.mubr.f32.gmra.mrb[0].mxu0 %v1217
      %v1340 = vpop.f32.mrb[0].mxu0
      %v1341 = vadd.f32 0.0, %v1340
      %v1342 = vpop.f32.mrb[0].mxu0
      %1343 = vmatprep.mubr.f32.mxu0 0.0
      %1344 = vmatmul.mubr.f32.gmra.mrb[0].mxu0 %v1220
      %v1345 = vpop.f32.mrb[0].mxu0
      %v1346 = vadd.f32 0.0, %v1345
      %v1347 = vpop.f32.mrb[0].mxu0
      %1348 = vmatprep.mubr.f32.mxu0 0.0
      %1349 = vmatmul.mubr.f32.gmra.mrb[0].mxu0 %v1223
      %v1350 = vpop.f32.mrb[0].mxu0
      %v1351 = vadd.f32 0.0, %v1350
      %v1352 = vpop.f32.mrb[0].mxu0
      %1353 = vmatprep.mubr.f32.mxu0 0.0
      %1354 = vmatmul.mubr.f32.gmra.mrb[0].mxu0 %v1226
      %v1355 = vpop.f32.mrb[0].mxu0
      %v1356 = vadd.f32 0.0, %v1355
      %v1357 = vpop.f32.mrb[0].mxu0
      %1358 = vmatprep.mubr.f32.mxu0 0.0
      %1359 = vmatmul.mubr.f32.gmra.mrb[0].mxu0 %v1229
      %v1360 = vpop.f32.mrb[0].mxu0
      %v1361 = vadd.f32 0.0, %v1360
      %v1362 = vpop.f32.mrb[0].mxu0
      %1363 = vmatprep.mubr.f32.mxu0 0.0
      %1364 = vmatmul.mubr.f32.gmra.mrb[0].mxu0 %v1232
      %v1365 = vpop.f32.mrb[0].mxu0
      %v1366 = vadd.f32 0.0, %v1365
      %v1367 = vpop.f32.mrb[0].mxu0
      %1368 = vmatprep.mubr.f32.mxu0 0.0
      %1369 = vmatmul.mubr.f32.gmra.mrb[0].mxu0 %v1235
      %v1370 = vpop.f32.mrb[0].mxu0
      %v1371 = vadd.f32 0.0, %v1370
      %v1372 = vpop.f32.mrb[0].mxu0
      %1373 = vmatprep.mubr.f32.mxu0 0.0
      %1374 = vmatmul.mubr.f32.gmra.mrb[0].mxu0 %v1238
      %v1375 = vpop.f32.mrb[0].mxu0
      %v1376 = vadd.f32 0.0, %v1375
      %v1377 = vpop.f32.mrb[0].mxu0
      %1378 = vmatprep.mubr.f32.mxu0 0.0
      %1379 = vmatmul.mubr.f32.gmra.mrb[0].mxu0 %v1241
      %v1380 = vpop.f32.mrb[0].mxu0
      %v1381 = vadd.f32 0.0, %v1380
      %v1382 = vpop.f32.mrb[0].mxu0
      %1383 = vmatprep.mubr.f32.mxu0 0.0
      %1384 = vmatmul.mubr.f32.gmra.mrb[0].mxu0 %v1244
      %v1385 = vpop.f32.mrb[0].mxu0
      %v1386 = vadd.f32 0.0, %v1385
      %v1387 = vpop.f32.mrb[0].mxu0
      %1388 = vmatprep.mubr.f32.mxu0 0.0
      %1389 = vmatmul.mubr.f32.gmra.mrb[0].mxu0 %v1247
      %v1390 = vpop.f32.mrb[0].mxu0
      %v1391 = vadd.f32 0.0, %v1390
      %v1392 = vpop.f32.mrb[0].mxu0
      %1393 = vdwg.mxu0
      %v1394 = vadd.f32 %v1121, %v1316
      %v1395 = vadd.f32 %v1126, %v1321
      %v1396 = vadd.f32 %v1131, %v1326
      %v1397 = vadd.f32 %v1136, %v1331
      %v1398 = vadd.f32 %v1141, %v1336
      %v1399 = vadd.f32 %v1146, %v1341
      %v1400 = vadd.f32 %v1151, %v1346
      %v1401 = vadd.f32 %v1156, %v1351
      %v1402 = vadd.f32 %v1161, %v1356
      %v1403 = vadd.f32 %v1166, %v1361
      %v1404 = vadd.f32 %v1171, %v1366
      %v1405 = vadd.f32 %v1176, %v1371
      %v1406 = vadd.f32 %v1181, %v1376
      %v1407 = vadd.f32 %v1186, %v1381
      %v1408 = vadd.f32 %v1191, %v1386
      %v1409 = vadd.f32 %v1196, %v1391
      %v1410 = vld [vmem:[%s7] sm:$0x1]
      %v1412 = vlaneseq
      %v1413 = vshrl.u32 %v1412, 7
      %v1414 = vsub.s32 0, %v1413
      %v1415 = vrot.slane %v1410, %v1414
      %v1417 = vadd.f32 %v1394, %v1415
      %v1418 = vadd.f32 %v1395, %v1415
      %v1419 = vadd.f32 %v1396, %v1415
      %v1420 = vadd.f32 %v1397, %v1415
      %v1421 = vadd.f32 %v1398, %v1415
      %v1422 = vadd.f32 %v1399, %v1415
      %v1423 = vadd.f32 %v1400, %v1415
      %v1424 = vadd.f32 %v1401, %v1415
      %v1425 = vadd.f32 %v1402, %v1415
      %v1426 = vadd.f32 %v1403, %v1415
      %v1427 = vadd.f32 %v1404, %v1415
      %v1428 = vadd.f32 %v1405, %v1415
      %v1429 = vadd.f32 %v1406, %v1415
      %v1430 = vadd.f32 %v1407, %v1415
      %v1431 = vadd.f32 %v1408, %v1415
      %v1432 = vadd.f32 %v1409, %v1415
      %v1433 = vmax.f32 %v1417, 0.0
      %v1434 = vmax.f32 %v1418, 0.0
      %v1435 = vmax.f32 %v1419, 0.0
      %v1436 = vmax.f32 %v1420, 0.0
      %v1437 = vmax.f32 %v1421, 0.0
      %v1438 = vmax.f32 %v1422, 0.0
      %v1439 = vmax.f32 %v1423, 0.0
      %v1440 = vmax.f32 %v1424, 0.0
      %v1441 = vmax.f32 %v1425, 0.0
      %v1442 = vmax.f32 %v1426, 0.0
      %v1443 = vmax.f32 %v1427, 0.0
      %v1444 = vmax.f32 %v1428, 0.0
      %v1445 = vmax.f32 %v1429, 0.0
      %v1446 = vmax.f32 %v1430, 0.0
      %v1447 = vmax.f32 %v1431, 0.0
      %v1448 = vmax.f32 %v1432, 0.0
      %v1449 = vld [vmem:[%s8] sm:$0xff]
      %v1450 = vld [vmem:[%s8 + $0x8] sm:$0xff]
      %v1451 = vld [vmem:[%s8 + $0x10] sm:$0xff]
      %v1452 = vld [vmem:[%s8 + $0x18] sm:$0xff]
      %v1453 = vld [vmem:[%s8 + $0x20] sm:$0xff]
      %v1454 = vld [vmem:[%s8 + $0x28] sm:$0xff]
      %v1455 = vld [vmem:[%s8 + $0x30] sm:$0xff]
      %v1456 = vld [vmem:[%s8 + $0x38] sm:$0xff]
      %v1457 = vld [vmem:[%s9] sm:$0x1]
      %v1459 = vlaneseq
      %v1460 = vshrl.u32 %v1459, 7
      %v1461 = vsub.s32 0, %v1460
      %v1462 = vrot.slane %v1457, %v1461
      %vm1464 = vcmask 523264
      %v1466 = vsel %vm1464, %v1433, 0
      %v1469 = vsel %vm1464, %v1434, 0
      %v1472 = vsel %vm1464, %v1435, 0
      %v1475 = vsel %vm1464, %v1436, 0
      %v1478 = vsel %vm1464, %v1437, 0
      %v1481 = vsel %vm1464, %v1438, 0
      %v1484 = vsel %vm1464, %v1439, 0
      %v1487 = vsel %vm1464, %v1440, 0
      %v1490 = vsel %vm1464, %v1441, 0
      %v1493 = vsel %vm1464, %v1442, 0
      %v1496 = vsel %vm1464, %v1443, 0
      %v1499 = vsel %vm1464, %v1444, 0
      %v1502 = vsel %vm1464, %v1445, 0
      %v1505 = vsel %vm1464, %v1446, 0
      %v1508 = vsel %vm1464, %v1447, 0
      %v1511 = vsel %vm1464, %v1448, 0
      %1513 = vmatprep.subr.mxu0 0.0
      %1514 = vmatpush1.msra.mxu0 %v1449
      %1515 = vmatprep.subr.mxu0 0.0
      %1516 = vmatpush1.msra.mxu0 %v1450
      %1517 = vmatprep.subr.mxu0 0.0
      %1518 = vmatpush1.msra.mxu0 %v1451
      %1519 = vmatprep.subr.mxu0 0.0
      %1520 = vmatpush1.msra.mxu0 %v1452
      %1521 = vmatprep.subr.mxu0 0.0
      %1522 = vmatpush1.msra.mxu0 %v1453
      %1523 = vmatprep.subr.mxu0 0.0
      %1524 = vmatpush1.msra.mxu0 %v1454
      %1525 = vmatprep.subr.mxu0 0.0
      %1526 = vmatpush1.msra.mxu0 %v1455
      %1527 = vmatprep.subr.mxu0 0.0
      %1528 = vmatpush1.msra.mxu0 %v1456
      %1529 = vmatprep.subr.mxu0 0.0
      %1530 = vmatpush1.msra.mxu0 0.0
      %1531 = vmatprep.subr.mxu0 0.0
      %1532 = vmatpush1.msra.mxu0 0.0
      %1533 = vmatprep.subr.mxu0 0.0
      %1534 = vmatpush1.msra.mxu0 0.0
      %1535 = vmatprep.subr.mxu0 0.0
      %1536 = vmatpush1.msra.mxu0 0.0
      %1537 = vmatprep.subr.mxu0 0.0
      %1538 = vmatpush1.msra.mxu0 0.0
      %1539 = vmatprep.subr.mxu0 0.0
      %1540 = vmatpush1.msra.mxu0 0.0
      %1541 = vmatprep.subr.mxu0 0.0
      %1542 = vmatpush1.msra.mxu0 0.0
      %1543 = vmatprep.subr.mxu0 0.0
      %1544 = vmatpush1.msra.mxu0 0.0
      %1545 = vmatprep.subr.mxu0 0.0
      %1546 = vmatpush1.msra.mxu0 0.0
      %1547 = vmatprep.subr.mxu0 0.0
      %1548 = vmatpush1.msra.mxu0 0.0
      %1549 = vmatprep.subr.mxu0 0.0
      %1550 = vmatpush1.msra.mxu0 0.0
      %1551 = vmatprep.subr.mxu0 0.0
      %1552 = vmatpush1.msra.mxu0 0.0
      %1553 = vmatprep.subr.mxu0 0.0
      %1554 = vmatpush1.msra.mxu0 0.0
      %1555 = vmatprep.subr.mxu0 0.0
      %1556 = vmatpush1.msra.mxu0 0.0
      %1557 = vmatprep.subr.mxu0 0.0
      %1558 = vmatpush1.msra.mxu0 0.0
      %1559 = vmatprep.subr.mxu0 0.0
      %1560 = vmatpush1.msra.mxu0 0.0
      %1561 = vmatprep.subr.mxu0 0.0
      %1562 = vmatpush1.msra.mxu0 0.0
      %1563 = vmatprep.subr.mxu0 0.0
      %1564 = vmatpush1.msra.mxu0 0.0
      %1565 = vmatprep.subr.mxu0 0.0
      %1566 = vmatpush1.msra.mxu0 0.0
      %1567 = vmatprep.subr.mxu0 0.0
      %1568 = vmatpush1.msra.mxu0 0.0
      %1569 = vmatprep.subr.mxu0 0.0
      %1570 = vmatpush1.msra.mxu0 0.0
      %1571 = vmatprep.subr.mxu0 0.0
      %1572 = vmatpush1.msra.mxu0 0.0
      %1573 = vmatprep.subr.mxu0 0.0
      %1574 = vmatpush1.msra.mxu0 0.0
      %1575 = vmatprep.subr.mxu0 0.0
      %1576 = vmatpush1.msra.mxu0 0.0
      %1577 = vmatprep.mubr.f32.mxu0 0.0
      %1578 = vmatmul.mubr.f32.gmra.mrb[0].mxu0 %v1466
      %v1579 = vpop.f32.mrb[0].mxu0
      %v1580 = vadd.f32 %v1462, %v1579
      %v1581 = vpop.f32.mrb[0].mxu0
      %1582 = vmatprep.mubr.f32.mxu0 0.0
      %1583 = vmatmul.mubr.f32.gmra.mrb[0].mxu0 %v1469
      %v1584 = vpop.f32.mrb[0].mxu0
      %v1585 = vadd.f32 %v1462, %v1584
      %v1586 = vpop.f32.mrb[0].mxu0
      %1587 = vmatprep.mubr.f32.mxu0 0.0
      %1588 = vmatmul.mubr.f32.gmra.mrb[0].mxu0 %v1472
      %v1589 = vpop.f32.mrb[0].mxu0
      %v1590 = vadd.f32 %v1462, %v1589
      %v1591 = vpop.f32.mrb[0].mxu0
      %1592 = vmatprep.mubr.f32.mxu0 0.0
      %1593 = vmatmul.mubr.f32.gmra.mrb[0].mxu0 %v1475
      %v1594 = vpop.f32.mrb[0].mxu0
      %v1595 = vadd.f32 %v1462, %v1594
      %v1596 = vpop.f32.mrb[0].mxu0
      %1597 = vmatprep.mubr.f32.mxu0 0.0
      %1598 = vmatmul.mubr.f32.gmra.mrb[0].mxu0 %v1478
      %v1599 = vpop.f32.mrb[0].mxu0
      %v1600 = vadd.f32 %v1462, %v1599
      %v1601 = vpop.f32.mrb[0].mxu0
      %1602 = vmatprep.mubr.f32.mxu0 0.0
      %1603 = vmatmul.mubr.f32.gmra.mrb[0].mxu0 %v1481
      %v1604 = vpop.f32.mrb[0].mxu0
      %v1605 = vadd.f32 %v1462, %v1604
      %v1606 = vpop.f32.mrb[0].mxu0
      %1607 = vmatprep.mubr.f32.mxu0 0.0
      %1608 = vmatmul.mubr.f32.gmra.mrb[0].mxu0 %v1484
      %v1609 = vpop.f32.mrb[0].mxu0
      %v1610 = vadd.f32 %v1462, %v1609
      %v1611 = vpop.f32.mrb[0].mxu0
      %1612 = vmatprep.mubr.f32.mxu0 0.0
      %1613 = vmatmul.mubr.f32.gmra.mrb[0].mxu0 %v1487
      %v1614 = vpop.f32.mrb[0].mxu0
      %v1615 = vadd.f32 %v1462, %v1614
      %v1616 = vpop.f32.mrb[0].mxu0
      %1617 = vmatprep.mubr.f32.mxu0 0.0
      %1618 = vmatmul.mubr.f32.gmra.mrb[0].mxu0 %v1490
      %v1619 = vpop.f32.mrb[0].mxu0
      %v1620 = vadd.f32 %v1462, %v1619
      %v1621 = vpop.f32.mrb[0].mxu0
      %1622 = vmatprep.mubr.f32.mxu0 0.0
      %1623 = vmatmul.mubr.f32.gmra.mrb[0].mxu0 %v1493
      %v1624 = vpop.f32.mrb[0].mxu0
      %v1625 = vadd.f32 %v1462, %v1624
      %v1626 = vpop.f32.mrb[0].mxu0
      %1627 = vmatprep.mubr.f32.mxu0 0.0
      %1628 = vmatmul.mubr.f32.gmra.mrb[0].mxu0 %v1496
      %v1629 = vpop.f32.mrb[0].mxu0
      %v1630 = vadd.f32 %v1462, %v1629
      %v1631 = vpop.f32.mrb[0].mxu0
      %1632 = vmatprep.mubr.f32.mxu0 0.0
      %1633 = vmatmul.mubr.f32.gmra.mrb[0].mxu0 %v1499
      %v1634 = vpop.f32.mrb[0].mxu0
      %v1635 = vadd.f32 %v1462, %v1634
      %v1636 = vpop.f32.mrb[0].mxu0
      %1637 = vmatprep.mubr.f32.mxu0 0.0
      %1638 = vmatmul.mubr.f32.gmra.mrb[0].mxu0 %v1502
      %v1639 = vpop.f32.mrb[0].mxu0
      %v1640 = vadd.f32 %v1462, %v1639
      %v1641 = vpop.f32.mrb[0].mxu0
      %1642 = vmatprep.mubr.f32.mxu0 0.0
      %1643 = vmatmul.mubr.f32.gmra.mrb[0].mxu0 %v1505
      %v1644 = vpop.f32.mrb[0].mxu0
      %v1645 = vadd.f32 %v1462, %v1644
      %v1646 = vpop.f32.mrb[0].mxu0
      %1647 = vmatprep.mubr.f32.mxu0 0.0
      %1648 = vmatmul.mubr.f32.gmra.mrb[0].mxu0 %v1508
      %v1649 = vpop.f32.mrb[0].mxu0
      %v1650 = vadd.f32 %v1462, %v1649
      %v1651 = vpop.f32.mrb[0].mxu0
      %1652 = vmatprep.mubr.f32.mxu0 0.0
      %1653 = vmatmul.mubr.f32.gmra.mrb[0].mxu0 %v1511
      %v1654 = vpop.f32.mrb[0].mxu0
      %v1655 = vadd.f32 %v1462, %v1654
      %v1656 = vpop.f32.mrb[0].mxu0
      %1657 = vdwg.mxu0
      %v1658 = vmax.f32 %v1580, 0.0
      %v1659 = vmax.f32 %v1585, 0.0
      %v1660 = vmax.f32 %v1590, 0.0
      %v1661 = vmax.f32 %v1595, 0.0
      %v1662 = vmax.f32 %v1600, 0.0
      %v1663 = vmax.f32 %v1605, 0.0
      %v1664 = vmax.f32 %v1610, 0.0
      %v1665 = vmax.f32 %v1615, 0.0
      %v1666 = vmax.f32 %v1620, 0.0
      %v1667 = vmax.f32 %v1625, 0.0
      %v1668 = vmax.f32 %v1630, 0.0
      %v1669 = vmax.f32 %v1635, 0.0
      %v1670 = vmax.f32 %v1640, 0.0
      %v1671 = vmax.f32 %v1645, 0.0
      %v1672 = vmax.f32 %v1650, 0.0
      %v1673 = vmax.f32 %v1655, 0.0
      %v1674 = vld [vmem:[%s10] sm:$0xff]
      %v1675 = vld [vmem:[%s10 + $0x8] sm:$0xff]
      %v1676 = vld [vmem:[%s10 + $0x10] sm:$0xff]
      %v1677 = vld [vmem:[%s10 + $0x18] sm:$0xff]
      %v1678 = vld [vmem:[%s11] sm:$0x1]
      %v1680 = vlaneseq
      %v1681 = vshrl.u32 %v1680, 7
      %v1682 = vsub.s32 0, %v1681
      %v1683 = vrot.slane %v1678, %v1682
      %vm1685 = vcmask 261120
      %v1687 = vsel %vm1685, %v1658, 0
      %v1690 = vsel %vm1685, %v1659, 0
      %v1693 = vsel %vm1685, %v1660, 0
      %v1696 = vsel %vm1685, %v1661, 0
      %v1699 = vsel %vm1685, %v1662, 0
      %v1702 = vsel %vm1685, %v1663, 0
      %v1705 = vsel %vm1685, %v1664, 0
      %v1708 = vsel %vm1685, %v1665, 0
      %v1711 = vsel %vm1685, %v1666, 0
      %v1714 = vsel %vm1685, %v1667, 0
      %v1717 = vsel %vm1685, %v1668, 0
      %v1720 = vsel %vm1685, %v1669, 0
      %v1723 = vsel %vm1685, %v1670, 0
      %v1726 = vsel %vm1685, %v1671, 0
      %v1729 = vsel %vm1685, %v1672, 0
      %v1732 = vsel %vm1685, %v1673, 0
      %1734 = vmatprep.subr.mxu0 0.0
      %1735 = vmatpush1.msra.mxu0 %v1674
      %1736 = vmatprep.subr.mxu0 0.0
      %1737 = vmatpush1.msra.mxu0 %v1675
      %1738 = vmatprep.subr.mxu0 0.0
      %1739 = vmatpush1.msra.mxu0 %v1676
      %1740 = vmatprep.subr.mxu0 0.0
      %1741 = vmatpush1.msra.mxu0 %v1677
      %1742 = vmatprep.subr.mxu0 0.0
      %1743 = vmatpush1.msra.mxu0 0.0
      %1744 = vmatprep.subr.mxu0 0.0
      %1745 = vmatpush1.msra.mxu0 0.0
      %1746 = vmatprep.subr.mxu0 0.0
      %1747 = vmatpush1.msra.mxu0 0.0
      %1748 = vmatprep.subr.mxu0 0.0
      %1749 = vmatpush1.msra.mxu0 0.0
      %1750 = vmatprep.subr.mxu0 0.0
      %1751 = vmatpush1.msra.mxu0 0.0
      %1752 = vmatprep.subr.mxu0 0.0
      %1753 = vmatpush1.msra.mxu0 0.0
      %1754 = vmatprep.subr.mxu0 0.0
      %1755 = vmatpush1.msra.mxu0 0.0
      %1756 = vmatprep.subr.mxu0 0.0
      %1757 = vmatpush1.msra.mxu0 0.0
      %1758 = vmatprep.subr.mxu0 0.0
      %1759 = vmatpush1.msra.mxu0 0.0
      %1760 = vmatprep.subr.mxu0 0.0
      %1761 = vmatpush1.msra.mxu0 0.0
      %1762 = vmatprep.subr.mxu0 0.0
      %1763 = vmatpush1.msra.mxu0 0.0
      %1764 = vmatprep.subr.mxu0 0.0
      %1765 = vmatpush1.msra.mxu0 0.0
      %1766 = vmatprep.subr.mxu0 0.0
      %1767 = vmatpush1.msra.mxu0 0.0
      %1768 = vmatprep.subr.mxu0 0.0
      %1769 = vmatpush1.msra.mxu0 0.0
      %1770 = vmatprep.subr.mxu0 0.0
      %1771 = vmatpush1.msra.mxu0 0.0
      %1772 = vmatprep.subr.mxu0 0.0
      %1773 = vmatpush1.msra.mxu0 0.0
      %1774 = vmatprep.subr.mxu0 0.0
      %1775 = vmatpush1.msra.mxu0 0.0
      %1776 = vmatprep.subr.mxu0 0.0
      %1777 = vmatpush1.msra.mxu0 0.0
      %1778 = vmatprep.subr.mxu0 0.0
      %1779 = vmatpush1.msra.mxu0 0.0
      %1780 = vmatprep.subr.mxu0 0.0
      %1781 = vmatpush1.msra.mxu0 0.0
      %1782 = vmatprep.subr.mxu0 0.0
      %1783 = vmatpush1.msra.mxu0 0.0
      %1784 = vmatprep.subr.mxu0 0.0
      %1785 = vmatpush1.msra.mxu0 0.0
      %1786 = vmatprep.subr.mxu0 0.0
      %1787 = vmatpush1.msra.mxu0 0.0
      %1788 = vmatprep.subr.mxu0 0.0
      %1789 = vmatpush1.msra.mxu0 0.0
      %1790 = vmatprep.subr.mxu0 0.0
      %1791 = vmatpush1.msra.mxu0 0.0
      %1792 = vmatprep.subr.mxu0 0.0
      %1793 = vmatpush1.msra.mxu0 0.0
      %1794 = vmatprep.subr.mxu0 0.0
      %1795 = vmatpush1.msra.mxu0 0.0
      %1796 = vmatprep.subr.mxu0 0.0
      %1797 = vmatpush1.msra.mxu0 0.0
      %1798 = vmatprep.mubr.f32.mxu0 0.0
      %1799 = vmatmul.mubr.f32.gmra.mrb[0].mxu0 %v1687
      %v1800 = vpop.f32.mrb[0].mxu0
      %v1801 = vadd.f32 %v1683, %v1800
      %v1802 = vpop.f32.mrb[0].mxu0
      %1803 = vmatprep.mubr.f32.mxu0 0.0
      %1804 = vmatmul.mubr.f32.gmra.mrb[0].mxu0 %v1690
      %v1805 = vpop.f32.mrb[0].mxu0
      %v1806 = vadd.f32 %v1683, %v1805
      %v1807 = vpop.f32.mrb[0].mxu0
      %1808 = vmatprep.mubr.f32.mxu0 0.0
      %1809 = vmatmul.mubr.f32.gmra.mrb[0].mxu0 %v1693
      %v1810 = vpop.f32.mrb[0].mxu0
      %v1811 = vadd.f32 %v1683, %v1810
      %v1812 = vpop.f32.mrb[0].mxu0
      %1813 = vmatprep.mubr.f32.mxu0 0.0
      %1814 = vmatmul.mubr.f32.gmra.mrb[0].mxu0 %v1696
      %v1815 = vpop.f32.mrb[0].mxu0
      %v1816 = vadd.f32 %v1683, %v1815
      %v1817 = vpop.f32.mrb[0].mxu0
      %1818 = vmatprep.mubr.f32.mxu0 0.0
      %1819 = vmatmul.mubr.f32.gmra.mrb[0].mxu0 %v1699
      %v1820 = vpop.f32.mrb[0].mxu0
      %v1821 = vadd.f32 %v1683, %v1820
      %v1822 = vpop.f32.mrb[0].mxu0
      %1823 = vmatprep.mubr.f32.mxu0 0.0
      %1824 = vmatmul.mubr.f32.gmra.mrb[0].mxu0 %v1702
      %v1825 = vpop.f32.mrb[0].mxu0
      %v1826 = vadd.f32 %v1683, %v1825
      %v1827 = vpop.f32.mrb[0].mxu0
      %1828 = vmatprep.mubr.f32.mxu0 0.0
      %1829 = vmatmul.mubr.f32.gmra.mrb[0].mxu0 %v1705
      %v1830 = vpop.f32.mrb[0].mxu0
      %v1831 = vadd.f32 %v1683, %v1830
      %v1832 = vpop.f32.mrb[0].mxu0
      %1833 = vmatprep.mubr.f32.mxu0 0.0
      %1834 = vmatmul.mubr.f32.gmra.mrb[0].mxu0 %v1708
      %v1835 = vpop.f32.mrb[0].mxu0
      %v1836 = vadd.f32 %v1683, %v1835
      %v1837 = vpop.f32.mrb[0].mxu0
      %1838 = vmatprep.mubr.f32.mxu0 0.0
      %1839 = vmatmul.mubr.f32.gmra.mrb[0].mxu0 %v1711
      %v1840 = vpop.f32.mrb[0].mxu0
      %v1841 = vadd.f32 %v1683, %v1840
      %v1842 = vpop.f32.mrb[0].mxu0
      %1843 = vmatprep.mubr.f32.mxu0 0.0
      %1844 = vmatmul.mubr.f32.gmra.mrb[0].mxu0 %v1714
      %v1845 = vpop.f32.mrb[0].mxu0
      %v1846 = vadd.f32 %v1683, %v1845
      %v1847 = vpop.f32.mrb[0].mxu0
      %1848 = vmatprep.mubr.f32.mxu0 0.0
      %1849 = vmatmul.mubr.f32.gmra.mrb[0].mxu0 %v1717
      %v1850 = vpop.f32.mrb[0].mxu0
      %v1851 = vadd.f32 %v1683, %v1850
      %v1852 = vpop.f32.mrb[0].mxu0
      %1853 = vmatprep.mubr.f32.mxu0 0.0
      %1854 = vmatmul.mubr.f32.gmra.mrb[0].mxu0 %v1720
      %v1855 = vpop.f32.mrb[0].mxu0
      %v1856 = vadd.f32 %v1683, %v1855
      %v1857 = vpop.f32.mrb[0].mxu0
      %1858 = vmatprep.mubr.f32.mxu0 0.0
      %1859 = vmatmul.mubr.f32.gmra.mrb[0].mxu0 %v1723
      %v1860 = vpop.f32.mrb[0].mxu0
      %v1861 = vadd.f32 %v1683, %v1860
      %v1862 = vpop.f32.mrb[0].mxu0
      %1863 = vmatprep.mubr.f32.mxu0 0.0
      %1864 = vmatmul.mubr.f32.gmra.mrb[0].mxu0 %v1726
      %v1865 = vpop.f32.mrb[0].mxu0
      %v1866 = vadd.f32 %v1683, %v1865
      %v1867 = vpop.f32.mrb[0].mxu0
      %1868 = vmatprep.mubr.f32.mxu0 0.0
      %1869 = vmatmul.mubr.f32.gmra.mrb[0].mxu0 %v1729
      %v1870 = vpop.f32.mrb[0].mxu0
      %v1871 = vadd.f32 %v1683, %v1870
      %v1872 = vpop.f32.mrb[0].mxu0
      %1873 = vmatprep.mubr.f32.mxu0 0.0
      %1874 = vmatmul.mubr.f32.gmra.mrb[0].mxu0 %v1732
      %v1875 = vpop.f32.mrb[0].mxu0
      %v1876 = vadd.f32 %v1683, %v1875
      %v1877 = vpop.f32.mrb[0].mxu0
      %1878 = vdwg.mxu0
      %v1879 = vld [vmem:[%s12] sm:$0xff]
      %v1880 = vld [vmem:[%s12 + $0x8] sm:$0xff]
      %v1881 = vld [vmem:[%s12 + $0x10] sm:$0xff]
      %v1882 = vld [vmem:[%s12 + $0x18] sm:$0xff]
      %v1883 = vld [vmem:[%s13] sm:$0x1]
      %v1885 = vlaneseq
      %v1886 = vshrl.u32 %v1885, 7
      %v1887 = vsub.s32 0, %v1886
      %v1888 = vrot.slane %v1883, %v1887
      %1890 = vmatprep.subr.mxu0 0.0
      %1891 = vmatpush1.msra.mxu0 %v1879
      %1892 = vmatprep.subr.mxu0 0.0
      %1893 = vmatpush1.msra.mxu0 %v1880
      %1894 = vmatprep.subr.mxu0 0.0
      %1895 = vmatpush1.msra.mxu0 %v1881
      %1896 = vmatprep.subr.mxu0 0.0
      %1897 = vmatpush1.msra.mxu0 %v1882
      %1898 = vmatprep.subr.mxu0 0.0
      %1899 = vmatpush1.msra.mxu0 0.0
      %1900 = vmatprep.subr.mxu0 0.0
      %1901 = vmatpush1.msra.mxu0 0.0
      %1902 = vmatprep.subr.mxu0 0.0
      %1903 = vmatpush1.msra.mxu0 0.0
      %1904 = vmatprep.subr.mxu0 0.0
      %1905 = vmatpush1.msra.mxu0 0.0
      %1906 = vmatprep.subr.mxu0 0.0
      %1907 = vmatpush1.msra.mxu0 0.0
      %1908 = vmatprep.subr.mxu0 0.0
      %1909 = vmatpush1.msra.mxu0 0.0
      %1910 = vmatprep.subr.mxu0 0.0
      %1911 = vmatpush1.msra.mxu0 0.0
      %1912 = vmatprep.subr.mxu0 0.0
      %1913 = vmatpush1.msra.mxu0 0.0
      %1914 = vmatprep.subr.mxu0 0.0
      %1915 = vmatpush1.msra.mxu0 0.0
      %1916 = vmatprep.subr.mxu0 0.0
      %1917 = vmatpush1.msra.mxu0 0.0
      %1918 = vmatprep.subr.mxu0 0.0
      %1919 = vmatpush1.msra.mxu0 0.0
      %1920 = vmatprep.subr.mxu0 0.0
      %1921 = vmatpush1.msra.mxu0 0.0
      %1922 = vmatprep.subr.mxu0 0.0
      %1923 = vmatpush1.msra.mxu0 0.0
      %1924 = vmatprep.subr.mxu0 0.0
      %1925 = vmatpush1.msra.mxu0 0.0
      %1926 = vmatprep.subr.mxu0 0.0
      %1927 = vmatpush1.msra.mxu0 0.0
      %1928 = vmatprep.subr.mxu0 0.0
      %1929 = vmatpush1.msra.mxu0 0.0
      %1930 = vmatprep.subr.mxu0 0.0
      %1931 = vmatpush1.msra.mxu0 0.0
      %1932 = vmatprep.subr.mxu0 0.0
      %1933 = vmatpush1.msra.mxu0 0.0
      %1934 = vmatprep.subr.mxu0 0.0
      %1935 = vmatpush1.msra.mxu0 0.0
      %1936 = vmatprep.subr.mxu0 0.0
      %1937 = vmatpush1.msra.mxu0 0.0
      %1938 = vmatprep.subr.mxu0 0.0
      %1939 = vmatpush1.msra.mxu0 0.0
      %1940 = vmatprep.subr.mxu0 0.0
      %1941 = vmatpush1.msra.mxu0 0.0
      %1942 = vmatprep.subr.mxu0 0.0
      %1943 = vmatpush1.msra.mxu0 0.0
      %1944 = vmatprep.subr.mxu0 0.0
      %1945 = vmatpush1.msra.mxu0 0.0
      %1946 = vmatprep.subr.mxu0 0.0
      %1947 = vmatpush1.msra.mxu0 0.0
      %1948 = vmatprep.subr.mxu0 0.0
      %1949 = vmatpush1.msra.mxu0 0.0
      %1950 = vmatprep.subr.mxu0 0.0
      %1951 = vmatpush1.msra.mxu0 0.0
      %1952 = vmatprep.subr.mxu0 0.0
      %1953 = vmatpush1.msra.mxu0 0.0
      %1954 = vmatprep.mubr.f32.mxu0 0.0
      %1955 = vmatmul.mubr.f32.gmra.mrb[0].mxu0 %v1687
      %v1956 = vpop.f32.mrb[0].mxu0
      %v1957 = vadd.f32 %v1888, %v1956
      %v1958 = vpop.f32.mrb[0].mxu0
      %1959 = vmatprep.mubr.f32.mxu0 0.0
      %1960 = vmatmul.mubr.f32.gmra.mrb[0].mxu0 %v1690
      %v1961 = vpop.f32.mrb[0].mxu0
      %v1962 = vadd.f32 %v1888, %v1961
      %v1963 = vpop.f32.mrb[0].mxu0
      %1964 = vmatprep.mubr.f32.mxu0 0.0
      %1965 = vmatmul.mubr.f32.gmra.mrb[0].mxu0 %v1693
      %v1966 = vpop.f32.mrb[0].mxu0
      %v1967 = vadd.f32 %v1888, %v1966
      %v1968 = vpop.f32.mrb[0].mxu0
      %1969 = vmatprep.mubr.f32.mxu0 0.0
      %1970 = vmatmul.mubr.f32.gmra.mrb[0].mxu0 %v1696
      %v1971 = vpop.f32.mrb[0].mxu0
      %v1972 = vadd.f32 %v1888, %v1971
      %v1973 = vpop.f32.mrb[0].mxu0
      %1974 = vmatprep.mubr.f32.mxu0 0.0
      %1975 = vmatmul.mubr.f32.gmra.mrb[0].mxu0 %v1699
      %v1976 = vpop.f32.mrb[0].mxu0
      %v1977 = vadd.f32 %v1888, %v1976
      %v1978 = vpop.f32.mrb[0].mxu0
      %1979 = vmatprep.mubr.f32.mxu0 0.0
      %1980 = vmatmul.mubr.f32.gmra.mrb[0].mxu0 %v1702
      %v1981 = vpop.f32.mrb[0].mxu0
      %v1982 = vadd.f32 %v1888, %v1981
      %v1983 = vpop.f32.mrb[0].mxu0
      %1984 = vmatprep.mubr.f32.mxu0 0.0
      %1985 = vmatmul.mubr.f32.gmra.mrb[0].mxu0 %v1705
      %v1986 = vpop.f32.mrb[0].mxu0
      %v1987 = vadd.f32 %v1888, %v1986
      %v1988 = vpop.f32.mrb[0].mxu0
      %1989 = vmatprep.mubr.f32.mxu0 0.0
      %1990 = vmatmul.mubr.f32.gmra.mrb[0].mxu0 %v1708
      %v1991 = vpop.f32.mrb[0].mxu0
      %v1992 = vadd.f32 %v1888, %v1991
      %v1993 = vpop.f32.mrb[0].mxu0
      %1994 = vmatprep.mubr.f32.mxu0 0.0
      %1995 = vmatmul.mubr.f32.gmra.mrb[0].mxu0 %v1711
      %v1996 = vpop.f32.mrb[0].mxu0
      %v1997 = vadd.f32 %v1888, %v1996
      %v1998 = vpop.f32.mrb[0].mxu0
      %1999 = vmatprep.mubr.f32.mxu0 0.0
      %2000 = vmatmul.mubr.f32.gmra.mrb[0].mxu0 %v1714
      %v2001 = vpop.f32.mrb[0].mxu0
      %v2002 = vadd.f32 %v1888, %v2001
      %v2003 = vpop.f32.mrb[0].mxu0
      %2004 = vmatprep.mubr.f32.mxu0 0.0
      %2005 = vmatmul.mubr.f32.gmra.mrb[0].mxu0 %v1717
      %v2006 = vpop.f32.mrb[0].mxu0
      %v2007 = vadd.f32 %v1888, %v2006
      %v2008 = vpop.f32.mrb[0].mxu0
      %2009 = vmatprep.mubr.f32.mxu0 0.0
      %2010 = vmatmul.mubr.f32.gmra.mrb[0].mxu0 %v1720
      %v2011 = vpop.f32.mrb[0].mxu0
      %v2012 = vadd.f32 %v1888, %v2011
      %v2013 = vpop.f32.mrb[0].mxu0
      %2014 = vmatprep.mubr.f32.mxu0 0.0
      %2015 = vmatmul.mubr.f32.gmra.mrb[0].mxu0 %v1723
      %v2016 = vpop.f32.mrb[0].mxu0
      %v2017 = vadd.f32 %v1888, %v2016
      %v2018 = vpop.f32.mrb[0].mxu0
      %2019 = vmatprep.mubr.f32.mxu0 0.0
      %2020 = vmatmul.mubr.f32.gmra.mrb[0].mxu0 %v1726
      %v2021 = vpop.f32.mrb[0].mxu0
      %v2022 = vadd.f32 %v1888, %v2021
      %v2023 = vpop.f32.mrb[0].mxu0
      %2024 = vmatprep.mubr.f32.mxu0 0.0
      %2025 = vmatmul.mubr.f32.gmra.mrb[0].mxu0 %v1729
      %v2026 = vpop.f32.mrb[0].mxu0
      %v2027 = vadd.f32 %v1888, %v2026
      %v2028 = vpop.f32.mrb[0].mxu0
      %2029 = vmatprep.mubr.f32.mxu0 0.0
      %2030 = vmatmul.mubr.f32.gmra.mrb[0].mxu0 %v1732
      %v2031 = vpop.f32.mrb[0].mxu0
      %v2032 = vadd.f32 %v1888, %v2031
      %v2033 = vpop.f32.mrb[0].mxu0
      %2034 = vdwg.mxu0
      %v2035 = vmax.f32 %v1957, -4.0
      %v2036 = vmax.f32 %v1962, -4.0
      %v2037 = vmax.f32 %v1967, -4.0
      %v2038 = vmax.f32 %v1972, -4.0
      %v2039 = vmax.f32 %v1977, -4.0
      %v2040 = vmax.f32 %v1982, -4.0
      %v2041 = vmax.f32 %v1987, -4.0
      %v2042 = vmax.f32 %v1992, -4.0
      %v2043 = vmax.f32 %v1997, -4.0
      %v2044 = vmax.f32 %v2002, -4.0
      %v2045 = vmax.f32 %v2007, -4.0
      %v2046 = vmax.f32 %v2012, -4.0
      %v2047 = vmax.f32 %v2017, -4.0
      %v2048 = vmax.f32 %v2022, -4.0
      %v2049 = vmax.f32 %v2027, -4.0
      %v2050 = vmax.f32 %v2032, -4.0
      %v2051 = vmin.f32 %v2035, 15.0
      %v2052 = vmin.f32 %v2036, 15.0
      %v2053 = vmin.f32 %v2037, 15.0
      %v2054 = vmin.f32 %v2038, 15.0
      %v2055 = vmin.f32 %v2039, 15.0
      %v2056 = vmin.f32 %v2040, 15.0
      %v2057 = vmin.f32 %v2041, 15.0
      %v2058 = vmin.f32 %v2042, 15.0
      %v2059 = vmin.f32 %v2043, 15.0
      %v2060 = vmin.f32 %v2044, 15.0
      %v2061 = vmin.f32 %v2045, 15.0
      %v2062 = vmin.f32 %v2046, 15.0
      %v2063 = vmin.f32 %v2047, 15.0
      %v2064 = vmin.f32 %v2048, 15.0
      %v2065 = vmin.f32 %v2049, 15.0
      %v2066 = vmin.f32 %v2050, 15.0
      %v2067 = vmul.f32 %v2051, 1.442695
      %v2068 = vpow.pop %v2067
      %v2069 = vmul.f32 %v2052, 1.442695
      %v2070 = vpow.pop %v2069
      %v2071 = vmul.f32 %v2053, 1.442695
      %v2072 = vpow.pop %v2071
      %v2073 = vmul.f32 %v2054, 1.442695
      %v2074 = vpow.pop %v2073
      %v2075 = vmul.f32 %v2055, 1.442695
      %v2076 = vpow.pop %v2075
      %v2077 = vmul.f32 %v2056, 1.442695
      %v2078 = vpow.pop %v2077
      %v2079 = vmul.f32 %v2057, 1.442695
      %v2080 = vpow.pop %v2079
      %v2081 = vmul.f32 %v2058, 1.442695
      %v2082 = vpow.pop %v2081
      %v2083 = vmul.f32 %v2059, 1.442695
      %v2084 = vpow.pop %v2083
      %v2085 = vmul.f32 %v2060, 1.442695
      %v2086 = vpow.pop %v2085
      %v2087 = vmul.f32 %v2061, 1.442695
      %v2088 = vpow.pop %v2087
      %v2089 = vmul.f32 %v2062, 1.442695
      %v2090 = vpow.pop %v2089
      %v2091 = vmul.f32 %v2063, 1.442695
      %v2092 = vpow.pop %v2091
      %v2093 = vmul.f32 %v2064, 1.442695
      %v2094 = vpow.pop %v2093
      %v2095 = vmul.f32 %v2065, 1.442695
      %v2096 = vpow.pop %v2095
      %v2097 = vmul.f32 %v2066, 1.442695
      %v2098 = vpow.pop %v2097
      %v2099 = vld [vmem:[%s745] sm:$0xff]
      %v2100 = vld [vmem:[%s745 + $0x8] sm:$0xff]
      %v2101 = vld [vmem:[%s745 + $0x10] sm:$0xff]
      %v2102 = vld [vmem:[%s745 + $0x18] sm:$0xff]
      %v2103 = vld [vmem:[%s745 + $0x20] sm:$0xff]
      %v2104 = vld [vmem:[%s745 + $0x28] sm:$0xff]
      %v2105 = vld [vmem:[%s745 + $0x30] sm:$0xff]
      %v2106 = vld [vmem:[%s745 + $0x38] sm:$0xff]
      %v2107 = vld [vmem:[%s745 + $0x40] sm:$0xff]
      %v2108 = vld [vmem:[%s745 + $0x48] sm:$0xff]
      %v2109 = vld [vmem:[%s745 + $0x50] sm:$0xff]
      %v2110 = vld [vmem:[%s745 + $0x58] sm:$0xff]
      %v2111 = vld [vmem:[%s745 + $0x60] sm:$0xff]
      %v2112 = vld [vmem:[%s745 + $0x68] sm:$0xff]
      %v2113 = vld [vmem:[%s745 + $0x70] sm:$0xff]
      %v2114 = vld [vmem:[%s745 + $0x78] sm:$0xff]
      %v2115 = vmul.f32 %v2068, %v2099
      %v2116 = vmul.f32 %v2070, %v2100
      %v2117 = vmul.f32 %v2072, %v2101
      %v2118 = vmul.f32 %v2074, %v2102
      %v2119 = vmul.f32 %v2076, %v2103
      %v2120 = vmul.f32 %v2078, %v2104
      %v2121 = vmul.f32 %v2080, %v2105
      %v2122 = vmul.f32 %v2082, %v2106
      %v2123 = vmul.f32 %v2084, %v2107
      %v2124 = vmul.f32 %v2086, %v2108
      %v2125 = vmul.f32 %v2088, %v2109
      %v2126 = vmul.f32 %v2090, %v2110
      %v2127 = vmul.f32 %v2092, %v2111
      %v2128 = vmul.f32 %v2094, %v2112
      %v2129 = vmul.f32 %v2096, %v2113
      %v2130 = vmul.f32 %v2098, %v2114
      %v2131 = vadd.f32 %v1801, %v2115
      %v2132 = vadd.f32 %v1806, %v2116
      %v2133 = vadd.f32 %v1811, %v2117
      %v2134 = vadd.f32 %v1816, %v2118
      %v2135 = vadd.f32 %v1821, %v2119
      %v2136 = vadd.f32 %v1826, %v2120
      %v2137 = vadd.f32 %v1831, %v2121
      %v2138 = vadd.f32 %v1836, %v2122
      %v2139 = vadd.f32 %v1841, %v2123
      %v2140 = vadd.f32 %v1846, %v2124
      %v2141 = vadd.f32 %v1851, %v2125
      %v2142 = vadd.f32 %v1856, %v2126
      %v2143 = vadd.f32 %v1861, %v2127
      %v2144 = vadd.f32 %v1866, %v2128
      %v2145 = vadd.f32 %v1871, %v2129
      %v2146 = vadd.f32 %v1876, %v2130
      %v2147 = vld [vmem:[%s14] sm:$0xff]
      %v2148 = vld [vmem:[%s14 + $0x8] sm:$0xf]
      %v2149 = vld [vmem:[%s15] sm:$0xf]
      %v2151 = vsel %vm853, %v2149, 0
      %2153 = vmatprep.subr.mxu0 0.0
      %2154 = vmatpush1.msra.mxu0 %v2151
      %2155 = vmatprep.subr.mxu0 0.0
      %2156 = vmatpush1.msra.mxu0 0.0
      %2157 = vmatprep.subr.mxu0 0.0
      %2158 = vmatpush1.msra.mxu0 0.0
      %2159 = vmatprep.subr.mxu0 0.0
      %2160 = vmatpush1.msra.mxu0 0.0
      %2161 = vmatprep.subr.mxu0 0.0
      %2162 = vmatpush1.msra.mxu0 0.0
      %2163 = vmatprep.subr.mxu0 0.0
      %2164 = vmatpush1.msra.mxu0 0.0
      %2165 = vmatprep.subr.mxu0 0.0
      %2166 = vmatpush1.msra.mxu0 0.0
      %2167 = vmatprep.subr.mxu0 0.0
      %2168 = vmatpush1.msra.mxu0 0.0
      %2169 = vmatprep.subr.mxu0 0.0
      %2170 = vmatpush1.msra.mxu0 0.0
      %2171 = vmatprep.subr.mxu0 0.0
      %2172 = vmatpush1.msra.mxu0 0.0
      %2173 = vmatprep.subr.mxu0 0.0
      %2174 = vmatpush1.msra.mxu0 0.0
      %2175 = vmatprep.subr.mxu0 0.0
      %2176 = vmatpush1.msra.mxu0 0.0
      %2177 = vmatprep.subr.mxu0 0.0
      %2178 = vmatpush1.msra.mxu0 0.0
      %2179 = vmatprep.subr.mxu0 0.0
      %2180 = vmatpush1.msra.mxu0 0.0
      %2181 = vmatprep.subr.mxu0 0.0
      %2182 = vmatpush1.msra.mxu0 0.0
      %2183 = vmatprep.subr.mxu0 0.0
      %2184 = vmatpush1.msra.mxu0 0.0
      %2185 = vmatprep.subr.mxu0 0.0
      %2186 = vmatpush1.msra.mxu0 0.0
      %2187 = vmatprep.subr.mxu0 0.0
      %2188 = vmatpush1.msra.mxu0 0.0
      %2189 = vmatprep.subr.mxu0 0.0
      %2190 = vmatpush1.msra.mxu0 0.0
      %2191 = vmatprep.subr.mxu0 0.0
      %2192 = vmatpush1.msra.mxu0 0.0
      %2193 = vmatprep.subr.mxu0 0.0
      %2194 = vmatpush1.msra.mxu0 0.0
      %2195 = vmatprep.subr.mxu0 0.0
      %2196 = vmatpush1.msra.mxu0 0.0
      %2197 = vmatprep.subr.mxu0 0.0
      %2198 = vmatpush1.msra.mxu0 0.0
      %2199 = vmatprep.subr.mxu0 0.0
      %2200 = vmatpush1.msra.mxu0 0.0
      %2201 = vmatprep.subr.mxu0 0.0
      %2202 = vmatpush1.msra.mxu0 0.0
      %2203 = vmatprep.subr.mxu0 0.0
      %2204 = vmatpush1.msra.mxu0 0.0
      %2205 = vmatprep.subr.mxu0 0.0
      %2206 = vmatpush1.msra.mxu0 0.0
      %2207 = vmatprep.subr.mxu0 0.0
      %2208 = vmatpush1.msra.mxu0 0.0
      %2209 = vmatprep.subr.mxu0 0.0
      %2210 = vmatpush1.msra.mxu0 0.0
      %2211 = vmatprep.subr.mxu0 0.0
      %2212 = vmatpush1.msra.mxu0 0.0
      %2213 = vmatprep.subr.mxu0 0.0
      %2214 = vmatpush1.msra.mxu0 0.0
      %2215 = vmatprep.subr.mxu0 0.0
      %2216 = vmatpush1.msra.mxu0 0.0
      %2217 = vmatprep.mubr.f32.mxu0 0.0
      %2218 = vmatmul.mubr.f32.gmra.mrb[0].mxu0 %v806
      %v2219 = vpop.f32.mrb[0].mxu0
      %v2220 = vadd.f32 0.0, %v2219
      %v2221 = vpop.f32.mrb[0].mxu0
      %2222 = vmatprep.mubr.f32.mxu0 0.0
      %2223 = vmatmul.mubr.f32.gmra.mrb[0].mxu0 %v809
      %v2224 = vpop.f32.mrb[0].mxu0
      %v2225 = vadd.f32 0.0, %v2224
      %v2226 = vpop.f32.mrb[0].mxu0
      %2227 = vmatprep.mubr.f32.mxu0 0.0
      %2228 = vmatmul.mubr.f32.gmra.mrb[0].mxu0 %v812
      %v2229 = vpop.f32.mrb[0].mxu0
      %v2230 = vadd.f32 0.0, %v2229
      %v2231 = vpop.f32.mrb[0].mxu0
      %2232 = vmatprep.mubr.f32.mxu0 0.0
      %2233 = vmatmul.mubr.f32.gmra.mrb[0].mxu0 %v815
      %v2234 = vpop.f32.mrb[0].mxu0
      %v2235 = vadd.f32 0.0, %v2234
      %v2236 = vpop.f32.mrb[0].mxu0
      %2237 = vmatprep.mubr.f32.mxu0 0.0
      %2238 = vmatmul.mubr.f32.gmra.mrb[0].mxu0 %v818
      %v2239 = vpop.f32.mrb[0].mxu0
      %v2240 = vadd.f32 0.0, %v2239
      %v2241 = vpop.f32.mrb[0].mxu0
      %2242 = vmatprep.mubr.f32.mxu0 0.0
      %2243 = vmatmul.mubr.f32.gmra.mrb[0].mxu0 %v821
      %v2244 = vpop.f32.mrb[0].mxu0
      %v2245 = vadd.f32 0.0, %v2244
      %v2246 = vpop.f32.mrb[0].mxu0
      %2247 = vmatprep.mubr.f32.mxu0 0.0
      %2248 = vmatmul.mubr.f32.gmra.mrb[0].mxu0 %v824
      %v2249 = vpop.f32.mrb[0].mxu0
      %v2250 = vadd.f32 0.0, %v2249
      %v2251 = vpop.f32.mrb[0].mxu0
      %2252 = vmatprep.mubr.f32.mxu0 0.0
      %2253 = vmatmul.mubr.f32.gmra.mrb[0].mxu0 %v827
      %v2254 = vpop.f32.mrb[0].mxu0
      %v2255 = vadd.f32 0.0, %v2254
      %v2256 = vpop.f32.mrb[0].mxu0
      %2257 = vmatprep.mubr.f32.mxu0 0.0
      %2258 = vmatmul.mubr.f32.gmra.mrb[0].mxu0 %v830
      %v2259 = vpop.f32.mrb[0].mxu0
      %v2260 = vadd.f32 0.0, %v2259
      %v2261 = vpop.f32.mrb[0].mxu0
      %2262 = vmatprep.mubr.f32.mxu0 0.0
      %2263 = vmatmul.mubr.f32.gmra.mrb[0].mxu0 %v833
      %v2264 = vpop.f32.mrb[0].mxu0
      %v2265 = vadd.f32 0.0, %v2264
      %v2266 = vpop.f32.mrb[0].mxu0
      %2267 = vmatprep.mubr.f32.mxu0 0.0
      %2268 = vmatmul.mubr.f32.gmra.mrb[0].mxu0 %v836
      %v2269 = vpop.f32.mrb[0].mxu0
      %v2270 = vadd.f32 0.0, %v2269
      %v2271 = vpop.f32.mrb[0].mxu0
      %2272 = vmatprep.mubr.f32.mxu0 0.0
      %2273 = vmatmul.mubr.f32.gmra.mrb[0].mxu0 %v839
      %v2274 = vpop.f32.mrb[0].mxu0
      %v2275 = vadd.f32 0.0, %v2274
      %v2276 = vpop.f32.mrb[0].mxu0
      %2277 = vmatprep.mubr.f32.mxu0 0.0
      %2278 = vmatmul.mubr.f32.gmra.mrb[0].mxu0 %v842
      %v2279 = vpop.f32.mrb[0].mxu0
      %v2280 = vadd.f32 0.0, %v2279
      %v2281 = vpop.f32.mrb[0].mxu0
      %2282 = vmatprep.mubr.f32.mxu0 0.0
      %2283 = vmatmul.mubr.f32.gmra.mrb[0].mxu0 %v845
      %v2284 = vpop.f32.mrb[0].mxu0
      %v2285 = vadd.f32 0.0, %v2284
      %v2286 = vpop.f32.mrb[0].mxu0
      %2287 = vmatprep.mubr.f32.mxu0 0.0
      %2288 = vmatmul.mubr.f32.gmra.mrb[0].mxu0 %v848
      %v2289 = vpop.f32.mrb[0].mxu0
      %v2290 = vadd.f32 0.0, %v2289
      %v2291 = vpop.f32.mrb[0].mxu0
      %2292 = vmatprep.mubr.f32.mxu0 0.0
      %2293 = vmatmul.mubr.f32.gmra.mrb[0].mxu0 %v851
      %v2294 = vpop.f32.mrb[0].mxu0
      %v2295 = vadd.f32 0.0, %v2294
      %v2296 = vpop.f32.mrb[0].mxu0
      %2297 = vdwg.mxu0
      %v2299 = vsel %vm853, %v2148, 0
      %2301 = vmatprep.subr.mxu0 0.0
      %2302 = vmatpush1.msra.mxu0 %v2147
      %2303 = vmatprep.subr.mxu0 0.0
      %2304 = vmatpush1.msra.mxu0 %v2299
      %2305 = vmatprep.subr.mxu0 0.0
      %2306 = vmatpush1.msra.mxu0 0.0
      %2307 = vmatprep.subr.mxu0 0.0
      %2308 = vmatpush1.msra.mxu0 0.0
      %2309 = vmatprep.subr.mxu0 0.0
      %2310 = vmatpush1.msra.mxu0 0.0
      %2311 = vmatprep.subr.mxu0 0.0
      %2312 = vmatpush1.msra.mxu0 0.0
      %2313 = vmatprep.subr.mxu0 0.0
      %2314 = vmatpush1.msra.mxu0 0.0
      %2315 = vmatprep.subr.mxu0 0.0
      %2316 = vmatpush1.msra.mxu0 0.0
      %2317 = vmatprep.subr.mxu0 0.0
      %2318 = vmatpush1.msra.mxu0 0.0
      %2319 = vmatprep.subr.mxu0 0.0
      %2320 = vmatpush1.msra.mxu0 0.0
      %2321 = vmatprep.subr.mxu0 0.0
      %2322 = vmatpush1.msra.mxu0 0.0
      %2323 = vmatprep.subr.mxu0 0.0
      %2324 = vmatpush1.msra.mxu0 0.0
      %2325 = vmatprep.subr.mxu0 0.0
      %2326 = vmatpush1.msra.mxu0 0.0
      %2327 = vmatprep.subr.mxu0 0.0
      %2328 = vmatpush1.msra.mxu0 0.0
      %2329 = vmatprep.subr.mxu0 0.0
      %2330 = vmatpush1.msra.mxu0 0.0
      %2331 = vmatprep.subr.mxu0 0.0
      %2332 = vmatpush1.msra.mxu0 0.0
      %2333 = vmatprep.subr.mxu0 0.0
      %2334 = vmatpush1.msra.mxu0 0.0
      %2335 = vmatprep.subr.mxu0 0.0
      %2336 = vmatpush1.msra.mxu0 0.0
      %2337 = vmatprep.subr.mxu0 0.0
      %2338 = vmatpush1.msra.mxu0 0.0
      %2339 = vmatprep.subr.mxu0 0.0
      %2340 = vmatpush1.msra.mxu0 0.0
      %2341 = vmatprep.subr.mxu0 0.0
      %2342 = vmatpush1.msra.mxu0 0.0
      %2343 = vmatprep.subr.mxu0 0.0
      %2344 = vmatpush1.msra.mxu0 0.0
      %2345 = vmatprep.subr.mxu0 0.0
      %2346 = vmatpush1.msra.mxu0 0.0
      %2347 = vmatprep.subr.mxu0 0.0
      %2348 = vmatpush1.msra.mxu0 0.0
      %2349 = vmatprep.subr.mxu0 0.0
      %2350 = vmatpush1.msra.mxu0 0.0
      %2351 = vmatprep.subr.mxu0 0.0
      %2352 = vmatpush1.msra.mxu0 0.0
      %2353 = vmatprep.subr.mxu0 0.0
      %2354 = vmatpush1.msra.mxu0 0.0
      %2355 = vmatprep.subr.mxu0 0.0
      %2356 = vmatpush1.msra.mxu0 0.0
      %2357 = vmatprep.subr.mxu0 0.0
      %2358 = vmatpush1.msra.mxu0 0.0
      %2359 = vmatprep.subr.mxu0 0.0
      %2360 = vmatpush1.msra.mxu0 0.0
      %2361 = vmatprep.subr.mxu0 0.0
      %2362 = vmatpush1.msra.mxu0 0.0
      %2363 = vmatprep.subr.mxu0 0.0
      %2364 = vmatpush1.msra.mxu0 0.0
      %2365 = vmatprep.mubr.f32.mxu0 0.0
      %2366 = vmatmul.mubr.f32.gmra.mrb[0].mxu0 %v1004
      %v2367 = vpop.f32.mrb[0].mxu0
      %v2368 = vadd.f32 %v2220, %v2367
      %v2369 = vpop.f32.mrb[0].mxu0
      %2370 = vmatprep.mubr.f32.mxu0 0.0
      %2371 = vmatmul.mubr.f32.gmra.mrb[0].mxu0 %v1007
      %v2372 = vpop.f32.mrb[0].mxu0
      %v2373 = vadd.f32 %v2225, %v2372
      %v2374 = vpop.f32.mrb[0].mxu0
      %2375 = vmatprep.mubr.f32.mxu0 0.0
      %2376 = vmatmul.mubr.f32.gmra.mrb[0].mxu0 %v1010
      %v2377 = vpop.f32.mrb[0].mxu0
      %v2378 = vadd.f32 %v2230, %v2377
      %v2379 = vpop.f32.mrb[0].mxu0
      %2380 = vmatprep.mubr.f32.mxu0 0.0
      %2381 = vmatmul.mubr.f32.gmra.mrb[0].mxu0 %v1013
      %v2382 = vpop.f32.mrb[0].mxu0
      %v2383 = vadd.f32 %v2235, %v2382
      %v2384 = vpop.f32.mrb[0].mxu0
      %2385 = vmatprep.mubr.f32.mxu0 0.0
      %2386 = vmatmul.mubr.f32.gmra.mrb[0].mxu0 %v1016
      %v2387 = vpop.f32.mrb[0].mxu0
      %v2388 = vadd.f32 %v2240, %v2387
      %v2389 = vpop.f32.mrb[0].mxu0
      %2390 = vmatprep.mubr.f32.mxu0 0.0
      %2391 = vmatmul.mubr.f32.gmra.mrb[0].mxu0 %v1019
      %v2392 = vpop.f32.mrb[0].mxu0
      %v2393 = vadd.f32 %v2245, %v2392
      %v2394 = vpop.f32.mrb[0].mxu0
      %2395 = vmatprep.mubr.f32.mxu0 0.0
      %2396 = vmatmul.mubr.f32.gmra.mrb[0].mxu0 %v1022
      %v2397 = vpop.f32.mrb[0].mxu0
      %v2398 = vadd.f32 %v2250, %v2397
      %v2399 = vpop.f32.mrb[0].mxu0
      %2400 = vmatprep.mubr.f32.mxu0 0.0
      %2401 = vmatmul.mubr.f32.gmra.mrb[0].mxu0 %v1025
      %v2402 = vpop.f32.mrb[0].mxu0
      %v2403 = vadd.f32 %v2255, %v2402
      %v2404 = vpop.f32.mrb[0].mxu0
      %2405 = vmatprep.mubr.f32.mxu0 0.0
      %2406 = vmatmul.mubr.f32.gmra.mrb[0].mxu0 %v1028
      %v2407 = vpop.f32.mrb[0].mxu0
      %v2408 = vadd.f32 %v2260, %v2407
      %v2409 = vpop.f32.mrb[0].mxu0
      %2410 = vmatprep.mubr.f32.mxu0 0.0
      %2411 = vmatmul.mubr.f32.gmra.mrb[0].mxu0 %v1031
      %v2412 = vpop.f32.mrb[0].mxu0
      %v2413 = vadd.f32 %v2265, %v2412
      %v2414 = vpop.f32.mrb[0].mxu0
      %2415 = vmatprep.mubr.f32.mxu0 0.0
      %2416 = vmatmul.mubr.f32.gmra.mrb[0].mxu0 %v1034
      %v2417 = vpop.f32.mrb[0].mxu0
      %v2418 = vadd.f32 %v2270, %v2417
      %v2419 = vpop.f32.mrb[0].mxu0
      %2420 = vmatprep.mubr.f32.mxu0 0.0
      %2421 = vmatmul.mubr.f32.gmra.mrb[0].mxu0 %v1037
      %v2422 = vpop.f32.mrb[0].mxu0
      %v2423 = vadd.f32 %v2275, %v2422
      %v2424 = vpop.f32.mrb[0].mxu0
      %2425 = vmatprep.mubr.f32.mxu0 0.0
      %2426 = vmatmul.mubr.f32.gmra.mrb[0].mxu0 %v1040
      %v2427 = vpop.f32.mrb[0].mxu0
      %v2428 = vadd.f32 %v2280, %v2427
      %v2429 = vpop.f32.mrb[0].mxu0
      %2430 = vmatprep.mubr.f32.mxu0 0.0
      %2431 = vmatmul.mubr.f32.gmra.mrb[0].mxu0 %v1043
      %v2432 = vpop.f32.mrb[0].mxu0
      %v2433 = vadd.f32 %v2285, %v2432
      %v2434 = vpop.f32.mrb[0].mxu0
      %2435 = vmatprep.mubr.f32.mxu0 0.0
      %2436 = vmatmul.mubr.f32.gmra.mrb[0].mxu0 %v1046
      %v2437 = vpop.f32.mrb[0].mxu0
      %v2438 = vadd.f32 %v2290, %v2437
      %v2439 = vpop.f32.mrb[0].mxu0
      %2440 = vmatprep.mubr.f32.mxu0 0.0
      %2441 = vmatmul.mubr.f32.gmra.mrb[0].mxu0 %v1049
      %v2442 = vpop.f32.mrb[0].mxu0
      %v2443 = vadd.f32 %v2295, %v2442
      %v2444 = vpop.f32.mrb[0].mxu0
      %2445 = vdwg.mxu0
      %v2446 = vld [vmem:[%s16] sm:$0xff]
      %v2448 = vsel %vm1200, %v2131, 0
      %v2451 = vsel %vm1200, %v2132, 0
      %v2454 = vsel %vm1200, %v2133, 0
      %v2457 = vsel %vm1200, %v2134, 0
      %v2460 = vsel %vm1200, %v2135, 0
      %v2463 = vsel %vm1200, %v2136, 0
      %v2466 = vsel %vm1200, %v2137, 0
      %v2469 = vsel %vm1200, %v2138, 0
      %v2472 = vsel %vm1200, %v2139, 0
      %v2475 = vsel %vm1200, %v2140, 0
      %v2478 = vsel %vm1200, %v2141, 0
      %v2481 = vsel %vm1200, %v2142, 0
      %v2484 = vsel %vm1200, %v2143, 0
      %v2487 = vsel %vm1200, %v2144, 0
      %v2490 = vsel %vm1200, %v2145, 0
      %v2493 = vsel %vm1200, %v2146, 0
      %2495 = vmatprep.subr.mxu0 0.0
      %2496 = vmatpush1.msra.mxu0 %v2446
      %2497 = vmatprep.subr.mxu0 0.0
      %2498 = vmatpush1.msra.mxu0 0.0
      %2499 = vmatprep.subr.mxu0 0.0
      %2500 = vmatpush1.msra.mxu0 0.0
      %2501 = vmatprep.subr.mxu0 0.0
      %2502 = vmatpush1.msra.mxu0 0.0
      %2503 = vmatprep.subr.mxu0 0.0
      %2504 = vmatpush1.msra.mxu0 0.0
      %2505 = vmatprep.subr.mxu0 0.0
      %2506 = vmatpush1.msra.mxu0 0.0
      %2507 = vmatprep.subr.mxu0 0.0
      %2508 = vmatpush1.msra.mxu0 0.0
      %2509 = vmatprep.subr.mxu0 0.0
      %2510 = vmatpush1.msra.mxu0 0.0
      %2511 = vmatprep.subr.mxu0 0.0
      %2512 = vmatpush1.msra.mxu0 0.0
      %2513 = vmatprep.subr.mxu0 0.0
      %2514 = vmatpush1.msra.mxu0 0.0
      %2515 = vmatprep.subr.mxu0 0.0
      %2516 = vmatpush1.msra.mxu0 0.0
      %2517 = vmatprep.subr.mxu0 0.0
      %2518 = vmatpush1.msra.mxu0 0.0
      %2519 = vmatprep.subr.mxu0 0.0
      %2520 = vmatpush1.msra.mxu0 0.0
      %2521 = vmatprep.subr.mxu0 0.0
      %2522 = vmatpush1.msra.mxu0 0.0
      %2523 = vmatprep.subr.mxu0 0.0
      %2524 = vmatpush1.msra.mxu0 0.0
      %2525 = vmatprep.subr.mxu0 0.0
      %2526 = vmatpush1.msra.mxu0 0.0
      %2527 = vmatprep.subr.mxu0 0.0
      %2528 = vmatpush1.msra.mxu0 0.0
      %2529 = vmatprep.subr.mxu0 0.0
      %2530 = vmatpush1.msra.mxu0 0.0
      %2531 = vmatprep.subr.mxu0 0.0
      %2532 = vmatpush1.msra.mxu0 0.0
      %2533 = vmatprep.subr.mxu0 0.0
      %2534 = vmatpush1.msra.mxu0 0.0
      %2535 = vmatprep.subr.mxu0 0.0
      %2536 = vmatpush1.msra.mxu0 0.0
      %2537 = vmatprep.subr.mxu0 0.0
      %2538 = vmatpush1.msra.mxu0 0.0
      %2539 = vmatprep.subr.mxu0 0.0
      %2540 = vmatpush1.msra.mxu0 0.0
      %2541 = vmatprep.subr.mxu0 0.0
      %2542 = vmatpush1.msra.mxu0 0.0
      %2543 = vmatprep.subr.mxu0 0.0
      %2544 = vmatpush1.msra.mxu0 0.0
      %2545 = vmatprep.subr.mxu0 0.0
      %2546 = vmatpush1.msra.mxu0 0.0
      %2547 = vmatprep.subr.mxu0 0.0
      %2548 = vmatpush1.msra.mxu0 0.0
      %2549 = vmatprep.subr.mxu0 0.0
      %2550 = vmatpush1.msra.mxu0 0.0
      %2551 = vmatprep.subr.mxu0 0.0
      %2552 = vmatpush1.msra.mxu0 0.0
      %2553 = vmatprep.subr.mxu0 0.0
      %2554 = vmatpush1.msra.mxu0 0.0
      %2555 = vmatprep.subr.mxu0 0.0
      %2556 = vmatpush1.msra.mxu0 0.0
      %2557 = vmatprep.subr.mxu0 0.0
      %2558 = vmatpush1.msra.mxu0 0.0
      %2559 = vmatprep.mubr.f32.mxu0 0.0
      %2560 = vmatmul.mubr.f32.gmra.mrb[0].mxu0 %v2448
      %v2561 = vpop.f32.mrb[0].mxu0
      %v2562 = vadd.f32 0.0, %v2561
      %v2563 = vpop.f32.mrb[0].mxu0
      %2564 = vmatprep.mubr.f32.mxu0 0.0
      %2565 = vmatmul.mubr.f32.gmra.mrb[0].mxu0 %v2451
      %v2566 = vpop.f32.mrb[0].mxu0
      %v2567 = vadd.f32 0.0, %v2566
      %v2568 = vpop.f32.mrb[0].mxu0
      %2569 = vmatprep.mubr.f32.mxu0 0.0
      %2570 = vmatmul.mubr.f32.gmra.mrb[0].mxu0 %v2454
      %v2571 = vpop.f32.mrb[0].mxu0
      %v2572 = vadd.f32 0.0, %v2571
      %v2573 = vpop.f32.mrb[0].mxu0
      %2574 = vmatprep.mubr.f32.mxu0 0.0
      %2575 = vmatmul.mubr.f32.gmra.mrb[0].mxu0 %v2457
      %v2576 = vpop.f32.mrb[0].mxu0
      %v2577 = vadd.f32 0.0, %v2576
      %v2578 = vpop.f32.mrb[0].mxu0
      %2579 = vmatprep.mubr.f32.mxu0 0.0
      %2580 = vmatmul.mubr.f32.gmra.mrb[0].mxu0 %v2460
      %v2581 = vpop.f32.mrb[0].mxu0
      %v2582 = vadd.f32 0.0, %v2581
      %v2583 = vpop.f32.mrb[0].mxu0
      %2584 = vmatprep.mubr.f32.mxu0 0.0
      %2585 = vmatmul.mubr.f32.gmra.mrb[0].mxu0 %v2463
      %v2586 = vpop.f32.mrb[0].mxu0
      %v2587 = vadd.f32 0.0, %v2586
      %v2588 = vpop.f32.mrb[0].mxu0
      %2589 = vmatprep.mubr.f32.mxu0 0.0
      %2590 = vmatmul.mubr.f32.gmra.mrb[0].mxu0 %v2466
      %v2591 = vpop.f32.mrb[0].mxu0
      %v2592 = vadd.f32 0.0, %v2591
      %v2593 = vpop.f32.mrb[0].mxu0
      %2594 = vmatprep.mubr.f32.mxu0 0.0
      %2595 = vmatmul.mubr.f32.gmra.mrb[0].mxu0 %v2469
      %v2596 = vpop.f32.mrb[0].mxu0
      %v2597 = vadd.f32 0.0, %v2596
      %v2598 = vpop.f32.mrb[0].mxu0
      %2599 = vmatprep.mubr.f32.mxu0 0.0
      %2600 = vmatmul.mubr.f32.gmra.mrb[0].mxu0 %v2472
      %v2601 = vpop.f32.mrb[0].mxu0
      %v2602 = vadd.f32 0.0, %v2601
      %v2603 = vpop.f32.mrb[0].mxu0
      %2604 = vmatprep.mubr.f32.mxu0 0.0
      %2605 = vmatmul.mubr.f32.gmra.mrb[0].mxu0 %v2475
      %v2606 = vpop.f32.mrb[0].mxu0
      %v2607 = vadd.f32 0.0, %v2606
      %v2608 = vpop.f32.mrb[0].mxu0
      %2609 = vmatprep.mubr.f32.mxu0 0.0
      %2610 = vmatmul.mubr.f32.gmra.mrb[0].mxu0 %v2478
      %v2611 = vpop.f32.mrb[0].mxu0
      %v2612 = vadd.f32 0.0, %v2611
      %v2613 = vpop.f32.mrb[0].mxu0
      %2614 = vmatprep.mubr.f32.mxu0 0.0
      %2615 = vmatmul.mubr.f32.gmra.mrb[0].mxu0 %v2481
      %v2616 = vpop.f32.mrb[0].mxu0
      %v2617 = vadd.f32 0.0, %v2616
      %v2618 = vpop.f32.mrb[0].mxu0
      %2619 = vmatprep.mubr.f32.mxu0 0.0
      %2620 = vmatmul.mubr.f32.gmra.mrb[0].mxu0 %v2484
      %v2621 = vpop.f32.mrb[0].mxu0
      %v2622 = vadd.f32 0.0, %v2621
      %v2623 = vpop.f32.mrb[0].mxu0
      %2624 = vmatprep.mubr.f32.mxu0 0.0
      %2625 = vmatmul.mubr.f32.gmra.mrb[0].mxu0 %v2487
      %v2626 = vpop.f32.mrb[0].mxu0
      %v2627 = vadd.f32 0.0, %v2626
      %v2628 = vpop.f32.mrb[0].mxu0
      %2629 = vmatprep.mubr.f32.mxu0 0.0
      %2630 = vmatmul.mubr.f32.gmra.mrb[0].mxu0 %v2490
      %v2631 = vpop.f32.mrb[0].mxu0
      %v2632 = vadd.f32 0.0, %v2631
      %v2633 = vpop.f32.mrb[0].mxu0
      %2634 = vmatprep.mubr.f32.mxu0 0.0
      %2635 = vmatmul.mubr.f32.gmra.mrb[0].mxu0 %v2493
      %v2636 = vpop.f32.mrb[0].mxu0
      %v2637 = vadd.f32 0.0, %v2636
      %v2638 = vpop.f32.mrb[0].mxu0
      %2639 = vdwg.mxu0
      %v2640 = vadd.f32 %v2368, %v2562
      %v2641 = vadd.f32 %v2373, %v2567
      %v2642 = vadd.f32 %v2378, %v2572
      %v2643 = vadd.f32 %v2383, %v2577
      %v2644 = vadd.f32 %v2388, %v2582
      %v2645 = vadd.f32 %v2393, %v2587
      %v2646 = vadd.f32 %v2398, %v2592
      %v2647 = vadd.f32 %v2403, %v2597
      %v2648 = vadd.f32 %v2408, %v2602
      %v2649 = vadd.f32 %v2413, %v2607
      %v2650 = vadd.f32 %v2418, %v2612
      %v2651 = vadd.f32 %v2423, %v2617
      %v2652 = vadd.f32 %v2428, %v2622
      %v2653 = vadd.f32 %v2433, %v2627
      %v2654 = vadd.f32 %v2438, %v2632
      %v2655 = vadd.f32 %v2443, %v2637
      %v2656 = vld [vmem:[%s17] sm:$0x1]
      %v2658 = vlaneseq
      %v2659 = vshrl.u32 %v2658, 7
      %v2660 = vsub.s32 0, %v2659
      %v2661 = vrot.slane %v2656, %v2660
      %v2663 = vadd.f32 %v2640, %v2661
      %v2664 = vadd.f32 %v2641, %v2661
      %v2665 = vadd.f32 %v2642, %v2661
      %v2666 = vadd.f32 %v2643, %v2661
      %v2667 = vadd.f32 %v2644, %v2661
      %v2668 = vadd.f32 %v2645, %v2661
      %v2669 = vadd.f32 %v2646, %v2661
      %v2670 = vadd.f32 %v2647, %v2661
      %v2671 = vadd.f32 %v2648, %v2661
      %v2672 = vadd.f32 %v2649, %v2661
      %v2673 = vadd.f32 %v2650, %v2661
      %v2674 = vadd.f32 %v2651, %v2661
      %v2675 = vadd.f32 %v2652, %v2661
      %v2676 = vadd.f32 %v2653, %v2661
      %v2677 = vadd.f32 %v2654, %v2661
      %v2678 = vadd.f32 %v2655, %v2661
      %v2679 = vmax.f32 %v2663, 0.0
      %v2680 = vmax.f32 %v2664, 0.0
      %v2681 = vmax.f32 %v2665, 0.0
      %v2682 = vmax.f32 %v2666, 0.0
      %v2683 = vmax.f32 %v2667, 0.0
      %v2684 = vmax.f32 %v2668, 0.0
      %v2685 = vmax.f32 %v2669, 0.0
      %v2686 = vmax.f32 %v2670, 0.0
      %v2687 = vmax.f32 %v2671, 0.0
      %v2688 = vmax.f32 %v2672, 0.0
      %v2689 = vmax.f32 %v2673, 0.0
      %v2690 = vmax.f32 %v2674, 0.0
      %v2691 = vmax.f32 %v2675, 0.0
      %v2692 = vmax.f32 %v2676, 0.0
      %v2693 = vmax.f32 %v2677, 0.0
      %v2694 = vmax.f32 %v2678, 0.0
      %v2695 = vld [vmem:[%s18] sm:$0xff]
      %v2696 = vld [vmem:[%s18 + $0x8] sm:$0xff]
      %v2697 = vld [vmem:[%s18 + $0x10] sm:$0xff]
      %v2698 = vld [vmem:[%s18 + $0x18] sm:$0xff]
      %v2699 = vld [vmem:[%s19] sm:$0x1]
      %v2701 = vlaneseq
      %v2702 = vshrl.u32 %v2701, 7
      %v2703 = vsub.s32 0, %v2702
      %v2704 = vrot.slane %v2699, %v2703
      %v2707 = vsel %vm1685, %v2679, 0
      %v2710 = vsel %vm1685, %v2680, 0
      %v2713 = vsel %vm1685, %v2681, 0
      %v2716 = vsel %vm1685, %v2682, 0
      %v2719 = vsel %vm1685, %v2683, 0
      %v2722 = vsel %vm1685, %v2684, 0
      %v2725 = vsel %vm1685, %v2685, 0
      %v2728 = vsel %vm1685, %v2686, 0
      %v2731 = vsel %vm1685, %v2687, 0
      %v2734 = vsel %vm1685, %v2688, 0
      %v2737 = vsel %vm1685, %v2689, 0
      %v2740 = vsel %vm1685, %v2690, 0
      %v2743 = vsel %vm1685, %v2691, 0
      %v2746 = vsel %vm1685, %v2692, 0
      %v2749 = vsel %vm1685, %v2693, 0
      %v2752 = vsel %vm1685, %v2694, 0
      %2754 = vmatprep.subr.mxu0 0.0
      %2755 = vmatpush1.msra.mxu0 %v2695
      %2756 = vmatprep.subr.mxu0 0.0
      %2757 = vmatpush1.msra.mxu0 %v2696
      %2758 = vmatprep.subr.mxu0 0.0
      %2759 = vmatpush1.msra.mxu0 %v2697
      %2760 = vmatprep.subr.mxu0 0.0
      %2761 = vmatpush1.msra.mxu0 %v2698
      %2762 = vmatprep.subr.mxu0 0.0
      %2763 = vmatpush1.msra.mxu0 0.0
      %2764 = vmatprep.subr.mxu0 0.0
      %2765 = vmatpush1.msra.mxu0 0.0
      %2766 = vmatprep.subr.mxu0 0.0
      %2767 = vmatpush1.msra.mxu0 0.0
      %2768 = vmatprep.subr.mxu0 0.0
      %2769 = vmatpush1.msra.mxu0 0.0
      %2770 = vmatprep.subr.mxu0 0.0
      %2771 = vmatpush1.msra.mxu0 0.0
      %2772 = vmatprep.subr.mxu0 0.0
      %2773 = vmatpush1.msra.mxu0 0.0
      %2774 = vmatprep.subr.mxu0 0.0
      %2775 = vmatpush1.msra.mxu0 0.0
      %2776 = vmatprep.subr.mxu0 0.0
      %2777 = vmatpush1.msra.mxu0 0.0
      %2778 = vmatprep.subr.mxu0 0.0
      %2779 = vmatpush1.msra.mxu0 0.0
      %2780 = vmatprep.subr.mxu0 0.0
      %2781 = vmatpush1.msra.mxu0 0.0
      %2782 = vmatprep.subr.mxu0 0.0
      %2783 = vmatpush1.msra.mxu0 0.0
      %2784 = vmatprep.subr.mxu0 0.0
      %2785 = vmatpush1.msra.mxu0 0.0
      %2786 = vmatprep.subr.mxu0 0.0
      %2787 = vmatpush1.msra.mxu0 0.0
      %2788 = vmatprep.subr.mxu0 0.0
      %2789 = vmatpush1.msra.mxu0 0.0
      %2790 = vmatprep.subr.mxu0 0.0
      %2791 = vmatpush1.msra.mxu0 0.0
      %2792 = vmatprep.subr.mxu0 0.0
      %2793 = vmatpush1.msra.mxu0 0.0
      %2794 = vmatprep.subr.mxu0 0.0
      %2795 = vmatpush1.msra.mxu0 0.0
      %2796 = vmatprep.subr.mxu0 0.0
      %2797 = vmatpush1.msra.mxu0 0.0
      %2798 = vmatprep.subr.mxu0 0.0
      %2799 = vmatpush1.msra.mxu0 0.0
      %2800 = vmatprep.subr.mxu0 0.0
      %2801 = vmatpush1.msra.mxu0 0.0
      %2802 = vmatprep.subr.mxu0 0.0
      %2803 = vmatpush1.msra.mxu0 0.0
      %2804 = vmatprep.subr.mxu0 0.0
      %2805 = vmatpush1.msra.mxu0 0.0
      %2806 = vmatprep.subr.mxu0 0.0
      %2807 = vmatpush1.msra.mxu0 0.0
      %2808 = vmatprep.subr.mxu0 0.0
      %2809 = vmatpush1.msra.mxu0 0.0
      %2810 = vmatprep.subr.mxu0 0.0
      %2811 = vmatpush1.msra.mxu0 0.0
      %2812 = vmatprep.subr.mxu0 0.0
      %2813 = vmatpush1.msra.mxu0 0.0
      %2814 = vmatprep.subr.mxu0 0.0
      %2815 = vmatpush1.msra.mxu0 0.0
      %2816 = vmatprep.subr.mxu0 0.0
      %2817 = vmatpush1.msra.mxu0 0.0
      %2818 = vmatprep.mubr.f32.mxu0 0.0
      %2819 = vmatmul.mubr.f32.gmra.mrb[0].mxu0 %v2707
      %v2820 = vpop.f32.mrb[0].mxu0
      %v2821 = vadd.f32 %v2704, %v2820
      %v2822 = vpop.f32.mrb[0].mxu0
      %2823 = vmatprep.mubr.f32.mxu0 0.0
      %2824 = vmatmul.mubr.f32.gmra.mrb[0].mxu0 %v2710
      %v2825 = vpop.f32.mrb[0].mxu0
      %v2826 = vadd.f32 %v2704, %v2825
      %v2827 = vpop.f32.mrb[0].mxu0
      %2828 = vmatprep.mubr.f32.mxu0 0.0
      %2829 = vmatmul.mubr.f32.gmra.mrb[0].mxu0 %v2713
      %v2830 = vpop.f32.mrb[0].mxu0
      %v2831 = vadd.f32 %v2704, %v2830
      %v2832 = vpop.f32.mrb[0].mxu0
      %2833 = vmatprep.mubr.f32.mxu0 0.0
      %2834 = vmatmul.mubr.f32.gmra.mrb[0].mxu0 %v2716
      %v2835 = vpop.f32.mrb[0].mxu0
      %v2836 = vadd.f32 %v2704, %v2835
      %v2837 = vpop.f32.mrb[0].mxu0
      %2838 = vmatprep.mubr.f32.mxu0 0.0
      %2839 = vmatmul.mubr.f32.gmra.mrb[0].mxu0 %v2719
      %v2840 = vpop.f32.mrb[0].mxu0
      %v2841 = vadd.f32 %v2704, %v2840
      %v2842 = vpop.f32.mrb[0].mxu0
      %2843 = vmatprep.mubr.f32.mxu0 0.0
      %2844 = vmatmul.mubr.f32.gmra.mrb[0].mxu0 %v2722
      %v2845 = vpop.f32.mrb[0].mxu0
      %v2846 = vadd.f32 %v2704, %v2845
      %v2847 = vpop.f32.mrb[0].mxu0
      %2848 = vmatprep.mubr.f32.mxu0 0.0
      %2849 = vmatmul.mubr.f32.gmra.mrb[0].mxu0 %v2725
      %v2850 = vpop.f32.mrb[0].mxu0
      %v2851 = vadd.f32 %v2704, %v2850
      %v2852 = vpop.f32.mrb[0].mxu0
      %2853 = vmatprep.mubr.f32.mxu0 0.0
      %2854 = vmatmul.mubr.f32.gmra.mrb[0].mxu0 %v2728
      %v2855 = vpop.f32.mrb[0].mxu0
      %v2856 = vadd.f32 %v2704, %v2855
      %v2857 = vpop.f32.mrb[0].mxu0
      %2858 = vmatprep.mubr.f32.mxu0 0.0
      %2859 = vmatmul.mubr.f32.gmra.mrb[0].mxu0 %v2731
      %v2860 = vpop.f32.mrb[0].mxu0
      %v2861 = vadd.f32 %v2704, %v2860
      %v2862 = vpop.f32.mrb[0].mxu0
      %2863 = vmatprep.mubr.f32.mxu0 0.0
      %2864 = vmatmul.mubr.f32.gmra.mrb[0].mxu0 %v2734
      %v2865 = vpop.f32.mrb[0].mxu0
      %v2866 = vadd.f32 %v2704, %v2865
      %v2867 = vpop.f32.mrb[0].mxu0
      %2868 = vmatprep.mubr.f32.mxu0 0.0
      %2869 = vmatmul.mubr.f32.gmra.mrb[0].mxu0 %v2737
      %v2870 = vpop.f32.mrb[0].mxu0
      %v2871 = vadd.f32 %v2704, %v2870
      %v2872 = vpop.f32.mrb[0].mxu0
      %2873 = vmatprep.mubr.f32.mxu0 0.0
      %2874 = vmatmul.mubr.f32.gmra.mrb[0].mxu0 %v2740
      %v2875 = vpop.f32.mrb[0].mxu0
      %v2876 = vadd.f32 %v2704, %v2875
      %v2877 = vpop.f32.mrb[0].mxu0
      %2878 = vmatprep.mubr.f32.mxu0 0.0
      %2879 = vmatmul.mubr.f32.gmra.mrb[0].mxu0 %v2743
      %v2880 = vpop.f32.mrb[0].mxu0
      %v2881 = vadd.f32 %v2704, %v2880
      %v2882 = vpop.f32.mrb[0].mxu0
      %2883 = vmatprep.mubr.f32.mxu0 0.0
      %2884 = vmatmul.mubr.f32.gmra.mrb[0].mxu0 %v2746
      %v2885 = vpop.f32.mrb[0].mxu0
      %v2886 = vadd.f32 %v2704, %v2885
      %v2887 = vpop.f32.mrb[0].mxu0
      %2888 = vmatprep.mubr.f32.mxu0 0.0
      %2889 = vmatmul.mubr.f32.gmra.mrb[0].mxu0 %v2749
      %v2890 = vpop.f32.mrb[0].mxu0
      %v2891 = vadd.f32 %v2704, %v2890
      %v2892 = vpop.f32.mrb[0].mxu0
      %2893 = vmatprep.mubr.f32.mxu0 0.0
      %2894 = vmatmul.mubr.f32.gmra.mrb[0].mxu0 %v2752
      %v2895 = vpop.f32.mrb[0].mxu0
      %v2896 = vadd.f32 %v2704, %v2895
      %v2897 = vpop.f32.mrb[0].mxu0
      %2898 = vdwg.mxu0
      %v2899 = vmax.f32 %v2821, 0.0
      %v2900 = vmax.f32 %v2826, 0.0
      %v2901 = vmax.f32 %v2831, 0.0
      %v2902 = vmax.f32 %v2836, 0.0
      %v2903 = vmax.f32 %v2841, 0.0
      %v2904 = vmax.f32 %v2846, 0.0
      %v2905 = vmax.f32 %v2851, 0.0
      %v2906 = vmax.f32 %v2856, 0.0
      %v2907 = vmax.f32 %v2861, 0.0
      %v2908 = vmax.f32 %v2866, 0.0
      %v2909 = vmax.f32 %v2871, 0.0
      %v2910 = vmax.f32 %v2876, 0.0
      %v2911 = vmax.f32 %v2881, 0.0
      %v2912 = vmax.f32 %v2886, 0.0
      %v2913 = vmax.f32 %v2891, 0.0
      %v2914 = vmax.f32 %v2896, 0.0
      %v2915 = vld [vmem:[%s20] sm:$0xff]
      %v2916 = vld [vmem:[%s20 + $0x8] sm:$0xff]
      %v2917 = vld [vmem:[%s20 + $0x10] sm:$0xff]
      %v2918 = vld [vmem:[%s20 + $0x18] sm:$0xff]
      %v2919 = vld [vmem:[%s20 + $0x20] sm:$0xff]
      %v2920 = vld [vmem:[%s20 + $0x28] sm:$0xff]
      %v2921 = vld [vmem:[%s20 + $0x30] sm:$0xff]
      %v2922 = vld [vmem:[%s20 + $0x38] sm:$0xff]
      %v2923 = vld [vmem:[%s21] sm:$0x1]
      %v2925 = vlaneseq
      %v2926 = vshrl.u32 %v2925, 7
      %v2927 = vsub.s32 0, %v2926
      %v2928 = vrot.slane %v2923, %v2927
      %v2931 = vsel %vm1464, %v2899, 0
      %v2934 = vsel %vm1464, %v2900, 0
      %v2937 = vsel %vm1464, %v2901, 0
      %v2940 = vsel %vm1464, %v2902, 0
      %v2943 = vsel %vm1464, %v2903, 0
      %v2946 = vsel %vm1464, %v2904, 0
      %v2949 = vsel %vm1464, %v2905, 0
      %v2952 = vsel %vm1464, %v2906, 0
      %v2955 = vsel %vm1464, %v2907, 0
      %v2958 = vsel %vm1464, %v2908, 0
      %v2961 = vsel %vm1464, %v2909, 0
      %v2964 = vsel %vm1464, %v2910, 0
      %v2967 = vsel %vm1464, %v2911, 0
      %v2970 = vsel %vm1464, %v2912, 0
      %v2973 = vsel %vm1464, %v2913, 0
      %v2976 = vsel %vm1464, %v2914, 0
      %2978 = vmatprep.subr.mxu0 0.0
      %2979 = vmatpush1.msra.mxu0 %v2915
      %2980 = vmatprep.subr.mxu0 0.0
      %2981 = vmatpush1.msra.mxu0 %v2916
      %2982 = vmatprep.subr.mxu0 0.0
      %2983 = vmatpush1.msra.mxu0 %v2917
      %2984 = vmatprep.subr.mxu0 0.0
      %2985 = vmatpush1.msra.mxu0 %v2918
      %2986 = vmatprep.subr.mxu0 0.0
      %2987 = vmatpush1.msra.mxu0 %v2919
      %2988 = vmatprep.subr.mxu0 0.0
      %2989 = vmatpush1.msra.mxu0 %v2920
      %2990 = vmatprep.subr.mxu0 0.0
      %2991 = vmatpush1.msra.mxu0 %v2921
      %2992 = vmatprep.subr.mxu0 0.0
      %2993 = vmatpush1.msra.mxu0 %v2922
      %2994 = vmatprep.subr.mxu0 0.0
      %2995 = vmatpush1.msra.mxu0 0.0
      %2996 = vmatprep.subr.mxu0 0.0
      %2997 = vmatpush1.msra.mxu0 0.0
      %2998 = vmatprep.subr.mxu0 0.0
      %2999 = vmatpush1.msra.mxu0 0.0
      %3000 = vmatprep.subr.mxu0 0.0
      %3001 = vmatpush1.msra.mxu0 0.0
      %3002 = vmatprep.subr.mxu0 0.0
      %3003 = vmatpush1.msra.mxu0 0.0
      %3004 = vmatprep.subr.mxu0 0.0
      %3005 = vmatpush1.msra.mxu0 0.0
      %3006 = vmatprep.subr.mxu0 0.0
      %3007 = vmatpush1.msra.mxu0 0.0
      %3008 = vmatprep.subr.mxu0 0.0
      %3009 = vmatpush1.msra.mxu0 0.0
      %3010 = vmatprep.subr.mxu0 0.0
      %3011 = vmatpush1.msra.mxu0 0.0
      %3012 = vmatprep.subr.mxu0 0.0
      %3013 = vmatpush1.msra.mxu0 0.0
      %3014 = vmatprep.subr.mxu0 0.0
      %3015 = vmatpush1.msra.mxu0 0.0
      %3016 = vmatprep.subr.mxu0 0.0
      %3017 = vmatpush1.msra.mxu0 0.0
      %3018 = vmatprep.subr.mxu0 0.0
      %3019 = vmatpush1.msra.mxu0 0.0
      %3020 = vmatprep.subr.mxu0 0.0
      %3021 = vmatpush1.msra.mxu0 0.0
      %3022 = vmatprep.subr.mxu0 0.0
      %3023 = vmatpush1.msra.mxu0 0.0
      %3024 = vmatprep.subr.mxu0 0.0
      %3025 = vmatpush1.msra.mxu0 0.0
      %3026 = vmatprep.subr.mxu0 0.0
      %3027 = vmatpush1.msra.mxu0 0.0
      %3028 = vmatprep.subr.mxu0 0.0
      %3029 = vmatpush1.msra.mxu0 0.0
      %3030 = vmatprep.subr.mxu0 0.0
      %3031 = vmatpush1.msra.mxu0 0.0
      %3032 = vmatprep.subr.mxu0 0.0
      %3033 = vmatpush1.msra.mxu0 0.0
      %3034 = vmatprep.subr.mxu0 0.0
      %3035 = vmatpush1.msra.mxu0 0.0
      %3036 = vmatprep.subr.mxu0 0.0
      %3037 = vmatpush1.msra.mxu0 0.0
      %3038 = vmatprep.subr.mxu0 0.0
      %3039 = vmatpush1.msra.mxu0 0.0
      %3040 = vmatprep.subr.mxu0 0.0
      %3041 = vmatpush1.msra.mxu0 0.0
      %3042 = vmatprep.mubr.f32.mxu0 0.0
      %3043 = vmatmul.mubr.f32.gmra.mrb[0].mxu0 %v2931
      %v3044 = vpop.f32.mrb[0].mxu0
      %v3045 = vadd.f32 %v2928, %v3044
      %v3046 = vpop.f32.mrb[0].mxu0
      %3047 = vmatprep.mubr.f32.mxu0 0.0
      %3048 = vmatmul.mubr.f32.gmra.mrb[0].mxu0 %v2934
      %v3049 = vpop.f32.mrb[0].mxu0
      %v3050 = vadd.f32 %v2928, %v3049
      %v3051 = vpop.f32.mrb[0].mxu0
      %3052 = vmatprep.mubr.f32.mxu0 0.0
      %3053 = vmatmul.mubr.f32.gmra.mrb[0].mxu0 %v2937
      %v3054 = vpop.f32.mrb[0].mxu0
      %v3055 = vadd.f32 %v2928, %v3054
      %v3056 = vpop.f32.mrb[0].mxu0
      %3057 = vmatprep.mubr.f32.mxu0 0.0
      %3058 = vmatmul.mubr.f32.gmra.mrb[0].mxu0 %v2940
      %v3059 = vpop.f32.mrb[0].mxu0
      %v3060 = vadd.f32 %v2928, %v3059
      %v3061 = vpop.f32.mrb[0].mxu0
      %3062 = vmatprep.mubr.f32.mxu0 0.0
      %3063 = vmatmul.mubr.f32.gmra.mrb[0].mxu0 %v2943
      %v3064 = vpop.f32.mrb[0].mxu0
      %v3065 = vadd.f32 %v2928, %v3064
      %v3066 = vpop.f32.mrb[0].mxu0
      %3067 = vmatprep.mubr.f32.mxu0 0.0
      %3068 = vmatmul.mubr.f32.gmra.mrb[0].mxu0 %v2946
      %v3069 = vpop.f32.mrb[0].mxu0
      %v3070 = vadd.f32 %v2928, %v3069
      %v3071 = vpop.f32.mrb[0].mxu0
      %3072 = vmatprep.mubr.f32.mxu0 0.0
      %3073 = vmatmul.mubr.f32.gmra.mrb[0].mxu0 %v2949
      %v3074 = vpop.f32.mrb[0].mxu0
      %v3075 = vadd.f32 %v2928, %v3074
      %v3076 = vpop.f32.mrb[0].mxu0
      %3077 = vmatprep.mubr.f32.mxu0 0.0
      %3078 = vmatmul.mubr.f32.gmra.mrb[0].mxu0 %v2952
      %v3079 = vpop.f32.mrb[0].mxu0
      %v3080 = vadd.f32 %v2928, %v3079
      %v3081 = vpop.f32.mrb[0].mxu0
      %3082 = vmatprep.mubr.f32.mxu0 0.0
      %3083 = vmatmul.mubr.f32.gmra.mrb[0].mxu0 %v2955
      %v3084 = vpop.f32.mrb[0].mxu0
      %v3085 = vadd.f32 %v2928, %v3084
      %v3086 = vpop.f32.mrb[0].mxu0
      %3087 = vmatprep.mubr.f32.mxu0 0.0
      %3088 = vmatmul.mubr.f32.gmra.mrb[0].mxu0 %v2958
      %v3089 = vpop.f32.mrb[0].mxu0
      %v3090 = vadd.f32 %v2928, %v3089
      %v3091 = vpop.f32.mrb[0].mxu0
      %3092 = vmatprep.mubr.f32.mxu0 0.0
      %3093 = vmatmul.mubr.f32.gmra.mrb[0].mxu0 %v2961
      %v3094 = vpop.f32.mrb[0].mxu0
      %v3095 = vadd.f32 %v2928, %v3094
      %v3096 = vpop.f32.mrb[0].mxu0
      %3097 = vmatprep.mubr.f32.mxu0 0.0
      %3098 = vmatmul.mubr.f32.gmra.mrb[0].mxu0 %v2964
      %v3099 = vpop.f32.mrb[0].mxu0
      %v3100 = vadd.f32 %v2928, %v3099
      %v3101 = vpop.f32.mrb[0].mxu0
      %3102 = vmatprep.mubr.f32.mxu0 0.0
      %3103 = vmatmul.mubr.f32.gmra.mrb[0].mxu0 %v2967
      %v3104 = vpop.f32.mrb[0].mxu0
      %v3105 = vadd.f32 %v2928, %v3104
      %v3106 = vpop.f32.mrb[0].mxu0
      %3107 = vmatprep.mubr.f32.mxu0 0.0
      %3108 = vmatmul.mubr.f32.gmra.mrb[0].mxu0 %v2970
      %v3109 = vpop.f32.mrb[0].mxu0
      %v3110 = vadd.f32 %v2928, %v3109
      %v3111 = vpop.f32.mrb[0].mxu0
      %3112 = vmatprep.mubr.f32.mxu0 0.0
      %3113 = vmatmul.mubr.f32.gmra.mrb[0].mxu0 %v2973
      %v3114 = vpop.f32.mrb[0].mxu0
      %v3115 = vadd.f32 %v2928, %v3114
      %v3116 = vpop.f32.mrb[0].mxu0
      %3117 = vmatprep.mubr.f32.mxu0 0.0
      %3118 = vmatmul.mubr.f32.gmra.mrb[0].mxu0 %v2976
      %v3119 = vpop.f32.mrb[0].mxu0
      %v3120 = vadd.f32 %v2928, %v3119
      %v3121 = vpop.f32.mrb[0].mxu0
      %3122 = vdwg.mxu0
      %v3123 = vtanh.pop %v3045
      %v3124 = vtanh.pop %v3050
      %v3125 = vtanh.pop %v3055
      %v3126 = vtanh.pop %v3060
      %v3127 = vtanh.pop %v3065
      %v3128 = vtanh.pop %v3070
      %v3129 = vtanh.pop %v3075
      %v3130 = vtanh.pop %v3080
      %v3131 = vtanh.pop %v3085
      %v3132 = vtanh.pop %v3090
      %v3133 = vtanh.pop %v3095
      %v3134 = vtanh.pop %v3100
      %v3135 = vtanh.pop %v3105
      %v3136 = vtanh.pop %v3110
      %v3137 = vtanh.pop %v3115
      %v3138 = vtanh.pop %v3120
      %3155 = vrot.lane.b32.xlu0 %v1801, 8
      %v3156 = vpop.permute.xlu0 %3155
      %3157 = vrot.lane.b32.xlu0 %v1806, 8
      %v3158 = vpop.permute.xlu0 %3157
      %3159 = vrot.lane.b32.xlu0 %v1811, 8
      %v3160 = vpop.permute.xlu0 %3159
      %3161 = vrot.lane.b32.xlu0 %v1816, 8
      %v3162 = vpop.permute.xlu0 %3161
      %3163 = vrot.lane.b32.xlu0 %v1821, 8
      %v3164 = vpop.permute.xlu0 %3163
      %3165 = vrot.lane.b32.xlu0 %v1826, 8
      %v3166 = vpop.permute.xlu0 %3165
      %3167 = vrot.lane.b32.xlu0 %v1831, 8
      %v3168 = vpop.permute.xlu0 %3167
      %3169 = vrot.lane.b32.xlu0 %v1836, 8
      %v3170 = vpop.permute.xlu0 %3169
      %3171 = vrot.lane.b32.xlu0 %v1841, 8
      %v3172 = vpop.permute.xlu0 %3171
      %3173 = vrot.lane.b32.xlu0 %v1846, 8
      %v3174 = vpop.permute.xlu0 %3173
      %3175 = vrot.lane.b32.xlu0 %v1851, 8
      %v3176 = vpop.permute.xlu0 %3175
      %3177 = vrot.lane.b32.xlu0 %v1856, 8
      %v3178 = vpop.permute.xlu0 %3177
      %3179 = vrot.lane.b32.xlu0 %v1861, 8
      %v3180 = vpop.permute.xlu0 %3179
      %3181 = vrot.lane.b32.xlu0 %v1866, 8
      %v3182 = vpop.permute.xlu0 %3181
      %3183 = vrot.lane.b32.xlu0 %v1871, 8
      %v3184 = vpop.permute.xlu0 %3183
      %3185 = vrot.lane.b32.xlu0 %v1876, 8
      %v3186 = vpop.permute.xlu0 %3185
      %3219 = vrot.lane.b32.xlu0 %v2068, 16
      %v3220 = vpop.permute.xlu0 %3219
      %3221 = vrot.lane.b32.xlu0 %v2070, 16
      %v3222 = vpop.permute.xlu0 %3221
      %3223 = vrot.lane.b32.xlu0 %v2072, 16
      %v3224 = vpop.permute.xlu0 %3223
      %3225 = vrot.lane.b32.xlu0 %v2074, 16
      %v3226 = vpop.permute.xlu0 %3225
      %3227 = vrot.lane.b32.xlu0 %v2076, 16
      %v3228 = vpop.permute.xlu0 %3227
      %3229 = vrot.lane.b32.xlu0 %v2078, 16
      %v3230 = vpop.permute.xlu0 %3229
      %3231 = vrot.lane.b32.xlu0 %v2080, 16
      %v3232 = vpop.permute.xlu0 %3231
      %3233 = vrot.lane.b32.xlu0 %v2082, 16
      %v3234 = vpop.permute.xlu0 %3233
      %3235 = vrot.lane.b32.xlu0 %v2084, 16
      %v3236 = vpop.permute.xlu0 %3235
      %3237 = vrot.lane.b32.xlu0 %v2086, 16
      %v3238 = vpop.permute.xlu0 %3237
      %3239 = vrot.lane.b32.xlu0 %v2088, 16
      %v3240 = vpop.permute.xlu0 %3239
      %3241 = vrot.lane.b32.xlu0 %v2090, 16
      %v3242 = vpop.permute.xlu0 %3241
      %3243 = vrot.lane.b32.xlu0 %v2092, 16
      %v3244 = vpop.permute.xlu0 %3243
      %3245 = vrot.lane.b32.xlu0 %v2094, 16
      %v3246 = vpop.permute.xlu0 %3245
      %3247 = vrot.lane.b32.xlu0 %v2096, 16
      %v3248 = vpop.permute.xlu0 %3247
      %3249 = vrot.lane.b32.xlu0 %v2098, 16
      %v3250 = vpop.permute.xlu0 %3249
      %v3267 = vsel %vm1200, %v3123, %v3156
      %v3268 = vsel %vm1200, %v3124, %v3158
      %v3269 = vsel %vm1200, %v3125, %v3160
      %v3270 = vsel %vm1200, %v3126, %v3162
      %v3271 = vsel %vm1200, %v3127, %v3164
      %v3272 = vsel %vm1200, %v3128, %v3166
      %v3273 = vsel %vm1200, %v3129, %v3168
      %v3274 = vsel %vm1200, %v3130, %v3170
      %v3275 = vsel %vm1200, %v3131, %v3172
      %v3276 = vsel %vm1200, %v3132, %v3174
      %v3277 = vsel %vm1200, %v3133, %v3176
      %v3278 = vsel %vm1200, %v3134, %v3178
      %v3279 = vsel %vm1200, %v3135, %v3180
      %v3280 = vsel %vm1200, %v3136, %v3182
      %v3281 = vsel %vm1200, %v3137, %v3184
      %v3282 = vsel %vm1200, %v3138, %v3186
      %vm3283 = vcmask 130048
      %v3284 = vsel %vm3283, %v3267, %v3220
      %v3285 = vsel %vm3283, %v3268, %v3222
      %v3286 = vsel %vm3283, %v3269, %v3224
      %v3287 = vsel %vm3283, %v3270, %v3226
      %v3288 = vsel %vm3283, %v3271, %v3228
      %v3289 = vsel %vm3283, %v3272, %v3230
      %v3290 = vsel %vm3283, %v3273, %v3232
      %v3291 = vsel %vm3283, %v3274, %v3234
      %v3292 = vsel %vm3283, %v3275, %v3236
      %v3293 = vsel %vm3283, %v3276, %v3238
      %v3294 = vsel %vm3283, %v3277, %v3240
      %v3295 = vsel %vm3283, %v3278, %v3242
      %v3296 = vsel %vm3283, %v3279, %v3244
      %v3297 = vsel %vm3283, %v3280, %v3246
      %v3298 = vsel %vm3283, %v3281, %v3248
      %v3299 = vsel %vm3283, %v3282, %v3250
      %vm3300 = vcmask 195584
      %3301 = vst.msk [vmem:[%s751] sm:$0xff] %vm3300, %v3284
      %3302 = vst.msk [vmem:[%s751 + $0x8] sm:$0xff] %vm3300, %v3285
      %3303 = vst.msk [vmem:[%s751 + $0x10] sm:$0xff] %vm3300, %v3286
      %3304 = vst.msk [vmem:[%s751 + $0x18] sm:$0xff] %vm3300, %v3287
      %3305 = vst.msk [vmem:[%s751 + $0x20] sm:$0xff] %vm3300, %v3288
      %3306 = vst.msk [vmem:[%s751 + $0x28] sm:$0xff] %vm3300, %v3289
      %3307 = vst.msk [vmem:[%s751 + $0x30] sm:$0xff] %vm3300, %v3290
      %3308 = vst.msk [vmem:[%s751 + $0x38] sm:$0xff] %vm3300, %v3291
      %3309 = vst.msk [vmem:[%s751 + $0x40] sm:$0xff] %vm3300, %v3292
      %3310 = vst.msk [vmem:[%s751 + $0x48] sm:$0xff] %vm3300, %v3293
      %3311 = vst.msk [vmem:[%s751 + $0x50] sm:$0xff] %vm3300, %v3294
      %3312 = vst.msk [vmem:[%s751 + $0x58] sm:$0xff] %vm3300, %v3295
      %3313 = vst.msk [vmem:[%s751 + $0x60] sm:$0xff] %vm3300, %v3296
      %3314 = vst.msk [vmem:[%s751 + $0x68] sm:$0xff] %vm3300, %v3297
      %3315 = vst.msk [vmem:[%s751 + $0x70] sm:$0xff] %vm3300, %v3298
      %3316 = vst.msk [vmem:[%s751 + $0x78] sm:$0xff] %vm3300, %v3299
      %s3317 = smul.u32 16, %s33
      %p3318 = scmp.lt.s32.totalorder %s3317, 31
      %s3319 = scalar_select %p3318, %s3317, 31
      %s3320 = smul.addr %s3319, 8
      %s3321 = scalar_lea.vmem %s22, %s3320
      // Predicated region
      $region109: #{tpu_custom_call.1} parent=107 // pred_check
        %p3322 = pneg %p533
      $region110: #{tpu_custom_call.1} parent=107 // pred_check_branch
        %3324 = sbr.rel (%p3322) target = $region112
      $region111: #{tpu_custom_call.1} parent=107 // pred_region
        %s3325 = smul.u32 16, %s33
      $region112: #{tpu_custom_call.1} parent=107 // pred_fallthru
        _
    $region108: #{tpu_custom_call.1} parent=5 // pred_fallthru
      _
    %p3326 = scmp.le.s32.totalorder 2, %s28
    // Predicated region
    $region113: #{tpu_custom_call.1} parent=5 // pred_check
      %p3327 = pneg %p3326
    $region114: #{tpu_custom_call.1} parent=5 // pred_check_branch
      %3329 = sbr.rel (%p3327) target = $region116
    $region115: #{tpu_custom_call.1} parent=5 // pred_region
      %s3330 = ssub.s32 %s28, 2
      // Predicated region
      $region117: #{tpu_custom_call.1} parent=115 // pred_check
        %p3331 = pneg %p539
      $region118: #{tpu_custom_call.1} parent=115 // pred_check_branch
        %3333 = sbr.rel (%p3331) target = $region120
      $region119: #{tpu_custom_call.1} parent=115 // pred_region
        %s3334 = smul.u32 16, %s34
        %p3335 = scmp.lt.s32.totalorder %s3334, 31
        %s3336 = scalar_select %p3335, %s3334, 31
        %s3337 = smul.addr %s3336, 8
        %s3338 = scalar_lea.vmem %s22, %s3337
      $region120: #{tpu_custom_call.1} parent=115 // pred_fallthru
        _
    $region116: #{tpu_custom_call.1} parent=5 // pred_fallthru
      _
  $region6: #{tpu_custom_call.1} parent=0 // loop_footer
    %s32 = sadd.s32 1, %s28
  $region7: #{tpu_custom_call.1} parent=0 // loop_footer_branch
    %27 = sbr.rel target = $region3
  $region8: #{tpu_custom_call.1} parent=0 // loop_exit
    _

</llo_original>
